<compile_context>
chip_gen: v7x
topology: tpu7x:2x2x1
jax: 0.10.0
libtpu: 0.0.40
codegen_flags: <defaults>
</compile_context>

<pallas_src>
import functools

import numpy as np
import jax
import jax.numpy as jnp
from jax import lax
from jax.experimental import pallas as pl
from jax.experimental.pallas import tpu as pltpu


# ------------------------------ kernel helpers ------------------------------ #

def _mm(a, b):
    return jnp.dot(a, b, preferred_element_type=jnp.float32)


def _mm_nt(a, b):
    # a @ b.T without materializing a transpose.
    return lax.dot_general(a, b, (((1,), (1,)), ((), ())),
                           preferred_element_type=jnp.float32)


def _mm_tt(a, b):
    # a.T @ b.T  -> shape (a.shape[1], b.shape[0]) without transposes.
    return lax.dot_general(a, b, (((0,), (1,)), ((), ())),
                           preferred_element_type=jnp.float32)


def _relu(v):
    return jnp.maximum(v, 0.0)


def _softmax_all(v):
    # softmax over ALL elements (matches torch softmax over the flattened map).
    e = jnp.exp(v - jnp.max(v))
    return e * pl.reciprocal(jnp.sum(e, keepdims=True), approx=True)


def _conv3x3(x, w, b, m_ref, offs):
    """3x3 dilated conv on a (Cin, L) map: 9 rolled+masked taps stacked along the
    sublane axis, then a single (Cout, 9*Cin) @ (9*Cin, L) MXU matmul.

    w    : (Cout, 9*Cin) tap-major packed weights (column t*Cin + ci, t = kh*3+kw)
    m_ref: (9, L) tap validity (zero-padding edge) masks for this dilation
    offs : 9 static flattened-index offsets (kh-1)*d*W + (kw-1)*d
    """
    taps = []
    for t, off in enumerate(offs):
        if off == 0:
            taps.append(x)                                   # centre tap: mask == 1
        else:
            taps.append(jnp.roll(x, -off, axis=1) * m_ref[pl.ds(t, 1), :])
    stack = jnp.concatenate(taps, axis=0)                    # (9*Cin, L)
    return _mm(w, stack) + b


def _regroup(af, scr, K, gs):
    """torch row-major reinterpret of an (L, K) matrix as (K, L) (L = gs*K).

    Zero MXU work: `af` is parked in a small VMEM scratch and read back as gs
    strided (K, K) row blocks (rows a, a+gs, a+2*gs, ...), which are exactly the
    consecutive K-column blocks of the result; they are lane-concatenated.
    """
    scr[...] = af
    blocks = [scr[pl.ds(a, K, stride=gs), :] for a in range(gs)]
    return jnp.concatenate(blocks, axis=1)                   # (K, L)


# --------------------------------- the kernel -------------------------------- #

def _basic_unit_kernel(x_ref,
                       s123w_ref, s123b_ref, s4w_ref, s4b_ref,
                       m1_ref, m3_ref, cw_ref, cb_ref, u5w_ref, u5b_ref,
                       c12w_ref, c12b_ref, c3_ref, c4w_ref, c4b_ref,
                       c5w_ref, c5b_ref,
                       o_ref,
                       rgs_scr, rgc_scr,
                       *, H, W, IC):
    L = H * W
    ch = IC // 2
    C = IC // 2
    N = IC // 4

    x = x_ref[0]                                             # (IC, L)

    # ------------------------------ spatialGCN ------------------------------
    tnx = _mm(s123w_ref[...], x) + s123b_ref[...]            # (3*ch, L): theta|nu|xi
    theta = tnx[0:ch]
    nu = _softmax_all(tnx[ch:2 * ch])
    xi = _softmax_all(tnx[2 * ch:3 * ch])
    f_s = _mm_nt(nu, xi)                                     # (ch, ch) = nu @ xi^T
    af_s = _mm_tt(theta, f_s)                                # (L, ch) = theta^T @ F_s^T
    y_s = _regroup(af_s, rgs_scr, ch, L // ch)               # torch .reshape(B,ch,H,W)
    f_sgcn = _mm(s4w_ref[...], y_s) + s4b_ref[...] + x       # (IC, L)

    # -------------------------- dilated conv block --------------------------
    offs1 = [(kh - 1) * W + (kw - 1) for kh in range(3) for kw in range(3)]
    offs3 = [3 * (kh - 1) * W + 3 * (kw - 1) for kh in range(3) for kw in range(3)]
    r0 = _relu(f_sgcn)
    c1 = _conv3x3(r0,        cw_ref[0], cb_ref[0], m1_ref, offs1)    # dilation 1
    c2 = _conv3x3(_relu(c1), cw_ref[1], cb_ref[1], m1_ref, offs1)    # dilation 1
    c3 = _conv3x3(r0,        cw_ref[2], cb_ref[2], m3_ref, offs3)    # dilation 3
    c4 = _conv3x3(_relu(c3), cw_ref[3], cb_ref[3], m3_ref, offs3)    # dilation 3
    # conv5 on the 5-way channel concat: one (IC, 5*IC) @ (5*IC, L) matmul.
    stack5 = jnp.concatenate([f_sgcn, c1, c2, c3, c4], axis=0)       # (5*IC, L)
    f_dcm = _relu(_mm(u5w_ref[...], stack5) + u5b_ref[...])          # (IC, L)

    # ------------------------------ channelGCN ------------------------------
    zk = _mm(c12w_ref[...], f_dcm) + c12b_ref[...]           # (C+N, L): zeta|kappa
    zeta = zk[0:C]                                           # (C, L)
    kappa = zk[C:C + N]                                      # (N, L)
    f_c = _softmax_all(_mm_nt(zeta, kappa))                  # (C, N)
    # conv3 (1->1 channel 1x1 conv) == scalar affine; fused with residual + relu.
    f_c = _relu(f_c * (1.0 + c3_ref[0]) + c3_ref[1])
    f_c = _mm_nt(c4w_ref[...], f_c) + c4b_ref[...]           # (N, C): conv4 on permuted map
    af_c = _mm_tt(zeta, f_c)                                 # (L, N) = zeta^T @ F_c^T
    y_c = _regroup(af_c, rgc_scr, N, L // N)                 # torch .view(B,N,H,W)
    f_cgcn = _mm(c5w_ref[...], y_c) + c5b_ref[...] + f_dcm   # (IC, L)

    # BasicUnit outer residual.
    o_ref[0] = f_cgcn + x


# ---------------------------- trace-time constants ---------------------------- #

def _tap_masks(H, W, d):
    """(9, L) {0,1} masks: mask[t, h*W+w] = 1 iff tap t = kh*3+kw (dilation d) at
    output (h, w) reads an in-bounds input position (zero padding otherwise)."""
    L = H * W
    m = np.zeros((9, L), np.float32)
    for kh in range(3):
        for kw in range(3):
            t = kh * 3 + kw
            dh, dw = (kh - 1) * d, (kw - 1) * d
            for h in range(H):
                for w in range(W):
                    if 0 <= h + dh < H and 0 <= w + dw < W:
                        m[t, h * W + w] = 1.0
    return m


# ------------------------------- parameters ---------------------------------- #

def init_params(key, IC):
    ch = IC // 2
    C = IC // 2
    N = IC // 4
    specs = [
        # spatialGCN (1x1 convs stored as (Cout, Cin))
        ("s1_w", (ch, IC), IC), ("s1_b", (ch,), IC),
        ("s2_w", (ch, IC), IC), ("s2_b", (ch,), IC),
        ("s3_w", (ch, IC), IC), ("s3_b", (ch,), IC),
        ("s4_w", (IC, ch), ch), ("s4_b", (IC,), ch),
        # BasicUnit dilated 3x3 convs
        ("u1_w", (IC, IC, 3, 3), IC * 9), ("u1_b", (IC,), IC * 9),
        ("u2_w", (IC, IC, 3, 3), IC * 9), ("u2_b", (IC,), IC * 9),
        ("u3_w", (IC, IC, 3, 3), IC * 9), ("u3_b", (IC,), IC * 9),
        ("u4_w", (IC, IC, 3, 3), IC * 9), ("u4_b", (IC,), IC * 9),
        ("u5_w", (IC, 5 * IC), 5 * IC), ("u5_b", (IC,), 5 * IC),
        # channelGCN
        ("c1_w", (C, IC), IC), ("c1_b", (C,), IC),
        ("c2_w", (N, IC), IC), ("c2_b", (N,), IC),
        ("c3_w", (), 1), ("c3_b", (), 1),          # 1->1 channel 1x1 conv == scalar affine
        ("c4_w", (N, N), N), ("c4_b", (N,), N),
        ("c5_w", (IC, N), N), ("c5_b", (IC,), N),
    ]
    keys = jax.random.split(key, len(specs))
    p = {}
    for (name, shape, fan), k in zip(specs, keys):
        bound = 1.0 / np.sqrt(fan)
        p[name] = jax.random.uniform(k, shape, jnp.float32, -bound, bound)
    return p


# --------------------------- Pallas-based forward --------------------------- #

def basic_unit_pallas(x, p):
    B, IC, H, W = x.shape
    L = H * W
    ch = IC // 2
    C = IC // 2
    N = IC // 4
    assert IC % 4 == 0 and L % ch == 0 and L % N == 0

    x_flat = x.reshape(B, IC, L)

    col = lambda v: v.reshape(-1, 1)
    # 3x3 conv weights packed tap-major: (Cout, 9*Cin), column t*IC+ci, t = kh*3+kw.
    pack3 = lambda w: jnp.transpose(w, (0, 2, 3, 1)).reshape(IC, 9 * IC)

    s123_w = jnp.concatenate([p["s1_w"], p["s2_w"], p["s3_w"]], axis=0)    # (3ch, IC)
    s123_b = col(jnp.concatenate([p["s1_b"], p["s2_b"], p["s3_b"]]))       # (3ch, 1)
    c12_w = jnp.concatenate([p["c1_w"], p["c2_w"]], axis=0)                # (C+N, IC)
    c12_b = col(jnp.concatenate([p["c1_b"], p["c2_b"]]))                   # (C+N, 1)
    conv_w = jnp.stack([pack3(p["u1_w"]), pack3(p["u2_w"]),
                        pack3(p["u3_w"]), pack3(p["u4_w"])])               # (4, IC, 9IC)
    conv_b = jnp.stack([col(p["u1_b"]), col(p["u2_b"]),
                        col(p["u3_b"]), col(p["u4_b"])])                   # (4, IC, 1)
    c3_scal = jnp.stack([p["c3_w"].reshape(()), p["c3_b"].reshape(())])    # (2,) -> SMEM

    m1 = jnp.asarray(_tap_masks(H, W, 1))                                  # (9, L)
    m3 = jnp.asarray(_tap_masks(H, W, 3))                                  # (9, L)

    weight_inputs = [
        s123_w, s123_b, p["s4_w"], col(p["s4_b"]),
        m1, m3, conv_w, conv_b, p["u5_w"], col(p["u5_b"]),
        c12_w, c12_b,
    ]
    tail_inputs = [p["c4_w"], col(p["c4_b"]), p["c5_w"], col(p["c5_b"])]
    inputs = [x_flat] + weight_inputs + [c3_scal] + tail_inputs

    def _const_index_map(ndim):
        def im(b):
            return (0,) * ndim
        return im

    in_specs = (
        [pl.BlockSpec((1, IC, L), lambda b: (b, 0, 0))]
        + [pl.BlockSpec(a.shape, _const_index_map(a.ndim)) for a in weight_inputs]
        + [pl.BlockSpec(memory_space=pltpu.MemorySpace.SMEM)]              # c3 scalars
        + [pl.BlockSpec(a.shape, _const_index_map(a.ndim)) for a in tail_inputs]
    )

    kernel = functools.partial(_basic_unit_kernel, H=H, W=W, IC=IC)

    out = pl.pallas_call(
        kernel,
        out_shape=jax.ShapeDtypeStruct((B, IC, L), jnp.float32),
        grid=(B,),
        in_specs=in_specs,
        out_specs=pl.BlockSpec((1, IC, L), lambda b: (b, 0, 0)),
        scratch_shapes=[pltpu.VMEM((L, ch), jnp.float32),   # spatial regroup scratch
                        pltpu.VMEM((L, N), jnp.float32)],   # channel regroup scratch
        compiler_params=pltpu.CompilerParams(
            dimension_semantics=("parallel",)),   # batch across v7x's 2 TensorCores
    )(*inputs)
    return out.reshape(B, IC, H, W)


# ---------------------------- pure-JAX reference ---------------------------- #

def ref_forward(x, p):
    HIGH = jax.lax.Precision.HIGHEST

    def conv(t, w, b, pad=0, dil=1):
        y = jax.lax.conv_general_dilated(
            t, w, (1, 1), [(pad, pad), (pad, pad)], rhs_dilation=(dil, dil),
            dimension_numbers=("NCHW", "OIHW", "NCHW"), precision=HIGH)
        return y + b.reshape(1, -1, 1, 1)

    mm = functools.partial(jnp.matmul, precision=HIGH)
    r = jax.nn.relu
    B, IC, H, W = x.shape
    L = H * W
    ch = IC // 2
    C = IC // 2
    N = IC // 4

    # spatialGCN
    theta = conv(x, p["s1_w"].reshape(ch, IC, 1, 1), p["s1_b"]).reshape(B, ch, L)
    nu = conv(x, p["s2_w"].reshape(ch, IC, 1, 1), p["s2_b"]).reshape(B, ch, L)
    nu = jax.nn.softmax(nu.reshape(B, ch * L), axis=-1).reshape(B, ch, L)
    xi = conv(x, p["s3_w"].reshape(ch, IC, 1, 1), p["s3_b"]).reshape(B, ch, L)
    xi = jax.nn.softmax(xi.reshape(B, ch * L), axis=-1).reshape(B, ch, L)
    F_s = mm(nu, xi.transpose(0, 2, 1))
    AF_s = mm(theta.transpose(0, 2, 1), F_s.transpose(0, 2, 1)).reshape(B, ch, H, W)
    F_sGCN = conv(AF_s, p["s4_w"].reshape(IC, ch, 1, 1), p["s4_b"]) + x

    # dilated conv block
    c1 = conv(r(F_sGCN), p["u1_w"], p["u1_b"], pad=1, dil=1)
    c2 = conv(r(c1), p["u2_w"], p["u2_b"], pad=1, dil=1)
    c3 = conv(r(F_sGCN), p["u3_w"], p["u3_b"], pad=3, dil=3)
    c4 = conv(r(c3), p["u4_w"], p["u4_b"], pad=3, dil=3)
    tmp = jnp.concatenate([F_sGCN, c1, c2, c3, c4], axis=1)
    F_DCM = r(conv(tmp, p["u5_w"].reshape(IC, 5 * IC, 1, 1), p["u5_b"]))

    # channelGCN
    zeta = conv(F_DCM, p["c1_w"].reshape(C, IC, 1, 1), p["c1_b"]).reshape(B, C, L)
    kappa = conv(F_DCM, p["c2_w"].reshape(N, IC, 1, 1), p["c2_b"]).reshape(B, N, L)
    F_c = mm(zeta, kappa.transpose(0, 2, 1))                             # (B, C, N)
    F_c = jax.nn.softmax(F_c.reshape(B, C * N), axis=-1).reshape(B, 1, C, N)
    F_c = r(F_c + (p["c3_w"] * F_c + p["c3_b"]))
    F_c = F_c.transpose(0, 3, 1, 2)                                       # (B, N, 1, C)
    F_c = conv(F_c, p["c4_w"].reshape(N, N, 1, 1), p["c4_b"]).reshape(B, N, C)
    F_c = mm(zeta.transpose(0, 2, 1), F_c.transpose(0, 2, 1))             # (B, L, N)
    F_c = F_c.reshape(B, N, H, W)
    F_cGCN = conv(F_c, p["c5_w"].reshape(IC, N, 1, 1), p["c5_b"]) + F_DCM
    return F_cGCN + x


# ----------------------------------- main ----------------------------------- #

if __name__ == "__main__":
    B, IC, H, W = 2, 16, 8, 8          # channels must be divisible by 4 (channelGCN)
    key = jax.random.PRNGKey(0)
    kx, kp = jax.random.split(key)
    x = jax.random.normal(kx, (B, IC, H, W), jnp.float32)
    params = init_params(kp, IC)

    out = jax.jit(basic_unit_pallas)(x, params)
    out = jax.block_until_ready(out)

    ref = ref_forward(x, params)
    assert out.shape == x.shape and out.dtype == jnp.float32
    np.testing.assert_allclose(np.asarray(out), np.asarray(ref), rtol=2e-2, atol=2e-2)
    print("KERNEL_OK")
</pallas_src>

<mosaic_0001>
module attributes {stable_mosaic.version = 11 : i64} {
  func.func @_basic_unit_kernel(%arg0: i32, %arg1: memref<1x16x64xf32, #tpu.memory_space<vmem>>, %arg2: memref<24x16xf32, #tpu.memory_space<vmem>>, %arg3: memref<24x1xf32, #tpu.memory_space<vmem>>, %arg4: memref<16x8xf32, #tpu.memory_space<vmem>>, %arg5: memref<16x1xf32, #tpu.memory_space<vmem>>, %arg6: memref<9x64xf32, #tpu.memory_space<vmem>>, %arg7: memref<9x64xf32, #tpu.memory_space<vmem>>, %arg8: memref<4x16x144xf32, #tpu.memory_space<vmem>>, %arg9: memref<4x16x1xf32, #tpu.memory_space<vmem>>, %arg10: memref<16x80xf32, #tpu.memory_space<vmem>>, %arg11: memref<16x1xf32, #tpu.memory_space<vmem>>, %arg12: memref<12x16xf32, #tpu.memory_space<vmem>>, %arg13: memref<12x1xf32, #tpu.memory_space<vmem>>, %arg14: memref<2xf32, #tpu.memory_space<smem>>, %arg15: memref<4x4xf32, #tpu.memory_space<vmem>>, %arg16: memref<4x1xf32, #tpu.memory_space<vmem>>, %arg17: memref<16x4xf32, #tpu.memory_space<vmem>>, %arg18: memref<16x1xf32, #tpu.memory_space<vmem>>, %arg19: memref<1x16x64xf32, #tpu.memory_space<vmem>>, %arg20: memref<64x8xf32, #tpu.memory_space<vmem>>, %arg21: memref<64x4xf32, #tpu.memory_space<vmem>>) attributes {dimension_semantics = [#tpu.dimension_semantics<parallel>], iteration_bounds = array<i64: 2>, scalar_prefetch = 0 : i64, scratch_operands = 2 : i64, tpu.core_type = #tpu.core_type<tc>, window_params = [{transform_indices = @transform_0, window_bounds = array<i64: 1, 16, 64>}, {pipeline_mode = #tpu.pipeline_mode<synchronous>, transform_indices = @transform_1, window_bounds = array<i64: 24, 16>}, {pipeline_mode = #tpu.pipeline_mode<synchronous>, transform_indices = @transform_2, window_bounds = array<i64: 24, 1>}, {pipeline_mode = #tpu.pipeline_mode<synchronous>, transform_indices = @transform_3, window_bounds = array<i64: 16, 8>}, {pipeline_mode = #tpu.pipeline_mode<synchronous>, transform_indices = @transform_4, window_bounds = array<i64: 16, 1>}, {pipeline_mode = #tpu.pipeline_mode<synchronous>, transform_indices = @transform_5, window_bounds = array<i64: 9, 64>}, {pipeline_mode = #tpu.pipeline_mode<synchronous>, transform_indices = @transform_6, window_bounds = array<i64: 9, 64>}, {pipeline_mode = #tpu.pipeline_mode<synchronous>, transform_indices = @transform_7, window_bounds = array<i64: 4, 16, 144>}, {pipeline_mode = #tpu.pipeline_mode<synchronous>, transform_indices = @transform_8, window_bounds = array<i64: 4, 16, 1>}, {pipeline_mode = #tpu.pipeline_mode<synchronous>, transform_indices = @transform_9, window_bounds = array<i64: 16, 80>}, {pipeline_mode = #tpu.pipeline_mode<synchronous>, transform_indices = @transform_10, window_bounds = array<i64: 16, 1>}, {pipeline_mode = #tpu.pipeline_mode<synchronous>, transform_indices = @transform_11, window_bounds = array<i64: 12, 16>}, {pipeline_mode = #tpu.pipeline_mode<synchronous>, transform_indices = @transform_12, window_bounds = array<i64: 12, 1>}, {transform_indices = @transform_13, window_bounds = array<i64: 2>}, {pipeline_mode = #tpu.pipeline_mode<synchronous>, transform_indices = @transform_14, window_bounds = array<i64: 4, 4>}, {pipeline_mode = #tpu.pipeline_mode<synchronous>, transform_indices = @transform_15, window_bounds = array<i64: 4, 1>}, {pipeline_mode = #tpu.pipeline_mode<synchronous>, transform_indices = @transform_16, window_bounds = array<i64: 16, 4>}, {pipeline_mode = #tpu.pipeline_mode<synchronous>, transform_indices = @transform_17, window_bounds = array<i64: 16, 1>}, {transform_indices = @transform_18, window_bounds = array<i64: 1, 16, 64>}]} {
    %c0 = arith.constant 0 : index
    %c0_0 = arith.constant 0 : index
    %c0_1 = arith.constant 0 : index
    %0 = vector.load %arg1[%c0, %c0_0, %c0_1] : memref<1x16x64xf32, #tpu.memory_space<vmem>>, vector<1x16x64xf32>
    %1 = vector.shape_cast %0 : vector<1x16x64xf32> to vector<16x64xf32>
    %c0_2 = arith.constant 0 : index
    %c0_3 = arith.constant 0 : index
    %2 = vector.load %arg2[%c0_2, %c0_3] : memref<24x16xf32, #tpu.memory_space<vmem>>, vector<24x16xf32>
    %cst = arith.constant dense<0.000000e+00> : vector<24x64xf32>
    %3 = tpu.matmul %2, %1, %cst {dimension_numbers = #tpu.dot_dimension_numbers<[1], [0], [0], [1], [0, 0, 1, 1], [], []>} : vector<24x16xf32>, vector<16x64xf32>, vector<24x64xf32> -> vector<24x64xf32>
    %c0_4 = arith.constant 0 : index
    %c0_5 = arith.constant 0 : index
    %4 = vector.load %arg3[%c0_4, %c0_5] : memref<24x1xf32, #tpu.memory_space<vmem>>, vector<24x1xf32>
    %5 = vector.broadcast %4 : vector<24x1xf32> to vector<24x64xf32>
    %6 = arith.addf %3, %5 : vector<24x64xf32>
    %7 = vector.extract_strided_slice %6 {offsets = [0, 0], sizes = [8, 64], strides = [1, 1]} : vector<24x64xf32> to vector<8x64xf32>
    %8 = vector.extract_strided_slice %6 {offsets = [8, 0], sizes = [8, 64], strides = [1, 1]} : vector<24x64xf32> to vector<8x64xf32>
    %9 = vector.shape_cast %8 : vector<8x64xf32> to vector<1x8x64xf32>
    %cst_6 = arith.constant dense<0xFF800000> : vector<1xf32>
    %10 = vector.multi_reduction <maximumf>, %9, %cst_6 [1, 2] : vector<1x8x64xf32> to vector<1xf32>
    %11 = vector.shape_cast %10 : vector<1xf32> to vector<1x1x1xf32>
    %12 = vector.extract %11[0, 0, 0] : f32 from vector<1x1x1xf32>
    %13 = vector.broadcast %12 : f32 to vector<8x64xf32>
    %14 = arith.subf %8, %13 : vector<8x64xf32>
    %15 = math.exp %14 : vector<8x64xf32>
    %16 = vector.shape_cast %15 : vector<8x64xf32> to vector<1x8x64xf32>
    %cst_7 = arith.constant dense<0.000000e+00> : vector<1xf32>
    %17 = vector.multi_reduction <add>, %16, %cst_7 [1, 2] : vector<1x8x64xf32> to vector<1xf32>
    %18 = vector.shape_cast %17 : vector<1xf32> to vector<1x1x1xf32>
    %19 = vector.extract %18[0, 0, 0] : f32 from vector<1x1x1xf32>
    %20 = vector.broadcast %19 : f32 to vector<1x1xf32>
    %21 = tpu.reciprocal %20 {approx = true} : vector<1x1xf32> -> vector<1x1xf32>
    %22 = vector.broadcast %21 : vector<1x1xf32> to vector<8x64xf32>
    %23 = arith.mulf %15, %22 : vector<8x64xf32>
    %24 = vector.extract_strided_slice %6 {offsets = [16, 0], sizes = [8, 64], strides = [1, 1]} : vector<24x64xf32> to vector<8x64xf32>
    %25 = vector.shape_cast %24 : vector<8x64xf32> to vector<1x8x64xf32>
    %cst_8 = arith.constant dense<0xFF800000> : vector<1xf32>
    %26 = vector.multi_reduction <maximumf>, %25, %cst_8 [1, 2] : vector<1x8x64xf32> to vector<1xf32>
    %27 = vector.shape_cast %26 : vector<1xf32> to vector<1x1x1xf32>
    %28 = vector.extract %27[0, 0, 0] : f32 from vector<1x1x1xf32>
    %29 = vector.broadcast %28 : f32 to vector<8x64xf32>
    %30 = arith.subf %24, %29 : vector<8x64xf32>
    %31 = math.exp %30 : vector<8x64xf32>
    %32 = vector.shape_cast %31 : vector<8x64xf32> to vector<1x8x64xf32>
    %cst_9 = arith.constant dense<0.000000e+00> : vector<1xf32>
    %33 = vector.multi_reduction <add>, %32, %cst_9 [1, 2] : vector<1x8x64xf32> to vector<1xf32>
    %34 = vector.shape_cast %33 : vector<1xf32> to vector<1x1x1xf32>
    %35 = vector.extract %34[0, 0, 0] : f32 from vector<1x1x1xf32>
    %36 = vector.broadcast %35 : f32 to vector<1x1xf32>
    %37 = tpu.reciprocal %36 {approx = true} : vector<1x1xf32> -> vector<1x1xf32>
    %38 = vector.broadcast %37 : vector<1x1xf32> to vector<8x64xf32>
    %39 = arith.mulf %31, %38 : vector<8x64xf32>
    %cst_10 = arith.constant dense<0.000000e+00> : vector<8x8xf32>
    %40 = tpu.matmul %23, %39, %cst_10 {dimension_numbers = #tpu.dot_dimension_numbers<[1], [1], [0], [0], [0, 0, 1, 0], [], []>} : vector<8x64xf32>, vector<8x64xf32>, vector<8x8xf32> -> vector<8x8xf32>
    %cst_11 = arith.constant dense<0.000000e+00> : vector<64x8xf32>
    %41 = tpu.matmul %7, %40, %cst_11 {dimension_numbers = #tpu.dot_dimension_numbers<[0], [1], [1], [0], [0, 1, 1, 0], [], []>} : vector<8x64xf32>, vector<8x8xf32>, vector<64x8xf32> -> vector<64x8xf32>
    %c0_12 = arith.constant 0 : index
    %c0_13 = arith.constant 0 : index
    %42 = vector.load %arg20[%c0_12, %c0_13] : memref<64x8xf32, #tpu.memory_space<vmem>>, vector<64x8xf32>
    tpu.vector_store %arg20[%c0_12, %c0_13], %41 {strides = array<i32>} : memref<64x8xf32, #tpu.memory_space<vmem>>, vector<64x8xf32>,
    %c0_14 = arith.constant 0 : index
    %c0_15 = arith.constant 0 : index
    %43 = tpu.strided_load %arg20[%c0_14, %c0_15] {strides = array<i32: 8, 1>} : memref<64x8xf32, #tpu.memory_space<vmem>>, vector<8x8xf32>
    %c1 = arith.constant 1 : index
    %c0_16 = arith.constant 0 : index
    %44 = tpu.strided_load %arg20[%c1, %c0_16] {strides = array<i32: 8, 1>} : memref<64x8xf32, #tpu.memory_space<vmem>>, vector<8x8xf32>
    %c2 = arith.constant 2 : index
    %c0_17 = arith.constant 0 : index
    %45 = tpu.strided_load %arg20[%c2, %c0_17] {strides = array<i32: 8, 1>} : memref<64x8xf32, #tpu.memory_space<vmem>>, vector<8x8xf32>
    %c3 = arith.constant 3 : index
    %c0_18 = arith.constant 0 : index
    %46 = tpu.strided_load %arg20[%c3, %c0_18] {strides = array<i32: 8, 1>} : memref<64x8xf32, #tpu.memory_space<vmem>>, vector<8x8xf32>
    %c4 = arith.constant 4 : index
    %c0_19 = arith.constant 0 : index
    %47 = tpu.strided_load %arg20[%c4, %c0_19] {strides = array<i32: 8, 1>} : memref<64x8xf32, #tpu.memory_space<vmem>>, vector<8x8xf32>
    %c5 = arith.constant 5 : index
    %c0_20 = arith.constant 0 : index
    %48 = tpu.strided_load %arg20[%c5, %c0_20] {strides = array<i32: 8, 1>} : memref<64x8xf32, #tpu.memory_space<vmem>>, vector<8x8xf32>
    %c6 = arith.constant 6 : index
    %c0_21 = arith.constant 0 : index
    %49 = tpu.strided_load %arg20[%c6, %c0_21] {strides = array<i32: 8, 1>} : memref<64x8xf32, #tpu.memory_space<vmem>>, vector<8x8xf32>
    %c7 = arith.constant 7 : index
    %c0_22 = arith.constant 0 : index
    %50 = tpu.strided_load %arg20[%c7, %c0_22] {strides = array<i32: 8, 1>} : memref<64x8xf32, #tpu.memory_space<vmem>>, vector<8x8xf32>
    %51 = tpu.concatenate %43, %44, %45, %46, %47, %48, %49, %50 in 1 : vector<8x8xf32>, vector<8x8xf32>, vector<8x8xf32>, vector<8x8xf32>, vector<8x8xf32>, vector<8x8xf32>, vector<8x8xf32>, vector<8x8xf32> -> vector<8x64xf32>
    %c0_23 = arith.constant 0 : index
    %c0_24 = arith.constant 0 : index
    %52 = vector.load %arg4[%c0_23, %c0_24] : memref<16x8xf32, #tpu.memory_space<vmem>>, vector<16x8xf32>
    %cst_25 = arith.constant dense<0.000000e+00> : vector<16x64xf32>
    %53 = tpu.matmul %52, %51, %cst_25 {dimension_numbers = #tpu.dot_dimension_numbers<[1], [0], [0], [1], [0, 0, 1, 1], [], []>} : vector<16x8xf32>, vector<8x64xf32>, vector<16x64xf32> -> vector<16x64xf32>
    %c0_26 = arith.constant 0 : index
    %c0_27 = arith.constant 0 : index
    %54 = vector.load %arg5[%c0_26, %c0_27] : memref<16x1xf32, #tpu.memory_space<vmem>>, vector<16x1xf32>
    %55 = vector.broadcast %54 : vector<16x1xf32> to vector<16x64xf32>
    %56 = arith.addf %53, %55 : vector<16x64xf32>
    %57 = arith.addf %56, %1 : vector<16x64xf32>
    %cst_28 = arith.constant 0.000000e+00 : f32
    %58 = vector.broadcast %cst_28 : f32 to vector<16x64xf32>
    %59 = arith.maximumf %57, %58 : vector<16x64xf32>
    %c0_29 = arith.constant 0 : index
    %c0_30 = arith.constant 0 : index
    %c0_31 = arith.constant 0 : index
    %60 = vector.load %arg8[%c0_29, %c0_30, %c0_31] : memref<4x16x144xf32, #tpu.memory_space<vmem>>, vector<1x16x144xf32>
    %61 = vector.shape_cast %60 : vector<1x16x144xf32> to vector<16x144xf32>
    %c0_32 = arith.constant 0 : index
    %c0_33 = arith.constant 0 : index
    %c0_34 = arith.constant 0 : index
    %62 = vector.load %arg9[%c0_32, %c0_33, %c0_34] : memref<4x16x1xf32, #tpu.memory_space<vmem>>, vector<1x16x1xf32>
    %63 = vector.shape_cast %62 : vector<1x16x1xf32> to vector<16x1xf32>
    %64 = vector.extract_strided_slice %59 {offsets = [0, 55], sizes = [16, 9], strides = [1, 1]} : vector<16x64xf32> to vector<16x9xf32>
    %65 = vector.extract_strided_slice %59 {offsets = [0, 0], sizes = [16, 55], strides = [1, 1]} : vector<16x64xf32> to vector<16x55xf32>
    %66 = tpu.concatenate %64, %65 in 1 : vector<16x9xf32>, vector<16x55xf32> -> vector<16x64xf32>
    %c0_35 = arith.constant 0 : index
    %c0_36 = arith.constant 0 : index
    %67 = vector.load %arg6[%c0_35, %c0_36] : memref<9x64xf32, #tpu.memory_space<vmem>>, vector<1x64xf32>
    %68 = vector.broadcast %67 : vector<1x64xf32> to vector<16x64xf32>
    %69 = arith.mulf %66, %68 : vector<16x64xf32>
    %70 = vector.extract_strided_slice %59 {offsets = [0, 56], sizes = [16, 8], strides = [1, 1]} : vector<16x64xf32> to vector<16x8xf32>
    %71 = vector.extract_strided_slice %59 {offsets = [0, 0], sizes = [16, 56], strides = [1, 1]} : vector<16x64xf32> to vector<16x56xf32>
    %72 = tpu.concatenate %70, %71 in 1 : vector<16x8xf32>, vector<16x56xf32> -> vector<16x64xf32>
    %c1_37 = arith.constant 1 : index
    %c0_38 = arith.constant 0 : index
    %73 = vector.load %arg6[%c1_37, %c0_38] : memref<9x64xf32, #tpu.memory_space<vmem>>, vector<1x64xf32>
    %74 = vector.broadcast %73 : vector<1x64xf32> to vector<16x64xf32>
    %75 = arith.mulf %72, %74 : vector<16x64xf32>
    %76 = vector.extract_strided_slice %59 {offsets = [0, 57], sizes = [16, 7], strides = [1, 1]} : vector<16x64xf32> to vector<16x7xf32>
    %77 = vector.extract_strided_slice %59 {offsets = [0, 0], sizes = [16, 57], strides = [1, 1]} : vector<16x64xf32> to vector<16x57xf32>
    %78 = tpu.concatenate %76, %77 in 1 : vector<16x7xf32>, vector<16x57xf32> -> vector<16x64xf32>
    %c2_39 = arith.constant 2 : index
    %c0_40 = arith.constant 0 : index
    %79 = vector.load %arg6[%c2_39, %c0_40] : memref<9x64xf32, #tpu.memory_space<vmem>>, vector<1x64xf32>
    %80 = vector.broadcast %79 : vector<1x64xf32> to vector<16x64xf32>
    %81 = arith.mulf %78, %80 : vector<16x64xf32>
    %82 = vector.extract_strided_slice %59 {offsets = [0, 63], sizes = [16, 1], strides = [1, 1]} : vector<16x64xf32> to vector<16x1xf32>
    %83 = vector.extract_strided_slice %59 {offsets = [0, 0], sizes = [16, 63], strides = [1, 1]} : vector<16x64xf32> to vector<16x63xf32>
    %84 = tpu.concatenate %82, %83 in 1 : vector<16x1xf32>, vector<16x63xf32> -> vector<16x64xf32>
    %c3_41 = arith.constant 3 : index
    %c0_42 = arith.constant 0 : index
    %85 = vector.load %arg6[%c3_41, %c0_42] : memref<9x64xf32, #tpu.memory_space<vmem>>, vector<1x64xf32>
    %86 = vector.broadcast %85 : vector<1x64xf32> to vector<16x64xf32>
    %87 = arith.mulf %84, %86 : vector<16x64xf32>
    %88 = vector.extract_strided_slice %59 {offsets = [0, 1], sizes = [16, 63], strides = [1, 1]} : vector<16x64xf32> to vector<16x63xf32>
    %89 = vector.extract_strided_slice %59 {offsets = [0, 0], sizes = [16, 1], strides = [1, 1]} : vector<16x64xf32> to vector<16x1xf32>
    %90 = tpu.concatenate %88, %89 in 1 : vector<16x63xf32>, vector<16x1xf32> -> vector<16x64xf32>
    %c5_43 = arith.constant 5 : index
    %c0_44 = arith.constant 0 : index
    %91 = vector.load %arg6[%c5_43, %c0_44] : memref<9x64xf32, #tpu.memory_space<vmem>>, vector<1x64xf32>
    %92 = vector.broadcast %91 : vector<1x64xf32> to vector<16x64xf32>
    %93 = arith.mulf %90, %92 : vector<16x64xf32>
    %94 = vector.extract_strided_slice %59 {offsets = [0, 7], sizes = [16, 57], strides = [1, 1]} : vector<16x64xf32> to vector<16x57xf32>
    %95 = vector.extract_strided_slice %59 {offsets = [0, 0], sizes = [16, 7], strides = [1, 1]} : vector<16x64xf32> to vector<16x7xf32>
    %96 = tpu.concatenate %94, %95 in 1 : vector<16x57xf32>, vector<16x7xf32> -> vector<16x64xf32>
    %c6_45 = arith.constant 6 : index
    %c0_46 = arith.constant 0 : index
    %97 = vector.load %arg6[%c6_45, %c0_46] : memref<9x64xf32, #tpu.memory_space<vmem>>, vector<1x64xf32>
    %98 = vector.broadcast %97 : vector<1x64xf32> to vector<16x64xf32>
    %99 = arith.mulf %96, %98 : vector<16x64xf32>
    %100 = vector.extract_strided_slice %59 {offsets = [0, 8], sizes = [16, 56], strides = [1, 1]} : vector<16x64xf32> to vector<16x56xf32>
    %101 = vector.extract_strided_slice %59 {offsets = [0, 0], sizes = [16, 8], strides = [1, 1]} : vector<16x64xf32> to vector<16x8xf32>
    %102 = tpu.concatenate %100, %101 in 1 : vector<16x56xf32>, vector<16x8xf32> -> vector<16x64xf32>
    %c7_47 = arith.constant 7 : index
    %c0_48 = arith.constant 0 : index
    %103 = vector.load %arg6[%c7_47, %c0_48] : memref<9x64xf32, #tpu.memory_space<vmem>>, vector<1x64xf32>
    %104 = vector.broadcast %103 : vector<1x64xf32> to vector<16x64xf32>
    %105 = arith.mulf %102, %104 : vector<16x64xf32>
    %106 = vector.extract_strided_slice %59 {offsets = [0, 9], sizes = [16, 55], strides = [1, 1]} : vector<16x64xf32> to vector<16x55xf32>
    %107 = vector.extract_strided_slice %59 {offsets = [0, 0], sizes = [16, 9], strides = [1, 1]} : vector<16x64xf32> to vector<16x9xf32>
    %108 = tpu.concatenate %106, %107 in 1 : vector<16x55xf32>, vector<16x9xf32> -> vector<16x64xf32>
    %c8 = arith.constant 8 : index
    %c0_49 = arith.constant 0 : index
    %109 = vector.load %arg6[%c8, %c0_49] : memref<9x64xf32, #tpu.memory_space<vmem>>, vector<1x64xf32>
    %110 = vector.broadcast %109 : vector<1x64xf32> to vector<16x64xf32>
    %111 = arith.mulf %108, %110 : vector<16x64xf32>
    %112 = tpu.concatenate %69, %75, %81, %87, %59, %93, %99, %105, %111 in 0 : vector<16x64xf32>, vector<16x64xf32>, vector<16x64xf32>, vector<16x64xf32>, vector<16x64xf32>, vector<16x64xf32>, vector<16x64xf32>, vector<16x64xf32>, vector<16x64xf32> -> vector<144x64xf32>
    %cst_50 = arith.constant dense<0.000000e+00> : vector<16x64xf32>
    %113 = tpu.matmul %61, %112, %cst_50 {dimension_numbers = #tpu.dot_dimension_numbers<[1], [0], [0], [1], [0, 0, 1, 1], [], []>} : vector<16x144xf32>, vector<144x64xf32>, vector<16x64xf32> -> vector<16x64xf32>
    %114 = vector.broadcast %63 : vector<16x1xf32> to vector<16x64xf32>
    %115 = arith.addf %113, %114 : vector<16x64xf32>
    %cst_51 = arith.constant 0.000000e+00 : f32
    %116 = vector.broadcast %cst_51 : f32 to vector<16x64xf32>
    %117 = arith.maximumf %115, %116 : vector<16x64xf32>
    %c1_52 = arith.constant 1 : index
    %c0_53 = arith.constant 0 : index
    %c0_54 = arith.constant 0 : index
    %118 = vector.load %arg8[%c1_52, %c0_53, %c0_54] : memref<4x16x144xf32, #tpu.memory_space<vmem>>, vector<1x16x144xf32>
    %119 = vector.shape_cast %118 : vector<1x16x144xf32> to vector<16x144xf32>
    %c1_55 = arith.constant 1 : index
    %c0_56 = arith.constant 0 : index
    %c0_57 = arith.constant 0 : index
    %120 = vector.load %arg9[%c1_55, %c0_56, %c0_57] : memref<4x16x1xf32, #tpu.memory_space<vmem>>, vector<1x16x1xf32>
    %121 = vector.shape_cast %120 : vector<1x16x1xf32> to vector<16x1xf32>
    %122 = vector.extract_strided_slice %117 {offsets = [0, 55], sizes = [16, 9], strides = [1, 1]} : vector<16x64xf32> to vector<16x9xf32>
    %123 = vector.extract_strided_slice %117 {offsets = [0, 0], sizes = [16, 55], strides = [1, 1]} : vector<16x64xf32> to vector<16x55xf32>
    %124 = tpu.concatenate %122, %123 in 1 : vector<16x9xf32>, vector<16x55xf32> -> vector<16x64xf32>
    %c0_58 = arith.constant 0 : index
    %c0_59 = arith.constant 0 : index
    %125 = vector.load %arg6[%c0_58, %c0_59] : memref<9x64xf32, #tpu.memory_space<vmem>>, vector<1x64xf32>
    %126 = vector.broadcast %125 : vector<1x64xf32> to vector<16x64xf32>
    %127 = arith.mulf %124, %126 : vector<16x64xf32>
    %128 = vector.extract_strided_slice %117 {offsets = [0, 56], sizes = [16, 8], strides = [1, 1]} : vector<16x64xf32> to vector<16x8xf32>
    %129 = vector.extract_strided_slice %117 {offsets = [0, 0], sizes = [16, 56], strides = [1, 1]} : vector<16x64xf32> to vector<16x56xf32>
    %130 = tpu.concatenate %128, %129 in 1 : vector<16x8xf32>, vector<16x56xf32> -> vector<16x64xf32>
    %c1_60 = arith.constant 1 : index
    %c0_61 = arith.constant 0 : index
    %131 = vector.load %arg6[%c1_60, %c0_61] : memref<9x64xf32, #tpu.memory_space<vmem>>, vector<1x64xf32>
    %132 = vector.broadcast %131 : vector<1x64xf32> to vector<16x64xf32>
    %133 = arith.mulf %130, %132 : vector<16x64xf32>
    %134 = vector.extract_strided_slice %117 {offsets = [0, 57], sizes = [16, 7], strides = [1, 1]} : vector<16x64xf32> to vector<16x7xf32>
    %135 = vector.extract_strided_slice %117 {offsets = [0, 0], sizes = [16, 57], strides = [1, 1]} : vector<16x64xf32> to vector<16x57xf32>
    %136 = tpu.concatenate %134, %135 in 1 : vector<16x7xf32>, vector<16x57xf32> -> vector<16x64xf32>
    %c2_62 = arith.constant 2 : index
    %c0_63 = arith.constant 0 : index
    %137 = vector.load %arg6[%c2_62, %c0_63] : memref<9x64xf32, #tpu.memory_space<vmem>>, vector<1x64xf32>
    %138 = vector.broadcast %137 : vector<1x64xf32> to vector<16x64xf32>
    %139 = arith.mulf %136, %138 : vector<16x64xf32>
    %140 = vector.extract_strided_slice %117 {offsets = [0, 63], sizes = [16, 1], strides = [1, 1]} : vector<16x64xf32> to vector<16x1xf32>
    %141 = vector.extract_strided_slice %117 {offsets = [0, 0], sizes = [16, 63], strides = [1, 1]} : vector<16x64xf32> to vector<16x63xf32>
    %142 = tpu.concatenate %140, %141 in 1 : vector<16x1xf32>, vector<16x63xf32> -> vector<16x64xf32>
    %c3_64 = arith.constant 3 : index
    %c0_65 = arith.constant 0 : index
    %143 = vector.load %arg6[%c3_64, %c0_65] : memref<9x64xf32, #tpu.memory_space<vmem>>, vector<1x64xf32>
    %144 = vector.broadcast %143 : vector<1x64xf32> to vector<16x64xf32>
    %145 = arith.mulf %142, %144 : vector<16x64xf32>
    %146 = vector.extract_strided_slice %117 {offsets = [0, 1], sizes = [16, 63], strides = [1, 1]} : vector<16x64xf32> to vector<16x63xf32>
    %147 = vector.extract_strided_slice %117 {offsets = [0, 0], sizes = [16, 1], strides = [1, 1]} : vector<16x64xf32> to vector<16x1xf32>
    %148 = tpu.concatenate %146, %147 in 1 : vector<16x63xf32>, vector<16x1xf32> -> vector<16x64xf32>
    %c5_66 = arith.constant 5 : index
    %c0_67 = arith.constant 0 : index
    %149 = vector.load %arg6[%c5_66, %c0_67] : memref<9x64xf32, #tpu.memory_space<vmem>>, vector<1x64xf32>
    %150 = vector.broadcast %149 : vector<1x64xf32> to vector<16x64xf32>
    %151 = arith.mulf %148, %150 : vector<16x64xf32>
    %152 = vector.extract_strided_slice %117 {offsets = [0, 7], sizes = [16, 57], strides = [1, 1]} : vector<16x64xf32> to vector<16x57xf32>
    %153 = vector.extract_strided_slice %117 {offsets = [0, 0], sizes = [16, 7], strides = [1, 1]} : vector<16x64xf32> to vector<16x7xf32>
    %154 = tpu.concatenate %152, %153 in 1 : vector<16x57xf32>, vector<16x7xf32> -> vector<16x64xf32>
    %c6_68 = arith.constant 6 : index
    %c0_69 = arith.constant 0 : index
    %155 = vector.load %arg6[%c6_68, %c0_69] : memref<9x64xf32, #tpu.memory_space<vmem>>, vector<1x64xf32>
    %156 = vector.broadcast %155 : vector<1x64xf32> to vector<16x64xf32>
    %157 = arith.mulf %154, %156 : vector<16x64xf32>
    %158 = vector.extract_strided_slice %117 {offsets = [0, 8], sizes = [16, 56], strides = [1, 1]} : vector<16x64xf32> to vector<16x56xf32>
    %159 = vector.extract_strided_slice %117 {offsets = [0, 0], sizes = [16, 8], strides = [1, 1]} : vector<16x64xf32> to vector<16x8xf32>
    %160 = tpu.concatenate %158, %159 in 1 : vector<16x56xf32>, vector<16x8xf32> -> vector<16x64xf32>
    %c7_70 = arith.constant 7 : index
    %c0_71 = arith.constant 0 : index
    %161 = vector.load %arg6[%c7_70, %c0_71] : memref<9x64xf32, #tpu.memory_space<vmem>>, vector<1x64xf32>
    %162 = vector.broadcast %161 : vector<1x64xf32> to vector<16x64xf32>
    %163 = arith.mulf %160, %162 : vector<16x64xf32>
    %164 = vector.extract_strided_slice %117 {offsets = [0, 9], sizes = [16, 55], strides = [1, 1]} : vector<16x64xf32> to vector<16x55xf32>
    %165 = vector.extract_strided_slice %117 {offsets = [0, 0], sizes = [16, 9], strides = [1, 1]} : vector<16x64xf32> to vector<16x9xf32>
    %166 = tpu.concatenate %164, %165 in 1 : vector<16x55xf32>, vector<16x9xf32> -> vector<16x64xf32>
    %c8_72 = arith.constant 8 : index
    %c0_73 = arith.constant 0 : index
    %167 = vector.load %arg6[%c8_72, %c0_73] : memref<9x64xf32, #tpu.memory_space<vmem>>, vector<1x64xf32>
    %168 = vector.broadcast %167 : vector<1x64xf32> to vector<16x64xf32>
    %169 = arith.mulf %166, %168 : vector<16x64xf32>
    %170 = tpu.concatenate %127, %133, %139, %145, %117, %151, %157, %163, %169 in 0 : vector<16x64xf32>, vector<16x64xf32>, vector<16x64xf32>, vector<16x64xf32>, vector<16x64xf32>, vector<16x64xf32>, vector<16x64xf32>, vector<16x64xf32>, vector<16x64xf32> -> vector<144x64xf32>
    %cst_74 = arith.constant dense<0.000000e+00> : vector<16x64xf32>
    %171 = tpu.matmul %119, %170, %cst_74 {dimension_numbers = #tpu.dot_dimension_numbers<[1], [0], [0], [1], [0, 0, 1, 1], [], []>} : vector<16x144xf32>, vector<144x64xf32>, vector<16x64xf32> -> vector<16x64xf32>
    %172 = vector.broadcast %121 : vector<16x1xf32> to vector<16x64xf32>
    %173 = arith.addf %171, %172 : vector<16x64xf32>
    %c2_75 = arith.constant 2 : index
    %c0_76 = arith.constant 0 : index
    %c0_77 = arith.constant 0 : index
    %174 = vector.load %arg8[%c2_75, %c0_76, %c0_77] : memref<4x16x144xf32, #tpu.memory_space<vmem>>, vector<1x16x144xf32>
    %175 = vector.shape_cast %174 : vector<1x16x144xf32> to vector<16x144xf32>
    %c2_78 = arith.constant 2 : index
    %c0_79 = arith.constant 0 : index
    %c0_80 = arith.constant 0 : index
    %176 = vector.load %arg9[%c2_78, %c0_79, %c0_80] : memref<4x16x1xf32, #tpu.memory_space<vmem>>, vector<1x16x1xf32>
    %177 = vector.shape_cast %176 : vector<1x16x1xf32> to vector<16x1xf32>
    %178 = vector.extract_strided_slice %59 {offsets = [0, 37], sizes = [16, 27], strides = [1, 1]} : vector<16x64xf32> to vector<16x27xf32>
    %179 = vector.extract_strided_slice %59 {offsets = [0, 0], sizes = [16, 37], strides = [1, 1]} : vector<16x64xf32> to vector<16x37xf32>
    %180 = tpu.concatenate %178, %179 in 1 : vector<16x27xf32>, vector<16x37xf32> -> vector<16x64xf32>
    %c0_81 = arith.constant 0 : index
    %c0_82 = arith.constant 0 : index
    %181 = vector.load %arg7[%c0_81, %c0_82] : memref<9x64xf32, #tpu.memory_space<vmem>>, vector<1x64xf32>
    %182 = vector.broadcast %181 : vector<1x64xf32> to vector<16x64xf32>
    %183 = arith.mulf %180, %182 : vector<16x64xf32>
    %184 = vector.extract_strided_slice %59 {offsets = [0, 40], sizes = [16, 24], strides = [1, 1]} : vector<16x64xf32> to vector<16x24xf32>
    %185 = vector.extract_strided_slice %59 {offsets = [0, 0], sizes = [16, 40], strides = [1, 1]} : vector<16x64xf32> to vector<16x40xf32>
    %186 = tpu.concatenate %184, %185 in 1 : vector<16x24xf32>, vector<16x40xf32> -> vector<16x64xf32>
    %c1_83 = arith.constant 1 : index
    %c0_84 = arith.constant 0 : index
    %187 = vector.load %arg7[%c1_83, %c0_84] : memref<9x64xf32, #tpu.memory_space<vmem>>, vector<1x64xf32>
    %188 = vector.broadcast %187 : vector<1x64xf32> to vector<16x64xf32>
    %189 = arith.mulf %186, %188 : vector<16x64xf32>
    %190 = vector.extract_strided_slice %59 {offsets = [0, 43], sizes = [16, 21], strides = [1, 1]} : vector<16x64xf32> to vector<16x21xf32>
    %191 = vector.extract_strided_slice %59 {offsets = [0, 0], sizes = [16, 43], strides = [1, 1]} : vector<16x64xf32> to vector<16x43xf32>
    %192 = tpu.concatenate %190, %191 in 1 : vector<16x21xf32>, vector<16x43xf32> -> vector<16x64xf32>
    %c2_85 = arith.constant 2 : index
    %c0_86 = arith.constant 0 : index
    %193 = vector.load %arg7[%c2_85, %c0_86] : memref<9x64xf32, #tpu.memory_space<vmem>>, vector<1x64xf32>
    %194 = vector.broadcast %193 : vector<1x64xf32> to vector<16x64xf32>
    %195 = arith.mulf %192, %194 : vector<16x64xf32>
    %196 = vector.extract_strided_slice %59 {offsets = [0, 61], sizes = [16, 3], strides = [1, 1]} : vector<16x64xf32> to vector<16x3xf32>
    %197 = vector.extract_strided_slice %59 {offsets = [0, 0], sizes = [16, 61], strides = [1, 1]} : vector<16x64xf32> to vector<16x61xf32>
    %198 = tpu.concatenate %196, %197 in 1 : vector<16x3xf32>, vector<16x61xf32> -> vector<16x64xf32>
    %c3_87 = arith.constant 3 : index
    %c0_88 = arith.constant 0 : index
    %199 = vector.load %arg7[%c3_87, %c0_88] : memref<9x64xf32, #tpu.memory_space<vmem>>, vector<1x64xf32>
    %200 = vector.broadcast %199 : vector<1x64xf32> to vector<16x64xf32>
    %201 = arith.mulf %198, %200 : vector<16x64xf32>
    %202 = vector.extract_strided_slice %59 {offsets = [0, 3], sizes = [16, 61], strides = [1, 1]} : vector<16x64xf32> to vector<16x61xf32>
    %203 = vector.extract_strided_slice %59 {offsets = [0, 0], sizes = [16, 3], strides = [1, 1]} : vector<16x64xf32> to vector<16x3xf32>
    %204 = tpu.concatenate %202, %203 in 1 : vector<16x61xf32>, vector<16x3xf32> -> vector<16x64xf32>
    %c5_89 = arith.constant 5 : index
    %c0_90 = arith.constant 0 : index
    %205 = vector.load %arg7[%c5_89, %c0_90] : memref<9x64xf32, #tpu.memory_space<vmem>>, vector<1x64xf32>
    %206 = vector.broadcast %205 : vector<1x64xf32> to vector<16x64xf32>
    %207 = arith.mulf %204, %206 : vector<16x64xf32>
    %208 = vector.extract_strided_slice %59 {offsets = [0, 21], sizes = [16, 43], strides = [1, 1]} : vector<16x64xf32> to vector<16x43xf32>
    %209 = vector.extract_strided_slice %59 {offsets = [0, 0], sizes = [16, 21], strides = [1, 1]} : vector<16x64xf32> to vector<16x21xf32>
    %210 = tpu.concatenate %208, %209 in 1 : vector<16x43xf32>, vector<16x21xf32> -> vector<16x64xf32>
    %c6_91 = arith.constant 6 : index
    %c0_92 = arith.constant 0 : index
    %211 = vector.load %arg7[%c6_91, %c0_92] : memref<9x64xf32, #tpu.memory_space<vmem>>, vector<1x64xf32>
    %212 = vector.broadcast %211 : vector<1x64xf32> to vector<16x64xf32>
    %213 = arith.mulf %210, %212 : vector<16x64xf32>
    %214 = vector.extract_strided_slice %59 {offsets = [0, 24], sizes = [16, 40], strides = [1, 1]} : vector<16x64xf32> to vector<16x40xf32>
    %215 = vector.extract_strided_slice %59 {offsets = [0, 0], sizes = [16, 24], strides = [1, 1]} : vector<16x64xf32> to vector<16x24xf32>
    %216 = tpu.concatenate %214, %215 in 1 : vector<16x40xf32>, vector<16x24xf32> -> vector<16x64xf32>
    %c7_93 = arith.constant 7 : index
    %c0_94 = arith.constant 0 : index
    %217 = vector.load %arg7[%c7_93, %c0_94] : memref<9x64xf32, #tpu.memory_space<vmem>>, vector<1x64xf32>
    %218 = vector.broadcast %217 : vector<1x64xf32> to vector<16x64xf32>
    %219 = arith.mulf %216, %218 : vector<16x64xf32>
    %220 = vector.extract_strided_slice %59 {offsets = [0, 27], sizes = [16, 37], strides = [1, 1]} : vector<16x64xf32> to vector<16x37xf32>
    %221 = vector.extract_strided_slice %59 {offsets = [0, 0], sizes = [16, 27], strides = [1, 1]} : vector<16x64xf32> to vector<16x27xf32>
    %222 = tpu.concatenate %220, %221 in 1 : vector<16x37xf32>, vector<16x27xf32> -> vector<16x64xf32>
    %c8_95 = arith.constant 8 : index
    %c0_96 = arith.constant 0 : index
    %223 = vector.load %arg7[%c8_95, %c0_96] : memref<9x64xf32, #tpu.memory_space<vmem>>, vector<1x64xf32>
    %224 = vector.broadcast %223 : vector<1x64xf32> to vector<16x64xf32>
    %225 = arith.mulf %222, %224 : vector<16x64xf32>
    %226 = tpu.concatenate %183, %189, %195, %201, %59, %207, %213, %219, %225 in 0 : vector<16x64xf32>, vector<16x64xf32>, vector<16x64xf32>, vector<16x64xf32>, vector<16x64xf32>, vector<16x64xf32>, vector<16x64xf32>, vector<16x64xf32>, vector<16x64xf32> -> vector<144x64xf32>
    %cst_97 = arith.constant dense<0.000000e+00> : vector<16x64xf32>
    %227 = tpu.matmul %175, %226, %cst_97 {dimension_numbers = #tpu.dot_dimension_numbers<[1], [0], [0], [1], [0, 0, 1, 1], [], []>} : vector<16x144xf32>, vector<144x64xf32>, vector<16x64xf32> -> vector<16x64xf32>
    %228 = vector.broadcast %177 : vector<16x1xf32> to vector<16x64xf32>
    %229 = arith.addf %227, %228 : vector<16x64xf32>
    %cst_98 = arith.constant 0.000000e+00 : f32
    %230 = vector.broadcast %cst_98 : f32 to vector<16x64xf32>
    %231 = arith.maximumf %229, %230 : vector<16x64xf32>
    %c3_99 = arith.constant 3 : index
    %c0_100 = arith.constant 0 : index
    %c0_101 = arith.constant 0 : index
    %232 = vector.load %arg8[%c3_99, %c0_100, %c0_101] : memref<4x16x144xf32, #tpu.memory_space<vmem>>, vector<1x16x144xf32>
    %233 = vector.shape_cast %232 : vector<1x16x144xf32> to vector<16x144xf32>
    %c3_102 = arith.constant 3 : index
    %c0_103 = arith.constant 0 : index
    %c0_104 = arith.constant 0 : index
    %234 = vector.load %arg9[%c3_102, %c0_103, %c0_104] : memref<4x16x1xf32, #tpu.memory_space<vmem>>, vector<1x16x1xf32>
    %235 = vector.shape_cast %234 : vector<1x16x1xf32> to vector<16x1xf32>
    %236 = vector.extract_strided_slice %231 {offsets = [0, 37], sizes = [16, 27], strides = [1, 1]} : vector<16x64xf32> to vector<16x27xf32>
    %237 = vector.extract_strided_slice %231 {offsets = [0, 0], sizes = [16, 37], strides = [1, 1]} : vector<16x64xf32> to vector<16x37xf32>
    %238 = tpu.concatenate %236, %237 in 1 : vector<16x27xf32>, vector<16x37xf32> -> vector<16x64xf32>
    %c0_105 = arith.constant 0 : index
    %c0_106 = arith.constant 0 : index
    %239 = vector.load %arg7[%c0_105, %c0_106] : memref<9x64xf32, #tpu.memory_space<vmem>>, vector<1x64xf32>
    %240 = vector.broadcast %239 : vector<1x64xf32> to vector<16x64xf32>
    %241 = arith.mulf %238, %240 : vector<16x64xf32>
    %242 = vector.extract_strided_slice %231 {offsets = [0, 40], sizes = [16, 24], strides = [1, 1]} : vector<16x64xf32> to vector<16x24xf32>
    %243 = vector.extract_strided_slice %231 {offsets = [0, 0], sizes = [16, 40], strides = [1, 1]} : vector<16x64xf32> to vector<16x40xf32>
    %244 = tpu.concatenate %242, %243 in 1 : vector<16x24xf32>, vector<16x40xf32> -> vector<16x64xf32>
    %c1_107 = arith.constant 1 : index
    %c0_108 = arith.constant 0 : index
    %245 = vector.load %arg7[%c1_107, %c0_108] : memref<9x64xf32, #tpu.memory_space<vmem>>, vector<1x64xf32>
    %246 = vector.broadcast %245 : vector<1x64xf32> to vector<16x64xf32>
    %247 = arith.mulf %244, %246 : vector<16x64xf32>
    %248 = vector.extract_strided_slice %231 {offsets = [0, 43], sizes = [16, 21], strides = [1, 1]} : vector<16x64xf32> to vector<16x21xf32>
    %249 = vector.extract_strided_slice %231 {offsets = [0, 0], sizes = [16, 43], strides = [1, 1]} : vector<16x64xf32> to vector<16x43xf32>
    %250 = tpu.concatenate %248, %249 in 1 : vector<16x21xf32>, vector<16x43xf32> -> vector<16x64xf32>
    %c2_109 = arith.constant 2 : index
    %c0_110 = arith.constant 0 : index
    %251 = vector.load %arg7[%c2_109, %c0_110] : memref<9x64xf32, #tpu.memory_space<vmem>>, vector<1x64xf32>
    %252 = vector.broadcast %251 : vector<1x64xf32> to vector<16x64xf32>
    %253 = arith.mulf %250, %252 : vector<16x64xf32>
    %254 = vector.extract_strided_slice %231 {offsets = [0, 61], sizes = [16, 3], strides = [1, 1]} : vector<16x64xf32> to vector<16x3xf32>
    %255 = vector.extract_strided_slice %231 {offsets = [0, 0], sizes = [16, 61], strides = [1, 1]} : vector<16x64xf32> to vector<16x61xf32>
    %256 = tpu.concatenate %254, %255 in 1 : vector<16x3xf32>, vector<16x61xf32> -> vector<16x64xf32>
    %c3_111 = arith.constant 3 : index
    %c0_112 = arith.constant 0 : index
    %257 = vector.load %arg7[%c3_111, %c0_112] : memref<9x64xf32, #tpu.memory_space<vmem>>, vector<1x64xf32>
    %258 = vector.broadcast %257 : vector<1x64xf32> to vector<16x64xf32>
    %259 = arith.mulf %256, %258 : vector<16x64xf32>
    %260 = vector.extract_strided_slice %231 {offsets = [0, 3], sizes = [16, 61], strides = [1, 1]} : vector<16x64xf32> to vector<16x61xf32>
    %261 = vector.extract_strided_slice %231 {offsets = [0, 0], sizes = [16, 3], strides = [1, 1]} : vector<16x64xf32> to vector<16x3xf32>
    %262 = tpu.concatenate %260, %261 in 1 : vector<16x61xf32>, vector<16x3xf32> -> vector<16x64xf32>
    %c5_113 = arith.constant 5 : index
    %c0_114 = arith.constant 0 : index
    %263 = vector.load %arg7[%c5_113, %c0_114] : memref<9x64xf32, #tpu.memory_space<vmem>>, vector<1x64xf32>
    %264 = vector.broadcast %263 : vector<1x64xf32> to vector<16x64xf32>
    %265 = arith.mulf %262, %264 : vector<16x64xf32>
    %266 = vector.extract_strided_slice %231 {offsets = [0, 21], sizes = [16, 43], strides = [1, 1]} : vector<16x64xf32> to vector<16x43xf32>
    %267 = vector.extract_strided_slice %231 {offsets = [0, 0], sizes = [16, 21], strides = [1, 1]} : vector<16x64xf32> to vector<16x21xf32>
    %268 = tpu.concatenate %266, %267 in 1 : vector<16x43xf32>, vector<16x21xf32> -> vector<16x64xf32>
    %c6_115 = arith.constant 6 : index
    %c0_116 = arith.constant 0 : index
    %269 = vector.load %arg7[%c6_115, %c0_116] : memref<9x64xf32, #tpu.memory_space<vmem>>, vector<1x64xf32>
    %270 = vector.broadcast %269 : vector<1x64xf32> to vector<16x64xf32>
    %271 = arith.mulf %268, %270 : vector<16x64xf32>
    %272 = vector.extract_strided_slice %231 {offsets = [0, 24], sizes = [16, 40], strides = [1, 1]} : vector<16x64xf32> to vector<16x40xf32>
    %273 = vector.extract_strided_slice %231 {offsets = [0, 0], sizes = [16, 24], strides = [1, 1]} : vector<16x64xf32> to vector<16x24xf32>
    %274 = tpu.concatenate %272, %273 in 1 : vector<16x40xf32>, vector<16x24xf32> -> vector<16x64xf32>
    %c7_117 = arith.constant 7 : index
    %c0_118 = arith.constant 0 : index
    %275 = vector.load %arg7[%c7_117, %c0_118] : memref<9x64xf32, #tpu.memory_space<vmem>>, vector<1x64xf32>
    %276 = vector.broadcast %275 : vector<1x64xf32> to vector<16x64xf32>
    %277 = arith.mulf %274, %276 : vector<16x64xf32>
    %278 = vector.extract_strided_slice %231 {offsets = [0, 27], sizes = [16, 37], strides = [1, 1]} : vector<16x64xf32> to vector<16x37xf32>
    %279 = vector.extract_strided_slice %231 {offsets = [0, 0], sizes = [16, 27], strides = [1, 1]} : vector<16x64xf32> to vector<16x27xf32>
    %280 = tpu.concatenate %278, %279 in 1 : vector<16x37xf32>, vector<16x27xf32> -> vector<16x64xf32>
    %c8_119 = arith.constant 8 : index
    %c0_120 = arith.constant 0 : index
    %281 = vector.load %arg7[%c8_119, %c0_120] : memref<9x64xf32, #tpu.memory_space<vmem>>, vector<1x64xf32>
    %282 = vector.broadcast %281 : vector<1x64xf32> to vector<16x64xf32>
    %283 = arith.mulf %280, %282 : vector<16x64xf32>
    %284 = tpu.concatenate %241, %247, %253, %259, %231, %265, %271, %277, %283 in 0 : vector<16x64xf32>, vector<16x64xf32>, vector<16x64xf32>, vector<16x64xf32>, vector<16x64xf32>, vector<16x64xf32>, vector<16x64xf32>, vector<16x64xf32>, vector<16x64xf32> -> vector<144x64xf32>
    %cst_121 = arith.constant dense<0.000000e+00> : vector<16x64xf32>
    %285 = tpu.matmul %233, %284, %cst_121 {dimension_numbers = #tpu.dot_dimension_numbers<[1], [0], [0], [1], [0, 0, 1, 1], [], []>} : vector<16x144xf32>, vector<144x64xf32>, vector<16x64xf32> -> vector<16x64xf32>
    %286 = vector.broadcast %235 : vector<16x1xf32> to vector<16x64xf32>
    %287 = arith.addf %285, %286 : vector<16x64xf32>
    %288 = tpu.concatenate %57, %115, %173, %229, %287 in 0 : vector<16x64xf32>, vector<16x64xf32>, vector<16x64xf32>, vector<16x64xf32>, vector<16x64xf32> -> vector<80x64xf32>
    %c0_122 = arith.constant 0 : index
    %c0_123 = arith.constant 0 : index
    %289 = vector.load %arg10[%c0_122, %c0_123] : memref<16x80xf32, #tpu.memory_space<vmem>>, vector<16x80xf32>
    %cst_124 = arith.constant dense<0.000000e+00> : vector<16x64xf32>
    %290 = tpu.matmul %289, %288, %cst_124 {dimension_numbers = #tpu.dot_dimension_numbers<[1], [0], [0], [1], [0, 0, 1, 1], [], []>} : vector<16x80xf32>, vector<80x64xf32>, vector<16x64xf32> -> vector<16x64xf32>
    %c0_125 = arith.constant 0 : index
    %c0_126 = arith.constant 0 : index
    %291 = vector.load %arg11[%c0_125, %c0_126] : memref<16x1xf32, #tpu.memory_space<vmem>>, vector<16x1xf32>
    %292 = vector.broadcast %291 : vector<16x1xf32> to vector<16x64xf32>
    %293 = arith.addf %290, %292 : vector<16x64xf32>
    %cst_127 = arith.constant 0.000000e+00 : f32
    %294 = vector.broadcast %cst_127 : f32 to vector<16x64xf32>
    %295 = arith.maximumf %293, %294 : vector<16x64xf32>
    %c0_128 = arith.constant 0 : index
    %c0_129 = arith.constant 0 : index
    %296 = vector.load %arg12[%c0_128, %c0_129] : memref<12x16xf32, #tpu.memory_space<vmem>>, vector<12x16xf32>
    %cst_130 = arith.constant dense<0.000000e+00> : vector<12x64xf32>
    %297 = tpu.matmul %296, %295, %cst_130 {dimension_numbers = #tpu.dot_dimension_numbers<[1], [0], [0], [1], [0, 0, 1, 1], [], []>} : vector<12x16xf32>, vector<16x64xf32>, vector<12x64xf32> -> vector<12x64xf32>
    %c0_131 = arith.constant 0 : index
    %c0_132 = arith.constant 0 : index
    %298 = vector.load %arg13[%c0_131, %c0_132] : memref<12x1xf32, #tpu.memory_space<vmem>>, vector<12x1xf32>
    %299 = vector.broadcast %298 : vector<12x1xf32> to vector<12x64xf32>
    %300 = arith.addf %297, %299 : vector<12x64xf32>
    %301 = vector.extract_strided_slice %300 {offsets = [0, 0], sizes = [8, 64], strides = [1, 1]} : vector<12x64xf32> to vector<8x64xf32>
    %302 = vector.extract_strided_slice %300 {offsets = [8, 0], sizes = [4, 64], strides = [1, 1]} : vector<12x64xf32> to vector<4x64xf32>
    %cst_133 = arith.constant dense<0.000000e+00> : vector<8x4xf32>
    %303 = tpu.matmul %301, %302, %cst_133 {dimension_numbers = #tpu.dot_dimension_numbers<[1], [1], [0], [0], [0, 0, 1, 0], [], []>} : vector<8x64xf32>, vector<4x64xf32>, vector<8x4xf32> -> vector<8x4xf32>
    %304 = vector.shape_cast %303 : vector<8x4xf32> to vector<1x8x4xf32>
    %cst_134 = arith.constant dense<0xFF800000> : vector<1xf32>
    %305 = vector.multi_reduction <maximumf>, %304, %cst_134 [1, 2] : vector<1x8x4xf32> to vector<1xf32>
    %306 = vector.shape_cast %305 : vector<1xf32> to vector<1x1x1xf32>
    %307 = vector.extract %306[0, 0, 0] : f32 from vector<1x1x1xf32>
    %308 = vector.broadcast %307 : f32 to vector<8x4xf32>
    %309 = arith.subf %303, %308 : vector<8x4xf32>
    %310 = math.exp %309 : vector<8x4xf32>
    %311 = vector.shape_cast %310 : vector<8x4xf32> to vector<1x8x4xf32>
    %cst_135 = arith.constant dense<0.000000e+00> : vector<1xf32>
    %312 = vector.multi_reduction <add>, %311, %cst_135 [1, 2] : vector<1x8x4xf32> to vector<1xf32>
    %313 = vector.shape_cast %312 : vector<1xf32> to vector<1x1x1xf32>
    %314 = vector.extract %313[0, 0, 0] : f32 from vector<1x1x1xf32>
    %315 = vector.broadcast %314 : f32 to vector<1x1xf32>
    %316 = tpu.reciprocal %315 {approx = true} : vector<1x1xf32> -> vector<1x1xf32>
    %317 = vector.broadcast %316 : vector<1x1xf32> to vector<8x4xf32>
    %318 = arith.mulf %310, %317 : vector<8x4xf32>
    %c0_136 = arith.constant 0 : index
    %319 = memref.load %arg14[%c0_136] : memref<2xf32, #tpu.memory_space<smem>>
    %cst_137 = arith.constant 1.000000e+00 : f32
    %320 = arith.addf %cst_137, %319 : f32
    %321 = vector.broadcast %320 : f32 to vector<8x4xf32>
    %322 = arith.mulf %318, %321 : vector<8x4xf32>
    %c1_138 = arith.constant 1 : index
    %323 = memref.load %arg14[%c1_138] : memref<2xf32, #tpu.memory_space<smem>>
    %324 = vector.broadcast %323 : f32 to vector<8x4xf32>
    %325 = arith.addf %322, %324 : vector<8x4xf32>
    %cst_139 = arith.constant 0.000000e+00 : f32
    %326 = vector.broadcast %cst_139 : f32 to vector<8x4xf32>
    %327 = arith.maximumf %325, %326 : vector<8x4xf32>
    %c0_140 = arith.constant 0 : index
    %c0_141 = arith.constant 0 : index
    %328 = vector.load %arg15[%c0_140, %c0_141] : memref<4x4xf32, #tpu.memory_space<vmem>>, vector<4x4xf32>
    %cst_142 = arith.constant dense<0.000000e+00> : vector<4x8xf32>
    %329 = tpu.matmul %328, %327, %cst_142 {dimension_numbers = #tpu.dot_dimension_numbers<[1], [1], [0], [0], [0, 0, 1, 0], [], []>} : vector<4x4xf32>, vector<8x4xf32>, vector<4x8xf32> -> vector<4x8xf32>
    %c0_143 = arith.constant 0 : index
    %c0_144 = arith.constant 0 : index
    %330 = vector.load %arg16[%c0_143, %c0_144] : memref<4x1xf32, #tpu.memory_space<vmem>>, vector<4x1xf32>
    %331 = vector.broadcast %330 : vector<4x1xf32> to vector<4x8xf32>
    %332 = arith.addf %329, %331 : vector<4x8xf32>
    %cst_145 = arith.constant dense<0.000000e+00> : vector<64x4xf32>
    %333 = tpu.matmul %301, %332, %cst_145 {dimension_numbers = #tpu.dot_dimension_numbers<[0], [1], [1], [0], [0, 1, 1, 0], [], []>} : vector<8x64xf32>, vector<4x8xf32>, vector<64x4xf32> -> vector<64x4xf32>
    %c0_146 = arith.constant 0 : index
    %c0_147 = arith.constant 0 : index
    %334 = vector.load %arg21[%c0_146, %c0_147] : memref<64x4xf32, #tpu.memory_space<vmem>>, vector<64x4xf32>
    tpu.vector_store %arg21[%c0_146, %c0_147], %333 {strides = array<i32>} : memref<64x4xf32, #tpu.memory_space<vmem>>, vector<64x4xf32>,
    %c0_148 = arith.constant 0 : index
    %c0_149 = arith.constant 0 : index
    %335 = tpu.strided_load %arg21[%c0_148, %c0_149] {strides = array<i32: 16, 1>} : memref<64x4xf32, #tpu.memory_space<vmem>>, vector<4x4xf32>
    %c1_150 = arith.constant 1 : index
    %c0_151 = arith.constant 0 : index
    %336 = tpu.strided_load %arg21[%c1_150, %c0_151] {strides = array<i32: 16, 1>} : memref<64x4xf32, #tpu.memory_space<vmem>>, vector<4x4xf32>
    %c2_152 = arith.constant 2 : index
    %c0_153 = arith.constant 0 : index
    %337 = tpu.strided_load %arg21[%c2_152, %c0_153] {strides = array<i32: 16, 1>} : memref<64x4xf32, #tpu.memory_space<vmem>>, vector<4x4xf32>
    %c3_154 = arith.constant 3 : index
    %c0_155 = arith.constant 0 : index
    %338 = tpu.strided_load %arg21[%c3_154, %c0_155] {strides = array<i32: 16, 1>} : memref<64x4xf32, #tpu.memory_space<vmem>>, vector<4x4xf32>
    %c4_156 = arith.constant 4 : index
    %c0_157 = arith.constant 0 : index
    %339 = tpu.strided_load %arg21[%c4_156, %c0_157] {strides = array<i32: 16, 1>} : memref<64x4xf32, #tpu.memory_space<vmem>>, vector<4x4xf32>
    %c5_158 = arith.constant 5 : index
    %c0_159 = arith.constant 0 : index
    %340 = tpu.strided_load %arg21[%c5_158, %c0_159] {strides = array<i32: 16, 1>} : memref<64x4xf32, #tpu.memory_space<vmem>>, vector<4x4xf32>
    %c6_160 = arith.constant 6 : index
    %c0_161 = arith.constant 0 : index
    %341 = tpu.strided_load %arg21[%c6_160, %c0_161] {strides = array<i32: 16, 1>} : memref<64x4xf32, #tpu.memory_space<vmem>>, vector<4x4xf32>
    %c7_162 = arith.constant 7 : index
    %c0_163 = arith.constant 0 : index
    %342 = tpu.strided_load %arg21[%c7_162, %c0_163] {strides = array<i32: 16, 1>} : memref<64x4xf32, #tpu.memory_space<vmem>>, vector<4x4xf32>
    %c8_164 = arith.constant 8 : index
    %c0_165 = arith.constant 0 : index
    %343 = tpu.strided_load %arg21[%c8_164, %c0_165] {strides = array<i32: 16, 1>} : memref<64x4xf32, #tpu.memory_space<vmem>>, vector<4x4xf32>
    %c9 = arith.constant 9 : index
    %c0_166 = arith.constant 0 : index
    %344 = tpu.strided_load %arg21[%c9, %c0_166] {strides = array<i32: 16, 1>} : memref<64x4xf32, #tpu.memory_space<vmem>>, vector<4x4xf32>
    %c10 = arith.constant 10 : index
    %c0_167 = arith.constant 0 : index
    %345 = tpu.strided_load %arg21[%c10, %c0_167] {strides = array<i32: 16, 1>} : memref<64x4xf32, #tpu.memory_space<vmem>>, vector<4x4xf32>
    %c11 = arith.constant 11 : index
    %c0_168 = arith.constant 0 : index
    %346 = tpu.strided_load %arg21[%c11, %c0_168] {strides = array<i32: 16, 1>} : memref<64x4xf32, #tpu.memory_space<vmem>>, vector<4x4xf32>
    %c12 = arith.constant 12 : index
    %c0_169 = arith.constant 0 : index
    %347 = tpu.strided_load %arg21[%c12, %c0_169] {strides = array<i32: 16, 1>} : memref<64x4xf32, #tpu.memory_space<vmem>>, vector<4x4xf32>
    %c13 = arith.constant 13 : index
    %c0_170 = arith.constant 0 : index
    %348 = tpu.strided_load %arg21[%c13, %c0_170] {strides = array<i32: 16, 1>} : memref<64x4xf32, #tpu.memory_space<vmem>>, vector<4x4xf32>
    %c14 = arith.constant 14 : index
    %c0_171 = arith.constant 0 : index
    %349 = tpu.strided_load %arg21[%c14, %c0_171] {strides = array<i32: 16, 1>} : memref<64x4xf32, #tpu.memory_space<vmem>>, vector<4x4xf32>
    %c15 = arith.constant 15 : index
    %c0_172 = arith.constant 0 : index
    %350 = tpu.strided_load %arg21[%c15, %c0_172] {strides = array<i32: 16, 1>} : memref<64x4xf32, #tpu.memory_space<vmem>>, vector<4x4xf32>
    %351 = tpu.concatenate %335, %336, %337, %338, %339, %340, %341, %342, %343, %344, %345, %346, %347, %348, %349, %350 in 1 : vector<4x4xf32>, vector<4x4xf32>, vector<4x4xf32>, vector<4x4xf32>, vector<4x4xf32>, vector<4x4xf32>, vector<4x4xf32>, vector<4x4xf32>, vector<4x4xf32>, vector<4x4xf32>, vector<4x4xf32>, vector<4x4xf32>, vector<4x4xf32>, vector<4x4xf32>, vector<4x4xf32>, vector<4x4xf32> -> vector<4x64xf32>
    %c0_173 = arith.constant 0 : index
    %c0_174 = arith.constant 0 : index
    %352 = vector.load %arg17[%c0_173, %c0_174] : memref<16x4xf32, #tpu.memory_space<vmem>>, vector<16x4xf32>
    %cst_175 = arith.constant dense<0.000000e+00> : vector<16x64xf32>
    %353 = tpu.matmul %352, %351, %cst_175 {dimension_numbers = #tpu.dot_dimension_numbers<[1], [0], [0], [1], [0, 0, 1, 1], [], []>} : vector<16x4xf32>, vector<4x64xf32>, vector<16x64xf32> -> vector<16x64xf32>
    %c0_176 = arith.constant 0 : index
    %c0_177 = arith.constant 0 : index
    %354 = vector.load %arg18[%c0_176, %c0_177] : memref<16x1xf32, #tpu.memory_space<vmem>>, vector<16x1xf32>
    %355 = vector.broadcast %354 : vector<16x1xf32> to vector<16x64xf32>
    %356 = arith.addf %353, %355 : vector<16x64xf32>
    %357 = arith.addf %356, %295 : vector<16x64xf32>
    %358 = arith.addf %357, %1 : vector<16x64xf32>
    %c0_178 = arith.constant 0 : index
    %c0_179 = arith.constant 0 : index
    %c0_180 = arith.constant 0 : index
    %359 = vector.load %arg19[%c0_178, %c0_179, %c0_180] : memref<1x16x64xf32, #tpu.memory_space<vmem>>, vector<1x16x64xf32>
    %360 = vector.shape_cast %359 : vector<1x16x64xf32> to vector<16x64xf32>
    %361 = vector.shape_cast %358 : vector<16x64xf32> to vector<1x16x64xf32>
    tpu.vector_store %arg19[%c0_178, %c0_179, %c0_180], %361 {strides = array<i32>} : memref<1x16x64xf32, #tpu.memory_space<vmem>>, vector<1x16x64xf32>,
    return
  }
  func.func @transform_0(%arg0: i32) -> (i32, i32, i32) {
    %c0_i32 = arith.constant 0 : i32
    %c0_i32_0 = arith.constant 0 : i32
    %c0_i32_1 = arith.constant 0 : i32
    return %arg0, %c0_i32, %c0_i32_0 : i32, i32, i32
  }
  func.func @transform_1(%arg0: i32) -> (i32, i32) {
    %c0_i32 = arith.constant 0 : i32
    %c0_i32_0 = arith.constant 0 : i32
    %c0_i32_1 = arith.constant 0 : i32
    return %c0_i32, %c0_i32_0 : i32, i32
  }
  func.func @transform_2(%arg0: i32) -> (i32, i32) {
    %c0_i32 = arith.constant 0 : i32
    %c0_i32_0 = arith.constant 0 : i32
    %c0_i32_1 = arith.constant 0 : i32
    return %c0_i32, %c0_i32_0 : i32, i32
  }
  func.func @transform_3(%arg0: i32) -> (i32, i32) {
    %c0_i32 = arith.constant 0 : i32
    %c0_i32_0 = arith.constant 0 : i32
    %c0_i32_1 = arith.constant 0 : i32
    return %c0_i32, %c0_i32_0 : i32, i32
  }
  func.func @transform_4(%arg0: i32) -> (i32, i32) {
    %c0_i32 = arith.constant 0 : i32
    %c0_i32_0 = arith.constant 0 : i32
    %c0_i32_1 = arith.constant 0 : i32
    return %c0_i32, %c0_i32_0 : i32, i32
  }
  func.func @transform_5(%arg0: i32) -> (i32, i32) {
    %c0_i32 = arith.constant 0 : i32
    %c0_i32_0 = arith.constant 0 : i32
    %c0_i32_1 = arith.constant 0 : i32
    return %c0_i32, %c0_i32_0 : i32, i32
  }
  func.func @transform_6(%arg0: i32) -> (i32, i32) {
    %c0_i32 = arith.constant 0 : i32
    %c0_i32_0 = arith.constant 0 : i32
    %c0_i32_1 = arith.constant 0 : i32
    return %c0_i32, %c0_i32_0 : i32, i32
  }
  func.func @transform_7(%arg0: i32) -> (i32, i32, i32) {
    %c0_i32 = arith.constant 0 : i32
    %c0_i32_0 = arith.constant 0 : i32
    %c0_i32_1 = arith.constant 0 : i32
    %c0_i32_2 = arith.constant 0 : i32
    return %c0_i32, %c0_i32_0, %c0_i32_1 : i32, i32, i32
  }
  func.func @transform_8(%arg0: i32) -> (i32, i32, i32) {
    %c0_i32 = arith.constant 0 : i32
    %c0_i32_0 = arith.constant 0 : i32
    %c0_i32_1 = arith.constant 0 : i32
    %c0_i32_2 = arith.constant 0 : i32
    return %c0_i32, %c0_i32_0, %c0_i32_1 : i32, i32, i32
  }
  func.func @transform_9(%arg0: i32) -> (i32, i32) {
    %c0_i32 = arith.constant 0 : i32
    %c0_i32_0 = arith.constant 0 : i32
    %c0_i32_1 = arith.constant 0 : i32
    return %c0_i32, %c0_i32_0 : i32, i32
  }
  func.func @transform_10(%arg0: i32) -> (i32, i32) {
    %c0_i32 = arith.constant 0 : i32
    %c0_i32_0 = arith.constant 0 : i32
    %c0_i32_1 = arith.constant 0 : i32
    return %c0_i32, %c0_i32_0 : i32, i32
  }
  func.func @transform_11(%arg0: i32) -> (i32, i32) {
    %c0_i32 = arith.constant 0 : i32
    %c0_i32_0 = arith.constant 0 : i32
    %c0_i32_1 = arith.constant 0 : i32
    return %c0_i32, %c0_i32_0 : i32, i32
  }
  func.func @transform_12(%arg0: i32) -> (i32, i32) {
    %c0_i32 = arith.constant 0 : i32
    %c0_i32_0 = arith.constant 0 : i32
    %c0_i32_1 = arith.constant 0 : i32
    return %c0_i32, %c0_i32_0 : i32, i32
  }
  func.func @transform_13(%arg0: i32) -> i32 {
    %c0_i32 = arith.constant 0 : i32
    %c0_i32_0 = arith.constant 0 : i32
    return %c0_i32 : i32
  }
  func.func @transform_14(%arg0: i32) -> (i32, i32) {
    %c0_i32 = arith.constant 0 : i32
    %c0_i32_0 = arith.constant 0 : i32
    %c0_i32_1 = arith.constant 0 : i32
    return %c0_i32, %c0_i32_0 : i32, i32
  }
  func.func @transform_15(%arg0: i32) -> (i32, i32) {
    %c0_i32 = arith.constant 0 : i32
    %c0_i32_0 = arith.constant 0 : i32
    %c0_i32_1 = arith.constant 0 : i32
    return %c0_i32, %c0_i32_0 : i32, i32
  }
  func.func @transform_16(%arg0: i32) -> (i32, i32) {
    %c0_i32 = arith.constant 0 : i32
    %c0_i32_0 = arith.constant 0 : i32
    %c0_i32_1 = arith.constant 0 : i32
    return %c0_i32, %c0_i32_0 : i32, i32
  }
  func.func @transform_17(%arg0: i32) -> (i32, i32) {
    %c0_i32 = arith.constant 0 : i32
    %c0_i32_0 = arith.constant 0 : i32
    %c0_i32_1 = arith.constant 0 : i32
    return %c0_i32, %c0_i32_0 : i32, i32
  }
  func.func @transform_18(%arg0: i32) -> (i32, i32, i32) {
    %c0_i32 = arith.constant 0 : i32
    %c0_i32_0 = arith.constant 0 : i32
    %c0_i32_1 = arith.constant 0 : i32
    return %arg0, %c0_i32, %c0_i32_0 : i32, i32, i32
  }
}

</mosaic_0001>

<llo_original>
// kernel: basic_unit_pallas.1
$region0: #{basic_unit_pallas.1}
  #allocation0 [shape = 'u32[]', space=smem, size = 0x4, offset = 0x4, fixed_abs, tag = 'smem constant byte address 0x4 - core index']
  #allocation1 [shape = 'u32[144,128]{1,0:T(1,128)}', space=vmem, size = 0x12000, scoped, tag = 'internal scratch']
  #allocation2 [shape = 'f32[64,8]{1,0:T(8,128)}', space=vmem, size = 0x8000, scoped, tag = 'scratch operand']
  #allocation3 [shape = 'f32[64,4]{1,0:T(8,128)}', space=vmem, size = 0x8000, scoped, tag = 'scratch operand']
  %s0 = inlined_call_operand.vmem [shape: f32[2,16,64], index: 0, kind: input, shape index: {}]
  %s1 = inlined_call_operand.vmem [shape: f32[24,16], index: 1, kind: input, shape index: {}]
  %s2 = inlined_call_operand.vmem [shape: f32[24,1], index: 2, kind: input, shape index: {}]
  %s3 = inlined_call_operand.vmem [shape: f32[16,8], index: 3, kind: input, shape index: {}]
  %s4 = inlined_call_operand.vmem [shape: f32[16,1], index: 4, kind: input, shape index: {}]
  %s5 = inlined_call_operand.vmem [shape: f32[9,64], index: 5, kind: input, shape index: {}]
  %s6 = inlined_call_operand.vmem [shape: f32[9,64], index: 6, kind: input, shape index: {}]
  %s7 = inlined_call_operand.vmem [shape: f32[4,16,144], index: 7, kind: input, shape index: {}]
  %s8 = inlined_call_operand.vmem [shape: f32[4,16,1], index: 8, kind: input, shape index: {}]
  %s9 = inlined_call_operand.vmem [shape: f32[16,80], index: 9, kind: input, shape index: {}]
  %s10 = inlined_call_operand.vmem [shape: f32[16,1], index: 10, kind: input, shape index: {}]
  %s11 = inlined_call_operand.vmem [shape: f32[12,16], index: 11, kind: input, shape index: {}]
  %s12 = inlined_call_operand.vmem [shape: f32[12,1], index: 12, kind: input, shape index: {}]
  %s13 = inlined_call_operand.vmem [shape: f32[2], index: 13, kind: input, shape index: {}]
  %s14 = inlined_call_operand.vmem [shape: f32[4,4], index: 14, kind: input, shape index: {}]
  %s15 = inlined_call_operand.vmem [shape: f32[4,1], index: 15, kind: input, shape index: {}]
  %s16 = inlined_call_operand.vmem [shape: f32[16,4], index: 16, kind: input, shape index: {}]
  %s17 = inlined_call_operand.vmem [shape: f32[16,1], index: 17, kind: input, shape index: {}]
  %s18 = inlined_call_operand.vmem [shape: f32[2,16,64], index: 18, kind: output, shape index: {}]
  %s19 = sld [smem:[#allocation0]]
  $region109: #{basic_unit_pallas.1} parent=0
    _
  %s21 = ssub.s32 1, %s19
  %s22 = scalar_select 0, %s21, %s19
  $region1: #{basic_unit_pallas.1} parent=0
    #allocation4 [shape = 'u8[512]{0}', space=smem, size = 0x200, scoped, tag = 'input window, operand 13, single buffered']
    #allocation5 [shape = 's32[2]{0}', space=sflag, size = 0x8, scoped, tag = 'scoped memory for basic_unit_pallas.1']
    %23 = vsyncpa [#allocation5], 0
    loop: start=0, step=1, limit=4
    $region2: #{basic_unit_pallas.1} parent=1 // loop_pre_header
      _
    $region3: #{basic_unit_pallas.1} parent=1 // loop_header
      %s25 = sphi 0, %s29
      %p26 = scmp.ge.s32.totalorder %s25, 4
      %s35 = sphi 0, %s37
      %s38 = sphi 0, %s35
      %s39 = sphi 0, %s38
      %s55 = sphi 0, %s39
      %s59 = sphi 0, %s59
      %s61 = sphi 0, %s59
      %s62 = sphi 0, %s61
      %s76 = sphi 0, %s62
      %s80 = sphi 0, %s80
      %s82 = sphi 0, %s80
      %s83 = sphi 0, %s82
      %s97 = sphi 0, %s83
      %s101 = sphi 0, %s101
      %s103 = sphi 0, %s101
      %s104 = sphi 0, %s103
      %s118 = sphi 0, %s104
      %s122 = sphi 0, %s122
      %s124 = sphi 0, %s122
      %s125 = sphi 0, %s124
      %s139 = sphi 0, %s125
      %s143 = sphi 0, %s143
      %s145 = sphi 0, %s143
      %s146 = sphi 0, %s145
      %s160 = sphi 0, %s146
      %s164 = sphi 0, %s164
      %s166 = sphi 0, %s164
      %s167 = sphi 0, %s166
      %s181 = sphi 0, %s167
      %s185 = sphi 0, %s185
      %s187 = sphi 0, %s185
      %s188 = sphi 0, %s187
      %s202 = sphi 0, %s188
      %s206 = sphi 0, %s206
      %s208 = sphi 0, %s206
      %s209 = sphi 0, %s208
      %s223 = sphi 0, %s209
      %s227 = sphi 0, %s227
      %s229 = sphi 0, %s227
      %s230 = sphi 0, %s229
      %s244 = sphi 0, %s230
      %s248 = sphi 0, %s248
      %s250 = sphi 0, %s248
      %s251 = sphi 0, %s250
      %s265 = sphi 0, %s251
      %s269 = sphi 0, %s269
      %s271 = sphi 0, %s269
      %s272 = sphi 0, %s271
      %s286 = sphi 0, %s272
      %s290 = sphi 0, %s290
      %s292 = sphi 0, %s290
      %s293 = sphi 0, %s292
      %s307 = sphi 0, %s293
      %s311 = sphi 0, %s311
      %s313 = sphi 0, %s311
      %s314 = sphi 0, %s313
      %s328 = sphi 0, %s314
      %s332 = sphi 0, %s332
      %s334 = sphi 0, %s332
      %s335 = sphi 0, %s334
      %s349 = sphi 0, %s335
      %s353 = sphi 0, %s353
      %s355 = sphi 0, %s353
      %s356 = sphi 0, %s355
      %s370 = sphi 0, %s356
      %s374 = sphi 0, %s374
      %s376 = sphi 0, %s374
      %s377 = sphi 0, %s376
      %s391 = sphi 0, %s377
      %s395 = sphi 0, %s395
      %s397 = sphi 0, %s395
      %s398 = sphi 0, %s397
      %s412 = sphi 0, %s398
      %s418 = sphi 0, %s420
      %s421 = sphi 0, %s418
      %s422 = sphi 0, %s421
      %s438 = sphi 0, %s422
    $region4: #{basic_unit_pallas.1} parent=1 // loop_header_branch
      %28 = sbr.rel (%p26) target = $region8
    $region5: #{basic_unit_pallas.1} parent=1 // loop_body
      %s30 = ssub.s32 %s25, 1
      %s31 = ssub.s32 %s25, 2
      %s32 = sadd.s32 %s25, 1
      %s33 = ssub.s32 %s25, %s32
      %p34 = scmp.eq.s32.totalorder %s33, 0
      %s36 = sadd.s32 %s35, 1
      %s37 = scalar_select %p34, %s35, %s36
      %p40 = pneg %p34
      %p41 = scmp.eq.s32.totalorder %s25, 1
      %p42 = por %p40, %p41
      %p43 = scmp.ne.s32.totalorder %s35, %s38
      %p44 = scmp.eq.s32.totalorder %s25, 0
      %p45 = por %p43, %p44
      %p46 = scmp.ne.s32.totalorder %s35, %s38
      %p47 = scmp.eq.s32.totalorder %s30, 1
      %p48 = por %p46, %p47
      %p49 = scmp.ne.s32.totalorder %s38, %s39
      %p50 = scmp.eq.s32.totalorder %s30, 0
      %p51 = por %p49, %p50
      %p52 = scmp.ne.s32.totalorder %s38, %s39
      %p53 = scmp.eq.s32.totalorder %s31, 1
      %p54 = por %p52, %p53
      %p56 = scmp.ne.s32.totalorder %s39, %s55
      %p57 = scmp.eq.s32.totalorder %s31, 0
      %p58 = por %p56, %p57
      %s60 = sadd.s32 %s59, 1
      %p63 = scmp.eq.s32.totalorder %s25, 1
      %p64 = scmp.ne.s32.totalorder %s59, %s61
      %p65 = scmp.eq.s32.totalorder %s25, 0
      %p66 = por %p64, %p65
      %p67 = scmp.ne.s32.totalorder %s59, %s61
      %p68 = scmp.eq.s32.totalorder %s30, 1
      %p69 = por %p67, %p68
      %p70 = scmp.ne.s32.totalorder %s61, %s62
      %p71 = scmp.eq.s32.totalorder %s30, 0
      %p72 = por %p70, %p71
      %p73 = scmp.ne.s32.totalorder %s61, %s62
      %p74 = scmp.eq.s32.totalorder %s31, 1
      %p75 = por %p73, %p74
      %p77 = scmp.ne.s32.totalorder %s62, %s76
      %p78 = scmp.eq.s32.totalorder %s31, 0
      %p79 = por %p77, %p78
      %s81 = sadd.s32 %s80, 1
      %p84 = scmp.eq.s32.totalorder %s25, 1
      %p85 = scmp.ne.s32.totalorder %s80, %s82
      %p86 = scmp.eq.s32.totalorder %s25, 0
      %p87 = por %p85, %p86
      %p88 = scmp.ne.s32.totalorder %s80, %s82
      %p89 = scmp.eq.s32.totalorder %s30, 1
      %p90 = por %p88, %p89
      %p91 = scmp.ne.s32.totalorder %s82, %s83
      %p92 = scmp.eq.s32.totalorder %s30, 0
      %p93 = por %p91, %p92
      %p94 = scmp.ne.s32.totalorder %s82, %s83
      %p95 = scmp.eq.s32.totalorder %s31, 1
      %p96 = por %p94, %p95
      %p98 = scmp.ne.s32.totalorder %s83, %s97
      %p99 = scmp.eq.s32.totalorder %s31, 0
      %p100 = por %p98, %p99
      %s102 = sadd.s32 %s101, 1
      %p105 = scmp.eq.s32.totalorder %s25, 1
      %p106 = scmp.ne.s32.totalorder %s101, %s103
      %p107 = scmp.eq.s32.totalorder %s25, 0
      %p108 = por %p106, %p107
      %p109 = scmp.ne.s32.totalorder %s101, %s103
      %p110 = scmp.eq.s32.totalorder %s30, 1
      %p111 = por %p109, %p110
      %p112 = scmp.ne.s32.totalorder %s103, %s104
      %p113 = scmp.eq.s32.totalorder %s30, 0
      %p114 = por %p112, %p113
      %p115 = scmp.ne.s32.totalorder %s103, %s104
      %p116 = scmp.eq.s32.totalorder %s31, 1
      %p117 = por %p115, %p116
      %p119 = scmp.ne.s32.totalorder %s104, %s118
      %p120 = scmp.eq.s32.totalorder %s31, 0
      %p121 = por %p119, %p120
      %s123 = sadd.s32 %s122, 1
      %p126 = scmp.eq.s32.totalorder %s25, 1
      %p127 = scmp.ne.s32.totalorder %s122, %s124
      %p128 = scmp.eq.s32.totalorder %s25, 0
      %p129 = por %p127, %p128
      %p130 = scmp.ne.s32.totalorder %s122, %s124
      %p131 = scmp.eq.s32.totalorder %s30, 1
      %p132 = por %p130, %p131
      %p133 = scmp.ne.s32.totalorder %s124, %s125
      %p134 = scmp.eq.s32.totalorder %s30, 0
      %p135 = por %p133, %p134
      %p136 = scmp.ne.s32.totalorder %s124, %s125
      %p137 = scmp.eq.s32.totalorder %s31, 1
      %p138 = por %p136, %p137
      %p140 = scmp.ne.s32.totalorder %s125, %s139
      %p141 = scmp.eq.s32.totalorder %s31, 0
      %p142 = por %p140, %p141
      %s144 = sadd.s32 %s143, 1
      %p147 = scmp.eq.s32.totalorder %s25, 1
      %p148 = scmp.ne.s32.totalorder %s143, %s145
      %p149 = scmp.eq.s32.totalorder %s25, 0
      %p150 = por %p148, %p149
      %p151 = scmp.ne.s32.totalorder %s143, %s145
      %p152 = scmp.eq.s32.totalorder %s30, 1
      %p153 = por %p151, %p152
      %p154 = scmp.ne.s32.totalorder %s145, %s146
      %p155 = scmp.eq.s32.totalorder %s30, 0
      %p156 = por %p154, %p155
      %p157 = scmp.ne.s32.totalorder %s145, %s146
      %p158 = scmp.eq.s32.totalorder %s31, 1
      %p159 = por %p157, %p158
      %p161 = scmp.ne.s32.totalorder %s146, %s160
      %p162 = scmp.eq.s32.totalorder %s31, 0
      %p163 = por %p161, %p162
      %s165 = sadd.s32 %s164, 1
      %p168 = scmp.eq.s32.totalorder %s25, 1
      %p169 = scmp.ne.s32.totalorder %s164, %s166
      %p170 = scmp.eq.s32.totalorder %s25, 0
      %p171 = por %p169, %p170
      %p172 = scmp.ne.s32.totalorder %s164, %s166
      %p173 = scmp.eq.s32.totalorder %s30, 1
      %p174 = por %p172, %p173
      %p175 = scmp.ne.s32.totalorder %s166, %s167
      %p176 = scmp.eq.s32.totalorder %s30, 0
      %p177 = por %p175, %p176
      %p178 = scmp.ne.s32.totalorder %s166, %s167
      %p179 = scmp.eq.s32.totalorder %s31, 1
      %p180 = por %p178, %p179
      %p182 = scmp.ne.s32.totalorder %s167, %s181
      %p183 = scmp.eq.s32.totalorder %s31, 0
      %p184 = por %p182, %p183
      %s186 = sadd.s32 %s185, 1
      %p189 = scmp.eq.s32.totalorder %s25, 1
      %p190 = scmp.ne.s32.totalorder %s185, %s187
      %p191 = scmp.eq.s32.totalorder %s25, 0
      %p192 = por %p190, %p191
      %p193 = scmp.ne.s32.totalorder %s185, %s187
      %p194 = scmp.eq.s32.totalorder %s30, 1
      %p195 = por %p193, %p194
      %p196 = scmp.ne.s32.totalorder %s187, %s188
      %p197 = scmp.eq.s32.totalorder %s30, 0
      %p198 = por %p196, %p197
      %p199 = scmp.ne.s32.totalorder %s187, %s188
      %p200 = scmp.eq.s32.totalorder %s31, 1
      %p201 = por %p199, %p200
      %p203 = scmp.ne.s32.totalorder %s188, %s202
      %p204 = scmp.eq.s32.totalorder %s31, 0
      %p205 = por %p203, %p204
      %s207 = sadd.s32 %s206, 1
      %p210 = scmp.eq.s32.totalorder %s25, 1
      %p211 = scmp.ne.s32.totalorder %s206, %s208
      %p212 = scmp.eq.s32.totalorder %s25, 0
      %p213 = por %p211, %p212
      %p214 = scmp.ne.s32.totalorder %s206, %s208
      %p215 = scmp.eq.s32.totalorder %s30, 1
      %p216 = por %p214, %p215
      %p217 = scmp.ne.s32.totalorder %s208, %s209
      %p218 = scmp.eq.s32.totalorder %s30, 0
      %p219 = por %p217, %p218
      %p220 = scmp.ne.s32.totalorder %s208, %s209
      %p221 = scmp.eq.s32.totalorder %s31, 1
      %p222 = por %p220, %p221
      %p224 = scmp.ne.s32.totalorder %s209, %s223
      %p225 = scmp.eq.s32.totalorder %s31, 0
      %p226 = por %p224, %p225
      %s228 = sadd.s32 %s227, 1
      %p231 = scmp.eq.s32.totalorder %s25, 1
      %p232 = scmp.ne.s32.totalorder %s227, %s229
      %p233 = scmp.eq.s32.totalorder %s25, 0
      %p234 = por %p232, %p233
      %p235 = scmp.ne.s32.totalorder %s227, %s229
      %p236 = scmp.eq.s32.totalorder %s30, 1
      %p237 = por %p235, %p236
      %p238 = scmp.ne.s32.totalorder %s229, %s230
      %p239 = scmp.eq.s32.totalorder %s30, 0
      %p240 = por %p238, %p239
      %p241 = scmp.ne.s32.totalorder %s229, %s230
      %p242 = scmp.eq.s32.totalorder %s31, 1
      %p243 = por %p241, %p242
      %p245 = scmp.ne.s32.totalorder %s230, %s244
      %p246 = scmp.eq.s32.totalorder %s31, 0
      %p247 = por %p245, %p246
      %s249 = sadd.s32 %s248, 1
      %p252 = scmp.eq.s32.totalorder %s25, 1
      %p253 = scmp.ne.s32.totalorder %s248, %s250
      %p254 = scmp.eq.s32.totalorder %s25, 0
      %p255 = por %p253, %p254
      %p256 = scmp.ne.s32.totalorder %s248, %s250
      %p257 = scmp.eq.s32.totalorder %s30, 1
      %p258 = por %p256, %p257
      %p259 = scmp.ne.s32.totalorder %s250, %s251
      %p260 = scmp.eq.s32.totalorder %s30, 0
      %p261 = por %p259, %p260
      %p262 = scmp.ne.s32.totalorder %s250, %s251
      %p263 = scmp.eq.s32.totalorder %s31, 1
      %p264 = por %p262, %p263
      %p266 = scmp.ne.s32.totalorder %s251, %s265
      %p267 = scmp.eq.s32.totalorder %s31, 0
      %p268 = por %p266, %p267
      %s270 = sadd.s32 %s269, 1
      %p273 = scmp.eq.s32.totalorder %s25, 1
      %p274 = scmp.ne.s32.totalorder %s269, %s271
      %p275 = scmp.eq.s32.totalorder %s25, 0
      %p276 = por %p274, %p275
      %p277 = scmp.ne.s32.totalorder %s269, %s271
      %p278 = scmp.eq.s32.totalorder %s30, 1
      %p279 = por %p277, %p278
      %p280 = scmp.ne.s32.totalorder %s271, %s272
      %p281 = scmp.eq.s32.totalorder %s30, 0
      %p282 = por %p280, %p281
      %p283 = scmp.ne.s32.totalorder %s271, %s272
      %p284 = scmp.eq.s32.totalorder %s31, 1
      %p285 = por %p283, %p284
      %p287 = scmp.ne.s32.totalorder %s272, %s286
      %p288 = scmp.eq.s32.totalorder %s31, 0
      %p289 = por %p287, %p288
      %s291 = sadd.s32 %s290, 1
      %p294 = scmp.eq.s32.totalorder %s25, 1
      %p295 = scmp.ne.s32.totalorder %s290, %s292
      %p296 = scmp.eq.s32.totalorder %s25, 0
      %p297 = por %p295, %p296
      %p298 = scmp.ne.s32.totalorder %s290, %s292
      %p299 = scmp.eq.s32.totalorder %s30, 1
      %p300 = por %p298, %p299
      %p301 = scmp.ne.s32.totalorder %s292, %s293
      %p302 = scmp.eq.s32.totalorder %s30, 0
      %p303 = por %p301, %p302
      %p304 = scmp.ne.s32.totalorder %s292, %s293
      %p305 = scmp.eq.s32.totalorder %s31, 1
      %p306 = por %p304, %p305
      %p308 = scmp.ne.s32.totalorder %s293, %s307
      %p309 = scmp.eq.s32.totalorder %s31, 0
      %p310 = por %p308, %p309
      %s312 = sadd.s32 %s311, 1
      %p315 = scmp.eq.s32.totalorder %s25, 1
      %p316 = scmp.ne.s32.totalorder %s311, %s313
      %p317 = scmp.eq.s32.totalorder %s25, 0
      %p318 = por %p316, %p317
      %p319 = scmp.ne.s32.totalorder %s311, %s313
      %p320 = scmp.eq.s32.totalorder %s30, 1
      %p321 = por %p319, %p320
      %p322 = scmp.ne.s32.totalorder %s313, %s314
      %p323 = scmp.eq.s32.totalorder %s30, 0
      %p324 = por %p322, %p323
      %p325 = scmp.ne.s32.totalorder %s313, %s314
      %p326 = scmp.eq.s32.totalorder %s31, 1
      %p327 = por %p325, %p326
      %p329 = scmp.ne.s32.totalorder %s314, %s328
      %p330 = scmp.eq.s32.totalorder %s31, 0
      %p331 = por %p329, %p330
      %s333 = sadd.s32 %s332, 1
      %p336 = scmp.eq.s32.totalorder %s25, 1
      %p337 = scmp.ne.s32.totalorder %s332, %s334
      %p338 = scmp.eq.s32.totalorder %s25, 0
      %p339 = por %p337, %p338
      %p340 = scmp.ne.s32.totalorder %s332, %s334
      %p341 = scmp.eq.s32.totalorder %s30, 1
      %p342 = por %p340, %p341
      %p343 = scmp.ne.s32.totalorder %s334, %s335
      %p344 = scmp.eq.s32.totalorder %s30, 0
      %p345 = por %p343, %p344
      %p346 = scmp.ne.s32.totalorder %s334, %s335
      %p347 = scmp.eq.s32.totalorder %s31, 1
      %p348 = por %p346, %p347
      %p350 = scmp.ne.s32.totalorder %s335, %s349
      %p351 = scmp.eq.s32.totalorder %s31, 0
      %p352 = por %p350, %p351
      %s354 = sadd.s32 %s353, 1
      %p357 = scmp.eq.s32.totalorder %s25, 1
      %p358 = scmp.ne.s32.totalorder %s353, %s355
      %p359 = scmp.eq.s32.totalorder %s25, 0
      %p360 = por %p358, %p359
      %p361 = scmp.ne.s32.totalorder %s353, %s355
      %p362 = scmp.eq.s32.totalorder %s30, 1
      %p363 = por %p361, %p362
      %p364 = scmp.ne.s32.totalorder %s355, %s356
      %p365 = scmp.eq.s32.totalorder %s30, 0
      %p366 = por %p364, %p365
      %p367 = scmp.ne.s32.totalorder %s355, %s356
      %p368 = scmp.eq.s32.totalorder %s31, 1
      %p369 = por %p367, %p368
      %p371 = scmp.ne.s32.totalorder %s356, %s370
      %p372 = scmp.eq.s32.totalorder %s31, 0
      %p373 = por %p371, %p372
      %s375 = sadd.s32 %s374, 1
      %p378 = scmp.eq.s32.totalorder %s25, 1
      %p379 = scmp.ne.s32.totalorder %s374, %s376
      %p380 = scmp.eq.s32.totalorder %s25, 0
      %p381 = por %p379, %p380
      %p382 = scmp.ne.s32.totalorder %s374, %s376
      %p383 = scmp.eq.s32.totalorder %s30, 1
      %p384 = por %p382, %p383
      %p385 = scmp.ne.s32.totalorder %s376, %s377
      %p386 = scmp.eq.s32.totalorder %s30, 0
      %p387 = por %p385, %p386
      %p388 = scmp.ne.s32.totalorder %s376, %s377
      %p389 = scmp.eq.s32.totalorder %s31, 1
      %p390 = por %p388, %p389
      %p392 = scmp.ne.s32.totalorder %s377, %s391
      %p393 = scmp.eq.s32.totalorder %s31, 0
      %p394 = por %p392, %p393
      %s396 = sadd.s32 %s395, 1
      %p399 = scmp.eq.s32.totalorder %s25, 1
      %p400 = scmp.ne.s32.totalorder %s395, %s397
      %p401 = scmp.eq.s32.totalorder %s25, 0
      %p402 = por %p400, %p401
      %p403 = scmp.ne.s32.totalorder %s395, %s397
      %p404 = scmp.eq.s32.totalorder %s30, 1
      %p405 = por %p403, %p404
      %p406 = scmp.ne.s32.totalorder %s397, %s398
      %p407 = scmp.eq.s32.totalorder %s30, 0
      %p408 = por %p406, %p407
      %p409 = scmp.ne.s32.totalorder %s397, %s398
      %p410 = scmp.eq.s32.totalorder %s31, 1
      %p411 = por %p409, %p410
      %p413 = scmp.ne.s32.totalorder %s398, %s412
      %p414 = scmp.eq.s32.totalorder %s31, 0
      %p415 = por %p413, %p414
      %s416 = ssub.s32 %s25, %s32
      %p417 = scmp.eq.s32.totalorder %s416, 0
      %s419 = sadd.s32 %s418, 1
      %s420 = scalar_select %p417, %s418, %s419
      %p423 = pneg %p417
      %p424 = scmp.eq.s32.totalorder %s25, 1
      %p425 = por %p423, %p424
      %p426 = scmp.ne.s32.totalorder %s418, %s421
      %p427 = scmp.eq.s32.totalorder %s25, 0
      %p428 = por %p426, %p427
      %p429 = scmp.ne.s32.totalorder %s418, %s421
      %p430 = scmp.eq.s32.totalorder %s30, 1
      %p431 = por %p429, %p430
      %p432 = scmp.ne.s32.totalorder %s421, %s422
      %p433 = scmp.eq.s32.totalorder %s30, 0
      %p434 = por %p432, %p433
      %p435 = scmp.ne.s32.totalorder %s421, %s422
      %p436 = scmp.eq.s32.totalorder %s31, 1
      %p437 = por %p435, %p436
      %p439 = scmp.ne.s32.totalorder %s422, %s438
      %p440 = scmp.eq.s32.totalorder %s31, 0
      %p441 = por %p439, %p440
      %p442 = scmp.le.s32.totalorder 1, %s25
      %p443 = scmp.lt.s32.totalorder %s25, 3
      %p444 = pnand %p442, %p443
      %p445 = pneg %p444
      // Predicated region
      $region9: #{basic_unit_pallas.1} parent=5 // pred_check
        _
      $region10: #{basic_unit_pallas.1} parent=5 // pred_check_branch
        %447 = sbr.rel (%p444) target = $region12
      $region11: #{basic_unit_pallas.1} parent=5 // pred_region
        %s448 = ssub.s32 %s25, 1
        // Predicated region
        $region13: #{basic_unit_pallas.1} parent=11 // pred_check
          %p449 = pneg %p72
        $region14: #{basic_unit_pallas.1} parent=11 // pred_check_branch
          %451 = sbr.rel (%p449) target = $region16
        $region15: #{basic_unit_pallas.1} parent=11 // pred_region
          _
        $region16: #{basic_unit_pallas.1} parent=11 // pred_fallthru
          _
        // Predicated region
        $region17: #{basic_unit_pallas.1} parent=11 // pred_check
          %p452 = pneg %p93
        $region18: #{basic_unit_pallas.1} parent=11 // pred_check_branch
          %454 = sbr.rel (%p452) target = $region20
        $region19: #{basic_unit_pallas.1} parent=11 // pred_region
          _
        $region20: #{basic_unit_pallas.1} parent=11 // pred_fallthru
          _
        // Predicated region
        $region21: #{basic_unit_pallas.1} parent=11 // pred_check
          %p455 = pneg %p114
        $region22: #{basic_unit_pallas.1} parent=11 // pred_check_branch
          %457 = sbr.rel (%p455) target = $region24
        $region23: #{basic_unit_pallas.1} parent=11 // pred_region
          _
        $region24: #{basic_unit_pallas.1} parent=11 // pred_fallthru
          _
        // Predicated region
        $region25: #{basic_unit_pallas.1} parent=11 // pred_check
          %p458 = pneg %p135
        $region26: #{basic_unit_pallas.1} parent=11 // pred_check_branch
          %460 = sbr.rel (%p458) target = $region28
        $region27: #{basic_unit_pallas.1} parent=11 // pred_region
          _
        $region28: #{basic_unit_pallas.1} parent=11 // pred_fallthru
          _
        // Predicated region
        $region29: #{basic_unit_pallas.1} parent=11 // pred_check
          %p461 = pneg %p156
        $region30: #{basic_unit_pallas.1} parent=11 // pred_check_branch
          %463 = sbr.rel (%p461) target = $region32
        $region31: #{basic_unit_pallas.1} parent=11 // pred_region
          _
        $region32: #{basic_unit_pallas.1} parent=11 // pred_fallthru
          _
        // Predicated region
        $region33: #{basic_unit_pallas.1} parent=11 // pred_check
          %p464 = pneg %p177
        $region34: #{basic_unit_pallas.1} parent=11 // pred_check_branch
          %466 = sbr.rel (%p464) target = $region36
        $region35: #{basic_unit_pallas.1} parent=11 // pred_region
          _
        $region36: #{basic_unit_pallas.1} parent=11 // pred_fallthru
          _
        // Predicated region
        $region37: #{basic_unit_pallas.1} parent=11 // pred_check
          %p467 = pneg %p198
        $region38: #{basic_unit_pallas.1} parent=11 // pred_check_branch
          %469 = sbr.rel (%p467) target = $region40
        $region39: #{basic_unit_pallas.1} parent=11 // pred_region
          _
        $region40: #{basic_unit_pallas.1} parent=11 // pred_fallthru
          _
        // Predicated region
        $region41: #{basic_unit_pallas.1} parent=11 // pred_check
          %p470 = pneg %p219
        $region42: #{basic_unit_pallas.1} parent=11 // pred_check_branch
          %472 = sbr.rel (%p470) target = $region44
        $region43: #{basic_unit_pallas.1} parent=11 // pred_region
          _
        $region44: #{basic_unit_pallas.1} parent=11 // pred_fallthru
          _
        // Predicated region
        $region45: #{basic_unit_pallas.1} parent=11 // pred_check
          %p473 = pneg %p240
        $region46: #{basic_unit_pallas.1} parent=11 // pred_check_branch
          %475 = sbr.rel (%p473) target = $region48
        $region47: #{basic_unit_pallas.1} parent=11 // pred_region
          _
        $region48: #{basic_unit_pallas.1} parent=11 // pred_fallthru
          _
        // Predicated region
        $region49: #{basic_unit_pallas.1} parent=11 // pred_check
          %p476 = pneg %p261
        $region50: #{basic_unit_pallas.1} parent=11 // pred_check_branch
          %478 = sbr.rel (%p476) target = $region52
        $region51: #{basic_unit_pallas.1} parent=11 // pred_region
          _
        $region52: #{basic_unit_pallas.1} parent=11 // pred_fallthru
          _
        // Predicated region
        $region53: #{basic_unit_pallas.1} parent=11 // pred_check
          %p479 = pneg %p282
        $region54: #{basic_unit_pallas.1} parent=11 // pred_check_branch
          %481 = sbr.rel (%p479) target = $region56
        $region55: #{basic_unit_pallas.1} parent=11 // pred_region
          _
        $region56: #{basic_unit_pallas.1} parent=11 // pred_fallthru
          _
        // Predicated region
        $region57: #{basic_unit_pallas.1} parent=11 // pred_check
          %p482 = pneg %p303
        $region58: #{basic_unit_pallas.1} parent=11 // pred_check_branch
          %484 = sbr.rel (%p482) target = $region60
        $region59: #{basic_unit_pallas.1} parent=11 // pred_region
          _
        $region60: #{basic_unit_pallas.1} parent=11 // pred_fallthru
          _
        // Predicated region
        $region61: #{basic_unit_pallas.1} parent=11 // pred_check
          %p485 = pneg %p324
        $region62: #{basic_unit_pallas.1} parent=11 // pred_check_branch
          %487 = sbr.rel (%p485) target = $region64
        $region63: #{basic_unit_pallas.1} parent=11 // pred_region
          %s489 = ssub.s32 16, 16
          %490 = vsyncadd [#allocation5], %s489
          %s492 = sshll.u32 %s13, 4
          %s493 = int_to_ptr.vmem [resolvable:$true] %s492
          %495 = dma.vmem_to_smem %s493, 16, [#allocation4], [#allocation5]
        $region64: #{basic_unit_pallas.1} parent=11 // pred_fallthru
          _
        // Predicated region
        $region65: #{basic_unit_pallas.1} parent=11 // pred_check
          %p496 = pneg %p345
        $region66: #{basic_unit_pallas.1} parent=11 // pred_check_branch
          %498 = sbr.rel (%p496) target = $region68
        $region67: #{basic_unit_pallas.1} parent=11 // pred_region
          _
        $region68: #{basic_unit_pallas.1} parent=11 // pred_fallthru
          _
        // Predicated region
        $region69: #{basic_unit_pallas.1} parent=11 // pred_check
          %p499 = pneg %p366
        $region70: #{basic_unit_pallas.1} parent=11 // pred_check_branch
          %501 = sbr.rel (%p499) target = $region72
        $region71: #{basic_unit_pallas.1} parent=11 // pred_region
          _
        $region72: #{basic_unit_pallas.1} parent=11 // pred_fallthru
          _
        // Predicated region
        $region73: #{basic_unit_pallas.1} parent=11 // pred_check
          %p502 = pneg %p387
        $region74: #{basic_unit_pallas.1} parent=11 // pred_check_branch
          %504 = sbr.rel (%p502) target = $region76
        $region75: #{basic_unit_pallas.1} parent=11 // pred_region
          _
        $region76: #{basic_unit_pallas.1} parent=11 // pred_fallthru
          _
        // Predicated region
        $region77: #{basic_unit_pallas.1} parent=11 // pred_check
          %p505 = pneg %p408
        $region78: #{basic_unit_pallas.1} parent=11 // pred_check_branch
          %507 = sbr.rel (%p505) target = $region80
        $region79: #{basic_unit_pallas.1} parent=11 // pred_region
          _
        $region80: #{basic_unit_pallas.1} parent=11 // pred_fallthru
          _
      $region12: #{basic_unit_pallas.1} parent=5 // pred_fallthru
        _
      %p508 = scmp.lt.s32.totalorder %s25, 2
      // Predicated region
      $region81: #{basic_unit_pallas.1} parent=5 // pred_check
        %p509 = pneg %p508
      $region82: #{basic_unit_pallas.1} parent=5 // pred_check_branch
        %511 = sbr.rel (%p509) target = $region84
      $region83: #{basic_unit_pallas.1} parent=5 // pred_region
        // Predicated region
        $region85: #{basic_unit_pallas.1} parent=83 // pred_check
          %p512 = pneg %p45
        $region86: #{basic_unit_pallas.1} parent=83 // pred_check_branch
          %514 = sbr.rel (%p512) target = $region88
        $region87: #{basic_unit_pallas.1} parent=83 // pred_region
          %p515 = scmp.lt.s32.totalorder %s25, 1
          %s516 = scalar_select %p515, %s25, 1
          %s517 = smul.addr %s516, 2
          %s518 = smul.addr %s517, 8
          %s519 = scalar_lea.vmem %s0, %s518
        $region88: #{basic_unit_pallas.1} parent=83 // pred_fallthru
          _
      $region84: #{basic_unit_pallas.1} parent=5 // pred_fallthru
        _
      %p520 = scmp.le.s32.totalorder 1, %s25
      %p521 = scmp.lt.s32.totalorder %s25, 3
      %p522 = pnand %p520, %p521
      %p523 = pneg %p522
      // Predicated region
      $region89: #{basic_unit_pallas.1} parent=5 // pred_check
        _
      $region90: #{basic_unit_pallas.1} parent=5 // pred_check_branch
        %525 = sbr.rel (%p522) target = $region92
      $region91: #{basic_unit_pallas.1} parent=5 // pred_region
        %s526 = ssub.s32 %s25, 1
        // Predicated region
        $region93: #{basic_unit_pallas.1} parent=91 // pred_check
          %p527 = pneg %p324
        $region94: #{basic_unit_pallas.1} parent=91 // pred_check_branch
          %529 = sbr.rel (%p527) target = $region96
        $region95: #{basic_unit_pallas.1} parent=91 // pred_region
          %530 = dma.done [#allocation5], 16
        $region96: #{basic_unit_pallas.1} parent=91 // pred_fallthru
          _
        %531 = sfence
        %p532 = scmp.lt.s32.totalorder %s30, 1
        %s533 = scalar_select %p532, %s30, 1
        %s534 = smul.addr %s533, 2
        %s535 = smul.addr %s534, 8
        %s536 = scalar_lea.vmem %s0, %s535
        %p537 = pneg %p51
        %p538 = pneg %p48
        %p539 = pneg %p72
        %p540 = pneg %p69
        %p541 = pneg %p93
        %p542 = pneg %p90
        %p543 = pneg %p114
        %p544 = pneg %p111
        %p545 = pneg %p135
        %p546 = pneg %p132
        %p547 = pneg %p156
        %p548 = pneg %p153
        %p549 = pneg %p177
        %p550 = pneg %p174
        %p551 = pneg %p198
        %p552 = pneg %p195
        %p553 = pneg %p219
        %p554 = pneg %p216
        %p555 = pneg %p240
        %p556 = pneg %p237
        %p557 = pneg %p261
        %p558 = pneg %p258
        %p559 = pneg %p282
        %p560 = pneg %p279
        %p561 = pneg %p303
        %p562 = pneg %p300
        %p563 = pneg %p324
        %p564 = pneg %p321
        %p565 = pneg %p345
        %p566 = pneg %p342
        %p567 = pneg %p366
        %p568 = pneg %p363
        %p569 = pneg %p387
        %p570 = pneg %p384
        %p571 = pneg %p408
        %p572 = pneg %p405
        %p573 = pneg %p434
        %p574 = pneg %p431
        %p575 = scmp.lt.s32.totalorder %s30, 1
        %s576 = scalar_select %p575, %s30, 1
        %s577 = smul.addr %s576, 2
        %s578 = smul.addr %s577, 8
        %s579 = scalar_lea.vmem %s18, %s578
        %p580 = scmp.lt.s32.totalorder %s30, 1
        %s581 = scalar_select %p580, %s30, 1
        %s582 = smul.addr %s581, 2
        %s583 = smul.addr %s582, 8
        %s584 = scalar_lea.vmem %s0, %s583
        %p585 = scmp.lt.s32.totalorder %s30, 1
        %s586 = scalar_select %p585, %s30, 1
        %s587 = smul.addr %s586, 2
        %s588 = smul.addr %s587, 8
        %s589 = scalar_lea.vmem %s18, %s588
        %v590 = vld [vmem:[%s584] sm:$0xff]
        %v591 = vld [vmem:[%s584 + $0x8] sm:$0xff]
        %v592 = vld [vmem:[%s1] sm:$0xff]
        %v593 = vld [vmem:[%s1 + $0x8] sm:$0xff]
        %v594 = vld [vmem:[%s1 + $0x10] sm:$0xff]
        %v595 = vld [vmem:[%s2] sm:$0xff]
        %v596 = vld [vmem:[%s2 + $0x8] sm:$0xff]
        %v597 = vld [vmem:[%s2 + $0x10] sm:$0xff]
        %599 = vset.pattern.permute.xlu0 0
        %600 = vperm.xlu0 %599, %v595
        %v601 = vpop.permute.xlu0 %600
        %604 = vset.pattern.permute.xlu0 0
        %605 = vperm.xlu0 %604, %v596
        %v606 = vpop.permute.xlu0 %605
        %609 = vset.pattern.permute.xlu0 0
        %610 = vperm.xlu0 %609, %v597
        %v611 = vpop.permute.xlu0 %610
        %vm613 = vcmask 130048
        %v615 = vsel %vm613, %v592, 0
        %v618 = vsel %vm613, %v593, 0
        %v621 = vsel %vm613, %v594, 0
        %623 = vmatprep.subr.mxu0 0.0
        %624 = vmatpush1.msra.mxu0 %v590
        %625 = vmatprep.subr.mxu0 0.0
        %626 = vmatpush1.msra.mxu0 %v591
        %627 = vmatprep.subr.mxu0 0.0
        %628 = vmatpush1.msra.mxu0 0.0
        %629 = vmatprep.subr.mxu0 0.0
        %630 = vmatpush1.msra.mxu0 0.0
        %631 = vmatprep.subr.mxu0 0.0
        %632 = vmatpush1.msra.mxu0 0.0
        %633 = vmatprep.subr.mxu0 0.0
        %634 = vmatpush1.msra.mxu0 0.0
        %635 = vmatprep.subr.mxu0 0.0
        %636 = vmatpush1.msra.mxu0 0.0
        %637 = vmatprep.subr.mxu0 0.0
        %638 = vmatpush1.msra.mxu0 0.0
        %639 = vmatprep.subr.mxu0 0.0
        %640 = vmatpush1.msra.mxu0 0.0
        %641 = vmatprep.subr.mxu0 0.0
        %642 = vmatpush1.msra.mxu0 0.0
        %643 = vmatprep.subr.mxu0 0.0
        %644 = vmatpush1.msra.mxu0 0.0
        %645 = vmatprep.subr.mxu0 0.0
        %646 = vmatpush1.msra.mxu0 0.0
        %647 = vmatprep.subr.mxu0 0.0
        %648 = vmatpush1.msra.mxu0 0.0
        %649 = vmatprep.subr.mxu0 0.0
        %650 = vmatpush1.msra.mxu0 0.0
        %651 = vmatprep.subr.mxu0 0.0
        %652 = vmatpush1.msra.mxu0 0.0
        %653 = vmatprep.subr.mxu0 0.0
        %654 = vmatpush1.msra.mxu0 0.0
        %655 = vmatprep.subr.mxu0 0.0
        %656 = vmatpush1.msra.mxu0 0.0
        %657 = vmatprep.subr.mxu0 0.0
        %658 = vmatpush1.msra.mxu0 0.0
        %659 = vmatprep.subr.mxu0 0.0
        %660 = vmatpush1.msra.mxu0 0.0
        %661 = vmatprep.subr.mxu0 0.0
        %662 = vmatpush1.msra.mxu0 0.0
        %663 = vmatprep.subr.mxu0 0.0
        %664 = vmatpush1.msra.mxu0 0.0
        %665 = vmatprep.subr.mxu0 0.0
        %666 = vmatpush1.msra.mxu0 0.0
        %667 = vmatprep.subr.mxu0 0.0
        %668 = vmatpush1.msra.mxu0 0.0
        %669 = vmatprep.subr.mxu0 0.0
        %670 = vmatpush1.msra.mxu0 0.0
        %671 = vmatprep.subr.mxu0 0.0
        %672 = vmatpush1.msra.mxu0 0.0
        %673 = vmatprep.subr.mxu0 0.0
        %674 = vmatpush1.msra.mxu0 0.0
        %675 = vmatprep.subr.mxu0 0.0
        %676 = vmatpush1.msra.mxu0 0.0
        %677 = vmatprep.subr.mxu0 0.0
        %678 = vmatpush1.msra.mxu0 0.0
        %679 = vmatprep.subr.mxu0 0.0
        %680 = vmatpush1.msra.mxu0 0.0
        %681 = vmatprep.subr.mxu0 0.0
        %682 = vmatpush1.msra.mxu0 0.0
        %683 = vmatprep.subr.mxu0 0.0
        %684 = vmatpush1.msra.mxu0 0.0
        %685 = vmatprep.subr.mxu0 0.0
        %686 = vmatpush1.msra.mxu0 0.0
        %687 = vmatprep.mubr.f32.mxu0 0.0
        %688 = vmatmul.mubr.f32.gmra.mrb[0].mxu0 %v615
        %v689 = vpop.f32.mrb[0].mxu0
        %v690 = vadd.f32 %v601, %v689
        %v691 = vpop.f32.mrb[0].mxu0
        %692 = vmatprep.mubr.f32.mxu0 0.0
        %693 = vmatmul.mubr.f32.gmra.mrb[0].mxu0 %v618
        %v694 = vpop.f32.mrb[0].mxu0
        %v695 = vadd.f32 %v606, %v694
        %v696 = vpop.f32.mrb[0].mxu0
        %697 = vmatprep.mubr.f32.mxu0 0.0
        %698 = vmatmul.mubr.f32.gmra.mrb[0].mxu0 %v621
        %v699 = vpop.f32.mrb[0].mxu0
        %v700 = vadd.f32 %v611, %v699
        %v701 = vpop.f32.mrb[0].mxu0
        %702 = vdwg.mxu0
        %vm703 = vcmask 523264
        %v704 = vsel %vm703, %v695, -inf
        %705 = vmax.xlane.f32.xlu0 %v704
        %v706 = vpop.xlane.xlu0 %705
        %v707 = vrot.slane %v706, 4
        %v708 = vmax.f32 %v706, %v707
        %v709 = vrot.slane %v708, 2
        %v710 = vmax.f32 %v708, %v709
        %v711 = vrot.slane %v710, 1
        %v712 = vmax.f32 %v710, %v711
        %s713 = vtos %v712
        %v714 = vstv %s713
        %v715 = vsub.f32 %v695, %v714
        %v716 = vmul.f32 %v715, 1.442695
        %v717 = vpow.pop %v716
        %v718 = vsel %vm703, %v717, 0.0
        %719 = vadd.xlane.f32.xlu0 %v718
        %v720 = vpop.xlane.xlu0 %719
        %v721 = vrot.slane %v720, 4
        %v722 = vadd.f32 %v720, %v721
        %v723 = vrot.slane %v722, 2
        %v724 = vadd.f32 %v722, %v723
        %v725 = vrot.slane %v724, 1
        %v726 = vadd.f32 %v724, %v725
        %s727 = vtos %v726
        %v728 = vstv %s727
        %v729 = vrcp.pop %v728
        %v730 = vmul.f32 %v717, %v729
        %v731 = vsel %vm703, %v700, -inf
        %732 = vmax.xlane.f32.xlu0 %v731
        %v733 = vpop.xlane.xlu0 %732
        %v734 = vrot.slane %v733, 4
        %v735 = vmax.f32 %v733, %v734
        %v736 = vrot.slane %v735, 2
        %v737 = vmax.f32 %v735, %v736
        %v738 = vrot.slane %v737, 1
        %v739 = vmax.f32 %v737, %v738
        %s740 = vtos %v739
        %v741 = vstv %s740
        %v742 = vsub.f32 %v700, %v741
        %v743 = vmul.f32 %v742, 1.442695
        %v744 = vpow.pop %v743
        %v745 = vsel %vm703, %v744, 0.0
        %746 = vadd.xlane.f32.xlu0 %v745
        %v747 = vpop.xlane.xlu0 %746
        %v748 = vrot.slane %v747, 4
        %v749 = vadd.f32 %v747, %v748
        %v750 = vrot.slane %v749, 2
        %v751 = vadd.f32 %v749, %v750
        %v752 = vrot.slane %v751, 1
        %v753 = vadd.f32 %v751, %v752
        %s754 = vtos %v753
        %v755 = vstv %s754
        %v756 = vrcp.pop %v755
        %v757 = vmul.f32 %v744, %v756
        %v759 = vsel %vm703, %v730, 0
        %v762 = vsel %vm703, %v757, 0
        %764 = vmatprep.subr.mxu0 0.0
        %765 = vmatpush1.xpose.msra.mxu0 %v762
        %766 = vmatprep.subr.mxu0 0.0
        %767 = vmatpush1.xpose.msra.mxu0 0.0
        %768 = vmatprep.subr.mxu0 0.0
        %769 = vmatpush1.xpose.msra.mxu0 0.0
        %770 = vmatprep.subr.mxu0 0.0
        %771 = vmatpush1.xpose.msra.mxu0 0.0
        %772 = vmatprep.subr.mxu0 0.0
        %773 = vmatpush1.xpose.msra.mxu0 0.0
        %774 = vmatprep.subr.mxu0 0.0
        %775 = vmatpush1.xpose.msra.mxu0 0.0
        %776 = vmatprep.subr.mxu0 0.0
        %777 = vmatpush1.xpose.msra.mxu0 0.0
        %778 = vmatprep.subr.mxu0 0.0
        %779 = vmatpush1.xpose.msra.mxu0 0.0
        %780 = vmatprep.subr.mxu0 0.0
        %781 = vmatpush1.xpose.msra.mxu0 0.0
        %782 = vmatprep.subr.mxu0 0.0
        %783 = vmatpush1.xpose.msra.mxu0 0.0
        %784 = vmatprep.subr.mxu0 0.0
        %785 = vmatpush1.xpose.msra.mxu0 0.0
        %786 = vmatprep.subr.mxu0 0.0
        %787 = vmatpush1.xpose.msra.mxu0 0.0
        %788 = vmatprep.subr.mxu0 0.0
        %789 = vmatpush1.xpose.msra.mxu0 0.0
        %790 = vmatprep.subr.mxu0 0.0
        %791 = vmatpush1.xpose.msra.mxu0 0.0
        %792 = vmatprep.subr.mxu0 0.0
        %793 = vmatpush1.xpose.msra.mxu0 0.0
        %794 = vmatprep.subr.mxu0 0.0
        %795 = vmatpush1.xpose.msra.mxu0 0.0
        %796 = vmatprep.subr.mxu0 0.0
        %797 = vmatpush1.xpose.msra.mxu0 0.0
        %798 = vmatprep.subr.mxu0 0.0
        %799 = vmatpush1.xpose.msra.mxu0 0.0
        %800 = vmatprep.subr.mxu0 0.0
        %801 = vmatpush1.xpose.msra.mxu0 0.0
        %802 = vmatprep.subr.mxu0 0.0
        %803 = vmatpush1.xpose.msra.mxu0 0.0
        %804 = vmatprep.subr.mxu0 0.0
        %805 = vmatpush1.xpose.msra.mxu0 0.0
        %806 = vmatprep.subr.mxu0 0.0
        %807 = vmatpush1.xpose.msra.mxu0 0.0
        %808 = vmatprep.subr.mxu0 0.0
        %809 = vmatpush1.xpose.msra.mxu0 0.0
        %810 = vmatprep.subr.mxu0 0.0
        %811 = vmatpush1.xpose.msra.mxu0 0.0
        %812 = vmatprep.subr.mxu0 0.0
        %813 = vmatpush1.xpose.msra.mxu0 0.0
        %814 = vmatprep.subr.mxu0 0.0
        %815 = vmatpush1.xpose.msra.mxu0 0.0
        %816 = vmatprep.subr.mxu0 0.0
        %817 = vmatpush1.xpose.msra.mxu0 0.0
        %818 = vmatprep.subr.mxu0 0.0
        %819 = vmatpush1.xpose.msra.mxu0 0.0
        %820 = vmatprep.subr.mxu0 0.0
        %821 = vmatpush1.xpose.msra.mxu0 0.0
        %822 = vmatprep.subr.mxu0 0.0
        %823 = vmatpush1.xpose.msra.mxu0 0.0
        %824 = vmatprep.subr.mxu0 0.0
        %825 = vmatpush1.xpose.msra.mxu0 0.0
        %826 = vmatprep.subr.mxu0 0.0
        %827 = vmatpush1.xpose.msra.mxu0 0.0
        %828 = vmatprep.mubr.f32.mxu0 0.0
        %829 = vmatmul.mubr.f32.gmra.mrb[0].mxu0 %v759
        %v830 = vpop.f32.mrb[0].mxu0
        %v831 = vadd.f32 0.0, %v830
        %v832 = vpop.f32.mrb[0].mxu0
        %833 = vdwg.mxu0
        %834 = vxpose.xlu0.b32.start [1/16] %v690, 128
        %835 = vxpose.xlu0.b32.cont [2/16] 0.0, 128
        %836 = vxpose.xlu0.b32.cont [3/16] 0.0, 128
        %837 = vxpose.xlu0.b32.cont [4/16] 0.0, 128
        %838 = vxpose.xlu0.b32.cont [5/16] 0.0, 128
        %839 = vxpose.xlu0.b32.cont [6/16] 0.0, 128
        %840 = vxpose.xlu0.b32.cont [7/16] 0.0, 128
        %841 = vxpose.xlu0.b32.cont [8/16] 0.0, 128
        %842 = vxpose.xlu0.b32.cont [9/16] 0.0, 128
        %843 = vxpose.xlu0.b32.cont [10/16] 0.0, 128
        %844 = vxpose.xlu0.b32.cont [11/16] 0.0, 128
        %845 = vxpose.xlu0.b32.cont [12/16] 0.0, 128
        %846 = vxpose.xlu0.b32.cont [13/16] 0.0, 128
        %847 = vxpose.xlu0.b32.cont [14/16] 0.0, 128
        %848 = vxpose.xlu0.b32.cont [15/16] 0.0, 128
        %849 = vxpose.xlu0.b32.end [16/16] 0.0, 128
        %v850 = vpop.trf.xlu0
        %v851 = vpop.trf.xlu0
        %v852 = vpop.trf.xlu0
        %v853 = vpop.trf.xlu0
        %v854 = vpop.trf.xlu0
        %v855 = vpop.trf.xlu0
        %v856 = vpop.trf.xlu0
        %v857 = vpop.trf.xlu0
        %v858 = vpop.trf.xlu0
        %v859 = vpop.trf.xlu0
        %v860 = vpop.trf.xlu0
        %v861 = vpop.trf.xlu0
        %v862 = vpop.trf.xlu0
        %v863 = vpop.trf.xlu0
        %v864 = vpop.trf.xlu0
        %v865 = vpop.trf.xlu0
        %vm866 = vcmask 64512
        %v868 = vsel %vm866, %v850, 0
        %v871 = vsel %vm866, %v851, 0
        %v874 = vsel %vm866, %v852, 0
        %v877 = vsel %vm866, %v853, 0
        %v880 = vsel %vm866, %v854, 0
        %v883 = vsel %vm866, %v855, 0
        %v886 = vsel %vm866, %v856, 0
        %v889 = vsel %vm866, %v857, 0
        %v892 = vsel %vm866, %v831, 0
        %894 = vmatprep.subr.mxu0 0.0
        %895 = vmatpush1.xpose.msra.mxu0 %v892
        %896 = vmatprep.subr.mxu0 0.0
        %897 = vmatpush1.xpose.msra.mxu0 0.0
        %898 = vmatprep.subr.mxu0 0.0
        %899 = vmatpush1.xpose.msra.mxu0 0.0
        %900 = vmatprep.subr.mxu0 0.0
        %901 = vmatpush1.xpose.msra.mxu0 0.0
        %902 = vmatprep.subr.mxu0 0.0
        %903 = vmatpush1.xpose.msra.mxu0 0.0
        %904 = vmatprep.subr.mxu0 0.0
        %905 = vmatpush1.xpose.msra.mxu0 0.0
        %906 = vmatprep.subr.mxu0 0.0
        %907 = vmatpush1.xpose.msra.mxu0 0.0
        %908 = vmatprep.subr.mxu0 0.0
        %909 = vmatpush1.xpose.msra.mxu0 0.0
        %910 = vmatprep.subr.mxu0 0.0
        %911 = vmatpush1.xpose.msra.mxu0 0.0
        %912 = vmatprep.subr.mxu0 0.0
        %913 = vmatpush1.xpose.msra.mxu0 0.0
        %914 = vmatprep.subr.mxu0 0.0
        %915 = vmatpush1.xpose.msra.mxu0 0.0
        %916 = vmatprep.subr.mxu0 0.0
        %917 = vmatpush1.xpose.msra.mxu0 0.0
        %918 = vmatprep.subr.mxu0 0.0
        %919 = vmatpush1.xpose.msra.mxu0 0.0
        %920 = vmatprep.subr.mxu0 0.0
        %921 = vmatpush1.xpose.msra.mxu0 0.0
        %922 = vmatprep.subr.mxu0 0.0
        %923 = vmatpush1.xpose.msra.mxu0 0.0
        %924 = vmatprep.subr.mxu0 0.0
        %925 = vmatpush1.xpose.msra.mxu0 0.0
        %926 = vmatprep.subr.mxu0 0.0
        %927 = vmatpush1.xpose.msra.mxu0 0.0
        %928 = vmatprep.subr.mxu0 0.0
        %929 = vmatpush1.xpose.msra.mxu0 0.0
        %930 = vmatprep.subr.mxu0 0.0
        %931 = vmatpush1.xpose.msra.mxu0 0.0
        %932 = vmatprep.subr.mxu0 0.0
        %933 = vmatpush1.xpose.msra.mxu0 0.0
        %934 = vmatprep.subr.mxu0 0.0
        %935 = vmatpush1.xpose.msra.mxu0 0.0
        %936 = vmatprep.subr.mxu0 0.0
        %937 = vmatpush1.xpose.msra.mxu0 0.0
        %938 = vmatprep.subr.mxu0 0.0
        %939 = vmatpush1.xpose.msra.mxu0 0.0
        %940 = vmatprep.subr.mxu0 0.0
        %941 = vmatpush1.xpose.msra.mxu0 0.0
        %942 = vmatprep.subr.mxu0 0.0
        %943 = vmatpush1.xpose.msra.mxu0 0.0
        %944 = vmatprep.subr.mxu0 0.0
        %945 = vmatpush1.xpose.msra.mxu0 0.0
        %946 = vmatprep.subr.mxu0 0.0
        %947 = vmatpush1.xpose.msra.mxu0 0.0
        %948 = vmatprep.subr.mxu0 0.0
        %949 = vmatpush1.xpose.msra.mxu0 0.0
        %950 = vmatprep.subr.mxu0 0.0
        %951 = vmatpush1.xpose.msra.mxu0 0.0
        %952 = vmatprep.subr.mxu0 0.0
        %953 = vmatpush1.xpose.msra.mxu0 0.0
        %954 = vmatprep.subr.mxu0 0.0
        %955 = vmatpush1.xpose.msra.mxu0 0.0
        %956 = vmatprep.subr.mxu0 0.0
        %957 = vmatpush1.xpose.msra.mxu0 0.0
        %958 = vmatprep.mubr.f32.mxu0 0.0
        %959 = vmatmul.mubr.f32.gmra.mrb[0].mxu0 %v868
        %v960 = vpop.f32.mrb[0].mxu0
        %v961 = vadd.f32 0.0, %v960
        %v962 = vpop.f32.mrb[0].mxu0
        %963 = vmatprep.mubr.f32.mxu0 0.0
        %964 = vmatmul.mubr.f32.gmra.mrb[0].mxu0 %v871
        %v965 = vpop.f32.mrb[0].mxu0
        %v966 = vadd.f32 0.0, %v965
        %v967 = vpop.f32.mrb[0].mxu0
        %968 = vmatprep.mubr.f32.mxu0 0.0
        %969 = vmatmul.mubr.f32.gmra.mrb[0].mxu0 %v874
        %v970 = vpop.f32.mrb[0].mxu0
        %v971 = vadd.f32 0.0, %v970
        %v972 = vpop.f32.mrb[0].mxu0
        %973 = vmatprep.mubr.f32.mxu0 0.0
        %974 = vmatmul.mubr.f32.gmra.mrb[0].mxu0 %v877
        %v975 = vpop.f32.mrb[0].mxu0
        %v976 = vadd.f32 0.0, %v975
        %v977 = vpop.f32.mrb[0].mxu0
        %978 = vmatprep.mubr.f32.mxu0 0.0
        %979 = vmatmul.mubr.f32.gmra.mrb[0].mxu0 %v880
        %v980 = vpop.f32.mrb[0].mxu0
        %v981 = vadd.f32 0.0, %v980
        %v982 = vpop.f32.mrb[0].mxu0
        %983 = vmatprep.mubr.f32.mxu0 0.0
        %984 = vmatmul.mubr.f32.gmra.mrb[0].mxu0 %v883
        %v985 = vpop.f32.mrb[0].mxu0
        %v986 = vadd.f32 0.0, %v985
        %v987 = vpop.f32.mrb[0].mxu0
        %988 = vmatprep.mubr.f32.mxu0 0.0
        %989 = vmatmul.mubr.f32.gmra.mrb[0].mxu0 %v886
        %v990 = vpop.f32.mrb[0].mxu0
        %v991 = vadd.f32 0.0, %v990
        %v992 = vpop.f32.mrb[0].mxu0
        %993 = vmatprep.mubr.f32.mxu0 0.0
        %994 = vmatmul.mubr.f32.gmra.mrb[0].mxu0 %v889
        %v995 = vpop.f32.mrb[0].mxu0
        %v996 = vadd.f32 0.0, %v995
        %v997 = vpop.f32.mrb[0].mxu0
        %998 = vdwg.mxu0
        %999 = vst.msk [vmem:[#allocation2] sm:$0xff] %vm866, %v961
        %1000 = vst.msk [vmem:[#allocation2 + $0x8] sm:$0xff] %vm866, %v966
        %1001 = vst.msk [vmem:[#allocation2 + $0x10] sm:$0xff] %vm866, %v971
        %1002 = vst.msk [vmem:[#allocation2 + $0x18] sm:$0xff] %vm866, %v976
        %1003 = vst.msk [vmem:[#allocation2 + $0x20] sm:$0xff] %vm866, %v981
        %1004 = vst.msk [vmem:[#allocation2 + $0x28] sm:$0xff] %vm866, %v986
        %1005 = vst.msk [vmem:[#allocation2 + $0x30] sm:$0xff] %vm866, %v991
        %1006 = vst.msk [vmem:[#allocation2 + $0x38] sm:$0xff] %vm866, %v996
        %v1007 = vld [vmem:[#allocation2] ss:$8 sm:$0xf]
        %v1008 = vld [vmem:[#allocation2] ss:$8 sm:$0xf0]
        %v1009 = vor.u32 %v1007, %v1008
        %s1010 = scalar_lea.vmem [#allocation2], 1
        %v1011 = vld [vmem:[%s1010] ss:$8 sm:$0xf]
        %v1012 = vld [vmem:[%s1010] ss:$8 sm:$0xf0]
        %v1013 = vor.u32 %v1011, %v1012
        %s1014 = scalar_lea.vmem [#allocation2], 2
        %v1015 = vld [vmem:[%s1014] ss:$8 sm:$0xf]
        %v1016 = vld [vmem:[%s1014] ss:$8 sm:$0xf0]
        %v1017 = vor.u32 %v1015, %v1016
        %s1018 = scalar_lea.vmem [#allocation2], 3
        %v1019 = vld [vmem:[%s1018] ss:$8 sm:$0xf]
        %v1020 = vld [vmem:[%s1018] ss:$8 sm:$0xf0]
        %v1021 = vor.u32 %v1019, %v1020
        %s1022 = scalar_lea.vmem [#allocation2], 4
        %v1023 = vld [vmem:[%s1022] ss:$8 sm:$0xf]
        %v1024 = vld [vmem:[%s1022] ss:$8 sm:$0xf0]
        %v1025 = vor.u32 %v1023, %v1024
        %s1026 = scalar_lea.vmem [#allocation2], 5
        %v1027 = vld [vmem:[%s1026] ss:$8 sm:$0xf]
        %v1028 = vld [vmem:[%s1026] ss:$8 sm:$0xf0]
        %v1029 = vor.u32 %v1027, %v1028
        %s1030 = scalar_lea.vmem [#allocation2], 6
        %v1031 = vld [vmem:[%s1030] ss:$8 sm:$0xf]
        %v1032 = vld [vmem:[%s1030] ss:$8 sm:$0xf0]
        %v1033 = vor.u32 %v1031, %v1032
        %s1034 = scalar_lea.vmem [#allocation2], 7
        %v1035 = vld [vmem:[%s1034] ss:$8 sm:$0xf]
        %v1036 = vld [vmem:[%s1034] ss:$8 sm:$0xf0]
        %v1037 = vor.u32 %v1035, %v1036
        %1039 = vrot.lane.b32.xlu0 %v1013, 8
        %v1040 = vpop.permute.xlu0 %1039
        %1043 = vrot.lane.b32.xlu0 %v1017, 16
        %v1044 = vpop.permute.xlu0 %1043
        %1047 = vrot.lane.b32.xlu0 %v1021, 24
        %v1048 = vpop.permute.xlu0 %1047
        %1051 = vrot.lane.b32.xlu0 %v1025, 32
        %v1052 = vpop.permute.xlu0 %1051
        %1055 = vrot.lane.b32.xlu0 %v1029, 40
        %v1056 = vpop.permute.xlu0 %1055
        %1059 = vrot.lane.b32.xlu0 %v1033, 48
        %v1060 = vpop.permute.xlu0 %1059
        %1063 = vrot.lane.b32.xlu0 %v1037, 56
        %v1064 = vpop.permute.xlu0 %1063
        %v1066 = vsel %vm866, %v1009, %v1040
        %v1067 = vsel %vm613, %v1066, %v1044
        %vm1068 = vcmask 195584
        %v1069 = vsel %vm1068, %v1067, %v1048
        %vm1070 = vcmask 261120
        %v1071 = vsel %vm1070, %v1069, %v1052
        %vm1072 = vcmask 326656
        %v1073 = vsel %vm1072, %v1071, %v1056
        %vm1074 = vcmask 392192
        %v1075 = vsel %vm1074, %v1073, %v1060
        %vm1076 = vcmask 457728
        %v1077 = vsel %vm1076, %v1075, %v1064
        %v1078 = vld [vmem:[%s3] sm:$0xff]
        %v1079 = vld [vmem:[%s3 + $0x8] sm:$0xff]
        %v1080 = vld [vmem:[%s4] sm:$0xff]
        %v1081 = vld [vmem:[%s4 + $0x8] sm:$0xff]
        %1083 = vset.pattern.permute.xlu0 0
        %1084 = vperm.xlu0 %1083, %v1080
        %v1085 = vpop.permute.xlu0 %1084
        %1088 = vset.pattern.permute.xlu0 0
        %1089 = vperm.xlu0 %1088, %v1081
        %v1090 = vpop.permute.xlu0 %1089
        %v1093 = vsel %vm866, %v1078, 0
        %v1096 = vsel %vm866, %v1079, 0
        %1098 = vmatprep.subr.mxu0 0.0
        %1099 = vmatpush1.msra.mxu0 %v1077
        %1100 = vmatprep.subr.mxu0 0.0
        %1101 = vmatpush1.msra.mxu0 0.0
        %1102 = vmatprep.subr.mxu0 0.0
        %1103 = vmatpush1.msra.mxu0 0.0
        %1104 = vmatprep.subr.mxu0 0.0
        %1105 = vmatpush1.msra.mxu0 0.0
        %1106 = vmatprep.subr.mxu0 0.0
        %1107 = vmatpush1.msra.mxu0 0.0
        %1108 = vmatprep.subr.mxu0 0.0
        %1109 = vmatpush1.msra.mxu0 0.0
        %1110 = vmatprep.subr.mxu0 0.0
        %1111 = vmatpush1.msra.mxu0 0.0
        %1112 = vmatprep.subr.mxu0 0.0
        %1113 = vmatpush1.msra.mxu0 0.0
        %1114 = vmatprep.subr.mxu0 0.0
        %1115 = vmatpush1.msra.mxu0 0.0
        %1116 = vmatprep.subr.mxu0 0.0
        %1117 = vmatpush1.msra.mxu0 0.0
        %1118 = vmatprep.subr.mxu0 0.0
        %1119 = vmatpush1.msra.mxu0 0.0
        %1120 = vmatprep.subr.mxu0 0.0
        %1121 = vmatpush1.msra.mxu0 0.0
        %1122 = vmatprep.subr.mxu0 0.0
        %1123 = vmatpush1.msra.mxu0 0.0
        %1124 = vmatprep.subr.mxu0 0.0
        %1125 = vmatpush1.msra.mxu0 0.0
        %1126 = vmatprep.subr.mxu0 0.0
        %1127 = vmatpush1.msra.mxu0 0.0
        %1128 = vmatprep.subr.mxu0 0.0
        %1129 = vmatpush1.msra.mxu0 0.0
        %1130 = vmatprep.subr.mxu0 0.0
        %1131 = vmatpush1.msra.mxu0 0.0
        %1132 = vmatprep.subr.mxu0 0.0
        %1133 = vmatpush1.msra.mxu0 0.0
        %1134 = vmatprep.subr.mxu0 0.0
        %1135 = vmatpush1.msra.mxu0 0.0
        %1136 = vmatprep.subr.mxu0 0.0
        %1137 = vmatpush1.msra.mxu0 0.0
        %1138 = vmatprep.subr.mxu0 0.0
        %1139 = vmatpush1.msra.mxu0 0.0
        %1140 = vmatprep.subr.mxu0 0.0
        %1141 = vmatpush1.msra.mxu0 0.0
        %1142 = vmatprep.subr.mxu0 0.0
        %1143 = vmatpush1.msra.mxu0 0.0
        %1144 = vmatprep.subr.mxu0 0.0
        %1145 = vmatpush1.msra.mxu0 0.0
        %1146 = vmatprep.subr.mxu0 0.0
        %1147 = vmatpush1.msra.mxu0 0.0
        %1148 = vmatprep.subr.mxu0 0.0
        %1149 = vmatpush1.msra.mxu0 0.0
        %1150 = vmatprep.subr.mxu0 0.0
        %1151 = vmatpush1.msra.mxu0 0.0
        %1152 = vmatprep.subr.mxu0 0.0
        %1153 = vmatpush1.msra.mxu0 0.0
        %1154 = vmatprep.subr.mxu0 0.0
        %1155 = vmatpush1.msra.mxu0 0.0
        %1156 = vmatprep.subr.mxu0 0.0
        %1157 = vmatpush1.msra.mxu0 0.0
        %1158 = vmatprep.subr.mxu0 0.0
        %1159 = vmatpush1.msra.mxu0 0.0
        %1160 = vmatprep.subr.mxu0 0.0
        %1161 = vmatpush1.msra.mxu0 0.0
        %1162 = vmatprep.mubr.f32.mxu0 0.0
        %1163 = vmatmul.mubr.f32.gmra.mrb[0].mxu0 %v1093
        %v1164 = vpop.f32.mrb[0].mxu0
        %v1165 = vadd.f32 %v1085, %v1164
        %v1166 = vpop.f32.mrb[0].mxu0
        %1167 = vmatprep.mubr.f32.mxu0 0.0
        %1168 = vmatmul.mubr.f32.gmra.mrb[0].mxu0 %v1096
        %v1169 = vpop.f32.mrb[0].mxu0
        %v1170 = vadd.f32 %v1090, %v1169
        %v1171 = vpop.f32.mrb[0].mxu0
        %1172 = vdwg.mxu0
        %v1173 = vadd.f32 %v1165, %v590
        %v1174 = vadd.f32 %v1170, %v591
        %v1175 = vmax.f32 %v1173, 0.0
        %v1176 = vmax.f32 %v1174, 0.0
        %v1177 = vld [vmem:[%s7] sm:$0xff]
        %v1178 = vld [vmem:[%s7 + $0x8] sm:$0xff]
        %v1179 = vld [vmem:[%s7 + $0x10] sm:$0xff]
        %v1180 = vld [vmem:[%s7 + $0x18] sm:$0xff]
        %v1181 = vld [vmem:[%s8] sm:$0xff]
        %v1182 = vld [vmem:[%s8 + $0x8] sm:$0xff]
        %1185 = vrot.lane.b32.xlu0 %v1175, 73
        %v1186 = vpop.permute.xlu0 %1185
        %1187 = vrot.lane.b32.xlu0 %v1176, 73
        %v1188 = vpop.permute.xlu0 %1187
        %1191 = vrot.lane.b32.xlu0 %v1175, 9
        %v1192 = vpop.permute.xlu0 %1191
        %1193 = vrot.lane.b32.xlu0 %v1176, 9
        %v1194 = vpop.permute.xlu0 %1193
        %vm1197 = vcmask 72704
        %v1198 = vsel %vm1197, %v1186, %v1192
        %v1199 = vsel %vm1197, %v1188, %v1194
        %v1200 = vld [vmem:[%s5] sm:$0x1]
        %v1201 = vlaneseq
        %v1202 = vshrl.u32 %v1201, 7
        %v1203 = vsub.s32 0, %v1202
        %v1204 = vrot.slane %v1200, %v1203
        %v1205 = vmul.f32 %v1198, %v1204
        %v1206 = vmul.f32 %v1199, %v1204
        %1207 = vrot.lane.b32.xlu0 %v1175, 72
        %v1208 = vpop.permute.xlu0 %1207
        %1209 = vrot.lane.b32.xlu0 %v1176, 72
        %v1210 = vpop.permute.xlu0 %1209
        %1213 = vrot.lane.b32.xlu0 %v1175, 8
        %v1214 = vpop.permute.xlu0 %1213
        %1215 = vrot.lane.b32.xlu0 %v1176, 8
        %v1216 = vpop.permute.xlu0 %1215
        %v1219 = vsel %vm866, %v1208, %v1214
        %v1220 = vsel %vm866, %v1210, %v1216
        %v1221 = vld [vmem:[%s5 + $0x1] sm:$0x1]
        %v1222 = vlaneseq
        %v1223 = vshrl.u32 %v1222, 7
        %v1224 = vsub.s32 0, %v1223
        %v1225 = vrot.slane %v1221, %v1224
        %v1226 = vmul.f32 %v1219, %v1225
        %v1227 = vmul.f32 %v1220, %v1225
        %1228 = vrot.lane.b32.xlu0 %v1175, 71
        %v1229 = vpop.permute.xlu0 %1228
        %1230 = vrot.lane.b32.xlu0 %v1176, 71
        %v1231 = vpop.permute.xlu0 %1230
        %1234 = vrot.lane.b32.xlu0 %v1175, 7
        %v1235 = vpop.permute.xlu0 %1234
        %1236 = vrot.lane.b32.xlu0 %v1176, 7
        %v1237 = vpop.permute.xlu0 %1236
        %vm1240 = vcmask 56320
        %v1241 = vsel %vm1240, %v1229, %v1235
        %v1242 = vsel %vm1240, %v1231, %v1237
        %v1243 = vld [vmem:[%s5 + $0x2] sm:$0x1]
        %v1244 = vlaneseq
        %v1245 = vshrl.u32 %v1244, 7
        %v1246 = vsub.s32 0, %v1245
        %v1247 = vrot.slane %v1243, %v1246
        %v1248 = vmul.f32 %v1241, %v1247
        %v1249 = vmul.f32 %v1242, %v1247
        %1250 = vrot.lane.b32.xlu0 %v1175, 65
        %v1251 = vpop.permute.xlu0 %1250
        %1252 = vrot.lane.b32.xlu0 %v1176, 65
        %v1253 = vpop.permute.xlu0 %1252
        %1256 = vrot.lane.b32.xlu0 %v1175, 1
        %v1257 = vpop.permute.xlu0 %1256
        %1258 = vrot.lane.b32.xlu0 %v1176, 1
        %v1259 = vpop.permute.xlu0 %1258
        %vm1262 = vcmask 7168
        %v1263 = vsel %vm1262, %v1251, %v1257
        %v1264 = vsel %vm1262, %v1253, %v1259
        %v1265 = vld [vmem:[%s5 + $0x3] sm:$0x1]
        %v1266 = vlaneseq
        %v1267 = vshrl.u32 %v1266, 7
        %v1268 = vsub.s32 0, %v1267
        %v1269 = vrot.slane %v1265, %v1268
        %v1270 = vmul.f32 %v1263, %v1269
        %v1271 = vmul.f32 %v1264, %v1269
        %1272 = vrot.lane.b32.xlu0 %v1175, 127
        %v1273 = vpop.permute.xlu0 %1272
        %1274 = vrot.lane.b32.xlu0 %v1176, 127
        %v1275 = vpop.permute.xlu0 %1274
        %1278 = vrot.lane.b32.xlu0 %v1175, 63
        %v1279 = vpop.permute.xlu0 %1278
        %1280 = vrot.lane.b32.xlu0 %v1176, 63
        %v1281 = vpop.permute.xlu0 %1280
        %vm1284 = vcmask 515072
        %v1285 = vsel %vm1284, %v1273, %v1279
        %v1286 = vsel %vm1284, %v1275, %v1281
        %v1287 = vld [vmem:[%s5 + $0x5] sm:$0x1]
        %v1288 = vlaneseq
        %v1289 = vshrl.u32 %v1288, 7
        %v1290 = vsub.s32 0, %v1289
        %v1291 = vrot.slane %v1287, %v1290
        %v1292 = vmul.f32 %v1285, %v1291
        %v1293 = vmul.f32 %v1286, %v1291
        %1294 = vrot.lane.b32.xlu0 %v1175, 121
        %v1295 = vpop.permute.xlu0 %1294
        %1296 = vrot.lane.b32.xlu0 %v1176, 121
        %v1297 = vpop.permute.xlu0 %1296
        %1300 = vrot.lane.b32.xlu0 %v1175, 57
        %v1301 = vpop.permute.xlu0 %1300
        %1302 = vrot.lane.b32.xlu0 %v1176, 57
        %v1303 = vpop.permute.xlu0 %1302
        %vm1306 = vcmask 465920
        %v1307 = vsel %vm1306, %v1295, %v1301
        %v1308 = vsel %vm1306, %v1297, %v1303
        %v1309 = vld [vmem:[%s5 + $0x6] sm:$0x1]
        %v1310 = vlaneseq
        %v1311 = vshrl.u32 %v1310, 7
        %v1312 = vsub.s32 0, %v1311
        %v1313 = vrot.slane %v1309, %v1312
        %v1314 = vmul.f32 %v1307, %v1313
        %v1315 = vmul.f32 %v1308, %v1313
        %1316 = vrot.lane.b32.xlu0 %v1175, 120
        %v1317 = vpop.permute.xlu0 %1316
        %1318 = vrot.lane.b32.xlu0 %v1176, 120
        %v1319 = vpop.permute.xlu0 %1318
        %1322 = vrot.lane.b32.xlu0 %v1175, 56
        %v1323 = vpop.permute.xlu0 %1322
        %1324 = vrot.lane.b32.xlu0 %v1176, 56
        %v1325 = vpop.permute.xlu0 %1324
        %v1328 = vsel %vm1076, %v1317, %v1323
        %v1329 = vsel %vm1076, %v1319, %v1325
        %v1330 = vld [vmem:[%s5 + $0x7] sm:$0x1]
        %v1331 = vlaneseq
        %v1332 = vshrl.u32 %v1331, 7
        %v1333 = vsub.s32 0, %v1332
        %v1334 = vrot.slane %v1330, %v1333
        %v1335 = vmul.f32 %v1328, %v1334
        %v1336 = vmul.f32 %v1329, %v1334
        %1337 = vrot.lane.b32.xlu0 %v1175, 119
        %v1338 = vpop.permute.xlu0 %1337
        %1339 = vrot.lane.b32.xlu0 %v1176, 119
        %v1340 = vpop.permute.xlu0 %1339
        %1343 = vrot.lane.b32.xlu0 %v1175, 55
        %v1344 = vpop.permute.xlu0 %1343
        %1345 = vrot.lane.b32.xlu0 %v1176, 55
        %v1346 = vpop.permute.xlu0 %1345
        %vm1349 = vcmask 449536
        %v1350 = vsel %vm1349, %v1338, %v1344
        %v1351 = vsel %vm1349, %v1340, %v1346
        %v1352 = vld [vmem:[%s5 + $0x8] sm:$0x1]
        %v1353 = vlaneseq
        %v1354 = vshrl.u32 %v1353, 7
        %v1355 = vsub.s32 0, %v1354
        %v1356 = vrot.slane %v1352, %v1355
        %v1357 = vmul.f32 %v1350, %v1356
        %v1358 = vmul.f32 %v1351, %v1356
        %1360 = vset.pattern.permute.xlu0 0
        %1361 = vperm.xlu0 %1360, %v1181
        %v1362 = vpop.permute.xlu0 %1361
        %1365 = vset.pattern.permute.xlu0 0
        %1366 = vperm.xlu0 %1365, %v1182
        %v1367 = vpop.permute.xlu0 %1366
        %v1370 = vsel %vm613, %v1178, 0
        %v1373 = vsel %vm613, %v1180, 0
        %1375 = vmatprep.subr.mxu0 0.0
        %1376 = vmatpush1.msra.mxu0 %v1205
        %1377 = vmatprep.subr.mxu0 0.0
        %1378 = vmatpush1.msra.mxu0 %v1206
        %1379 = vmatprep.subr.mxu0 0.0
        %1380 = vmatpush1.msra.mxu0 %v1226
        %1381 = vmatprep.subr.mxu0 0.0
        %1382 = vmatpush1.msra.mxu0 %v1227
        %1383 = vmatprep.subr.mxu0 0.0
        %1384 = vmatpush1.msra.mxu0 %v1248
        %1385 = vmatprep.subr.mxu0 0.0
        %1386 = vmatpush1.msra.mxu0 %v1249
        %1387 = vmatprep.subr.mxu0 0.0
        %1388 = vmatpush1.msra.mxu0 %v1270
        %1389 = vmatprep.subr.mxu0 0.0
        %1390 = vmatpush1.msra.mxu0 %v1271
        %1391 = vmatprep.subr.mxu0 0.0
        %1392 = vmatpush1.msra.mxu0 %v1175
        %1393 = vmatprep.subr.mxu0 0.0
        %1394 = vmatpush1.msra.mxu0 %v1176
        %1395 = vmatprep.subr.mxu0 0.0
        %1396 = vmatpush1.msra.mxu0 %v1292
        %1397 = vmatprep.subr.mxu0 0.0
        %1398 = vmatpush1.msra.mxu0 %v1293
        %1399 = vmatprep.subr.mxu0 0.0
        %1400 = vmatpush1.msra.mxu0 %v1314
        %1401 = vmatprep.subr.mxu0 0.0
        %1402 = vmatpush1.msra.mxu0 %v1315
        %1403 = vmatprep.subr.mxu0 0.0
        %1404 = vmatpush1.msra.mxu0 %v1335
        %1405 = vmatprep.subr.mxu0 0.0
        %1406 = vmatpush1.msra.mxu0 %v1336
        %1407 = vmatprep.subr.mxu0 0.0
        %1408 = vmatpush1.msra.mxu0 %v1357
        %1409 = vmatprep.subr.mxu0 0.0
        %1410 = vmatpush1.msra.mxu0 %v1358
        %1411 = vmatprep.subr.mxu0 0.0
        %1412 = vmatpush1.msra.mxu0 0.0
        %1413 = vmatprep.subr.mxu0 0.0
        %1414 = vmatpush1.msra.mxu0 0.0
        %1415 = vmatprep.subr.mxu0 0.0
        %1416 = vmatpush1.msra.mxu0 0.0
        %1417 = vmatprep.subr.mxu0 0.0
        %1418 = vmatpush1.msra.mxu0 0.0
        %1419 = vmatprep.subr.mxu0 0.0
        %1420 = vmatpush1.msra.mxu0 0.0
        %1421 = vmatprep.subr.mxu0 0.0
        %1422 = vmatpush1.msra.mxu0 0.0
        %1423 = vmatprep.subr.mxu0 0.0
        %1424 = vmatpush1.msra.mxu0 0.0
        %1425 = vmatprep.subr.mxu0 0.0
        %1426 = vmatpush1.msra.mxu0 0.0
        %1427 = vmatprep.subr.mxu0 0.0
        %1428 = vmatpush1.msra.mxu0 0.0
        %1429 = vmatprep.subr.mxu0 0.0
        %1430 = vmatpush1.msra.mxu0 0.0
        %1431 = vmatprep.subr.mxu0 0.0
        %1432 = vmatpush1.msra.mxu0 0.0
        %1433 = vmatprep.subr.mxu0 0.0
        %1434 = vmatpush1.msra.mxu0 0.0
        %1435 = vmatprep.subr.mxu0 0.0
        %1436 = vmatpush1.msra.mxu0 0.0
        %1437 = vmatprep.subr.mxu0 0.0
        %1438 = vmatpush1.msra.mxu0 0.0
        %1439 = vmatprep.mubr.f32.mxu0 %v1370
        %1440 = vmatmul.mubr.f32.gmra.mrb[0].mxu0 %v1177
        %v1441 = vpop.f32.mrb[0].mxu0
        %v1442 = vadd.f32 %v1362, %v1441
        %v1443 = vpop.f32.mrb[0].mxu0
        %1444 = vmatprep.mubr.f32.mxu0 %v1373
        %1445 = vmatmul.mubr.f32.gmra.mrb[0].mxu0 %v1179
        %v1446 = vpop.f32.mrb[0].mxu0
        %v1447 = vadd.f32 %v1367, %v1446
        %v1448 = vpop.f32.mrb[0].mxu0
        %1449 = vdwg.mxu0
        %v1450 = vmax.f32 %v1442, 0.0
        %v1451 = vmax.f32 %v1447, 0.0
        %s1452 = scalar_lea.vmem %s7, 32
        %v1453 = vld [vmem:[%s1452] sm:$0xff]
        %v1454 = vld [vmem:[%s1452 + $0x8] sm:$0xff]
        %v1455 = vld [vmem:[%s1452 + $0x10] sm:$0xff]
        %v1456 = vld [vmem:[%s1452 + $0x18] sm:$0xff]
        %s1457 = scalar_lea.vmem %s8, 16
        %v1458 = vld [vmem:[%s1457] sm:$0xff]
        %v1459 = vld [vmem:[%s1457 + $0x8] sm:$0xff]
        %1462 = vrot.lane.b32.xlu0 %v1450, 73
        %v1463 = vpop.permute.xlu0 %1462
        %1464 = vrot.lane.b32.xlu0 %v1451, 73
        %v1465 = vpop.permute.xlu0 %1464
        %1468 = vrot.lane.b32.xlu0 %v1450, 9
        %v1469 = vpop.permute.xlu0 %1468
        %1470 = vrot.lane.b32.xlu0 %v1451, 9
        %v1471 = vpop.permute.xlu0 %1470
        %v1474 = vsel %vm1197, %v1463, %v1469
        %v1475 = vsel %vm1197, %v1465, %v1471
        %v1476 = vmul.f32 %v1474, %v1204
        %v1477 = vmul.f32 %v1475, %v1204
        %1478 = vrot.lane.b32.xlu0 %v1450, 72
        %v1479 = vpop.permute.xlu0 %1478
        %1480 = vrot.lane.b32.xlu0 %v1451, 72
        %v1481 = vpop.permute.xlu0 %1480
        %1484 = vrot.lane.b32.xlu0 %v1450, 8
        %v1485 = vpop.permute.xlu0 %1484
        %1486 = vrot.lane.b32.xlu0 %v1451, 8
        %v1487 = vpop.permute.xlu0 %1486
        %v1490 = vsel %vm866, %v1479, %v1485
        %v1491 = vsel %vm866, %v1481, %v1487
        %v1492 = vmul.f32 %v1490, %v1225
        %v1493 = vmul.f32 %v1491, %v1225
        %1494 = vrot.lane.b32.xlu0 %v1450, 71
        %v1495 = vpop.permute.xlu0 %1494
        %1496 = vrot.lane.b32.xlu0 %v1451, 71
        %v1497 = vpop.permute.xlu0 %1496
        %1500 = vrot.lane.b32.xlu0 %v1450, 7
        %v1501 = vpop.permute.xlu0 %1500
        %1502 = vrot.lane.b32.xlu0 %v1451, 7
        %v1503 = vpop.permute.xlu0 %1502
        %v1506 = vsel %vm1240, %v1495, %v1501
        %v1507 = vsel %vm1240, %v1497, %v1503
        %v1508 = vmul.f32 %v1506, %v1247
        %v1509 = vmul.f32 %v1507, %v1247
        %1510 = vrot.lane.b32.xlu0 %v1450, 65
        %v1511 = vpop.permute.xlu0 %1510
        %1512 = vrot.lane.b32.xlu0 %v1451, 65
        %v1513 = vpop.permute.xlu0 %1512
        %1516 = vrot.lane.b32.xlu0 %v1450, 1
        %v1517 = vpop.permute.xlu0 %1516
        %1518 = vrot.lane.b32.xlu0 %v1451, 1
        %v1519 = vpop.permute.xlu0 %1518
        %v1522 = vsel %vm1262, %v1511, %v1517
        %v1523 = vsel %vm1262, %v1513, %v1519
        %v1524 = vmul.f32 %v1522, %v1269
        %v1525 = vmul.f32 %v1523, %v1269
        %1526 = vrot.lane.b32.xlu0 %v1450, 127
        %v1527 = vpop.permute.xlu0 %1526
        %1528 = vrot.lane.b32.xlu0 %v1451, 127
        %v1529 = vpop.permute.xlu0 %1528
        %1532 = vrot.lane.b32.xlu0 %v1450, 63
        %v1533 = vpop.permute.xlu0 %1532
        %1534 = vrot.lane.b32.xlu0 %v1451, 63
        %v1535 = vpop.permute.xlu0 %1534
        %v1538 = vsel %vm1284, %v1527, %v1533
        %v1539 = vsel %vm1284, %v1529, %v1535
        %v1540 = vmul.f32 %v1538, %v1291
        %v1541 = vmul.f32 %v1539, %v1291
        %1542 = vrot.lane.b32.xlu0 %v1450, 121
        %v1543 = vpop.permute.xlu0 %1542
        %1544 = vrot.lane.b32.xlu0 %v1451, 121
        %v1545 = vpop.permute.xlu0 %1544
        %1548 = vrot.lane.b32.xlu0 %v1450, 57
        %v1549 = vpop.permute.xlu0 %1548
        %1550 = vrot.lane.b32.xlu0 %v1451, 57
        %v1551 = vpop.permute.xlu0 %1550
        %v1554 = vsel %vm1306, %v1543, %v1549
        %v1555 = vsel %vm1306, %v1545, %v1551
        %v1556 = vmul.f32 %v1554, %v1313
        %v1557 = vmul.f32 %v1555, %v1313
        %1558 = vrot.lane.b32.xlu0 %v1450, 120
        %v1559 = vpop.permute.xlu0 %1558
        %1560 = vrot.lane.b32.xlu0 %v1451, 120
        %v1561 = vpop.permute.xlu0 %1560
        %1564 = vrot.lane.b32.xlu0 %v1450, 56
        %v1565 = vpop.permute.xlu0 %1564
        %1566 = vrot.lane.b32.xlu0 %v1451, 56
        %v1567 = vpop.permute.xlu0 %1566
        %v1570 = vsel %vm1076, %v1559, %v1565
        %v1571 = vsel %vm1076, %v1561, %v1567
        %v1572 = vmul.f32 %v1570, %v1334
        %v1573 = vmul.f32 %v1571, %v1334
        %1574 = vrot.lane.b32.xlu0 %v1450, 119
        %v1575 = vpop.permute.xlu0 %1574
        %1576 = vrot.lane.b32.xlu0 %v1451, 119
        %v1577 = vpop.permute.xlu0 %1576
        %1580 = vrot.lane.b32.xlu0 %v1450, 55
        %v1581 = vpop.permute.xlu0 %1580
        %1582 = vrot.lane.b32.xlu0 %v1451, 55
        %v1583 = vpop.permute.xlu0 %1582
        %v1586 = vsel %vm1349, %v1575, %v1581
        %v1587 = vsel %vm1349, %v1577, %v1583
        %v1588 = vmul.f32 %v1586, %v1356
        %v1589 = vmul.f32 %v1587, %v1356
        %1591 = vset.pattern.permute.xlu0 0
        %1592 = vperm.xlu0 %1591, %v1458
        %v1593 = vpop.permute.xlu0 %1592
        %1596 = vset.pattern.permute.xlu0 0
        %1597 = vperm.xlu0 %1596, %v1459
        %v1598 = vpop.permute.xlu0 %1597
        %v1601 = vsel %vm613, %v1454, 0
        %v1604 = vsel %vm613, %v1456, 0
        %1606 = vmatprep.subr.mxu0 0.0
        %1607 = vmatpush1.msra.mxu0 %v1476
        %1608 = vmatprep.subr.mxu0 0.0
        %1609 = vmatpush1.msra.mxu0 %v1477
        %1610 = vmatprep.subr.mxu0 0.0
        %1611 = vmatpush1.msra.mxu0 %v1492
        %1612 = vmatprep.subr.mxu0 0.0
        %1613 = vmatpush1.msra.mxu0 %v1493
        %1614 = vmatprep.subr.mxu0 0.0
        %1615 = vmatpush1.msra.mxu0 %v1508
        %1616 = vmatprep.subr.mxu0 0.0
        %1617 = vmatpush1.msra.mxu0 %v1509
        %1618 = vmatprep.subr.mxu0 0.0
        %1619 = vmatpush1.msra.mxu0 %v1524
        %1620 = vmatprep.subr.mxu0 0.0
        %1621 = vmatpush1.msra.mxu0 %v1525
        %1622 = vmatprep.subr.mxu0 0.0
        %1623 = vmatpush1.msra.mxu0 %v1450
        %1624 = vmatprep.subr.mxu0 0.0
        %1625 = vmatpush1.msra.mxu0 %v1451
        %1626 = vmatprep.subr.mxu0 0.0
        %1627 = vmatpush1.msra.mxu0 %v1540
        %1628 = vmatprep.subr.mxu0 0.0
        %1629 = vmatpush1.msra.mxu0 %v1541
        %1630 = vmatprep.subr.mxu0 0.0
        %1631 = vmatpush1.msra.mxu0 %v1556
        %1632 = vmatprep.subr.mxu0 0.0
        %1633 = vmatpush1.msra.mxu0 %v1557
        %1634 = vmatprep.subr.mxu0 0.0
        %1635 = vmatpush1.msra.mxu0 %v1572
        %1636 = vmatprep.subr.mxu0 0.0
        %1637 = vmatpush1.msra.mxu0 %v1573
        %1638 = vmatprep.subr.mxu0 0.0
        %1639 = vmatpush1.msra.mxu0 %v1588
        %1640 = vmatprep.subr.mxu0 0.0
        %1641 = vmatpush1.msra.mxu0 %v1589
        %1642 = vmatprep.subr.mxu0 0.0
        %1643 = vmatpush1.msra.mxu0 0.0
        %1644 = vmatprep.subr.mxu0 0.0
        %1645 = vmatpush1.msra.mxu0 0.0
        %1646 = vmatprep.subr.mxu0 0.0
        %1647 = vmatpush1.msra.mxu0 0.0
        %1648 = vmatprep.subr.mxu0 0.0
        %1649 = vmatpush1.msra.mxu0 0.0
        %1650 = vmatprep.subr.mxu0 0.0
        %1651 = vmatpush1.msra.mxu0 0.0
        %1652 = vmatprep.subr.mxu0 0.0
        %1653 = vmatpush1.msra.mxu0 0.0
        %1654 = vmatprep.subr.mxu0 0.0
        %1655 = vmatpush1.msra.mxu0 0.0
        %1656 = vmatprep.subr.mxu0 0.0
        %1657 = vmatpush1.msra.mxu0 0.0
        %1658 = vmatprep.subr.mxu0 0.0
        %1659 = vmatpush1.msra.mxu0 0.0
        %1660 = vmatprep.subr.mxu0 0.0
        %1661 = vmatpush1.msra.mxu0 0.0
        %1662 = vmatprep.subr.mxu0 0.0
        %1663 = vmatpush1.msra.mxu0 0.0
        %1664 = vmatprep.subr.mxu0 0.0
        %1665 = vmatpush1.msra.mxu0 0.0
        %1666 = vmatprep.subr.mxu0 0.0
        %1667 = vmatpush1.msra.mxu0 0.0
        %1668 = vmatprep.subr.mxu0 0.0
        %1669 = vmatpush1.msra.mxu0 0.0
        %1670 = vmatprep.mubr.f32.mxu0 %v1601
        %1671 = vmatmul.mubr.f32.gmra.mrb[0].mxu0 %v1453
        %v1672 = vpop.f32.mrb[0].mxu0
        %v1673 = vadd.f32 %v1593, %v1672
        %v1674 = vpop.f32.mrb[0].mxu0
        %1675 = vmatprep.mubr.f32.mxu0 %v1604
        %1676 = vmatmul.mubr.f32.gmra.mrb[0].mxu0 %v1455
        %v1677 = vpop.f32.mrb[0].mxu0
        %v1678 = vadd.f32 %v1598, %v1677
        %v1679 = vpop.f32.mrb[0].mxu0
        %1680 = vdwg.mxu0
        %s1681 = scalar_lea.vmem %s7, 64
        %v1682 = vld [vmem:[%s1681] sm:$0xff]
        %v1683 = vld [vmem:[%s1681 + $0x8] sm:$0xff]
        %v1684 = vld [vmem:[%s1681 + $0x10] sm:$0xff]
        %v1685 = vld [vmem:[%s1681 + $0x18] sm:$0xff]
        %s1686 = scalar_lea.vmem %s8, 32
        %v1687 = vld [vmem:[%s1686] sm:$0xff]
        %v1688 = vld [vmem:[%s1686 + $0x8] sm:$0xff]
        %1689 = vrot.lane.b32.xlu0 %v1175, 91
        %v1690 = vpop.permute.xlu0 %1689
        %1691 = vrot.lane.b32.xlu0 %v1176, 91
        %v1692 = vpop.permute.xlu0 %1691
        %1695 = vrot.lane.b32.xlu0 %v1175, 27
        %v1696 = vpop.permute.xlu0 %1695
        %1697 = vrot.lane.b32.xlu0 %v1176, 27
        %v1698 = vpop.permute.xlu0 %1697
        %vm1701 = vcmask 220160
        %v1702 = vsel %vm1701, %v1690, %v1696
        %v1703 = vsel %vm1701, %v1692, %v1698
        %v1704 = vld [vmem:[%s6] sm:$0x1]
        %v1705 = vlaneseq
        %v1706 = vshrl.u32 %v1705, 7
        %v1707 = vsub.s32 0, %v1706
        %v1708 = vrot.slane %v1704, %v1707
        %v1709 = vmul.f32 %v1702, %v1708
        %v1710 = vmul.f32 %v1703, %v1708
        %1711 = vrot.lane.b32.xlu0 %v1175, 88
        %v1712 = vpop.permute.xlu0 %1711
        %1713 = vrot.lane.b32.xlu0 %v1176, 88
        %v1714 = vpop.permute.xlu0 %1713
        %1717 = vrot.lane.b32.xlu0 %v1175, 24
        %v1718 = vpop.permute.xlu0 %1717
        %1719 = vrot.lane.b32.xlu0 %v1176, 24
        %v1720 = vpop.permute.xlu0 %1719
        %v1723 = vsel %vm1068, %v1712, %v1718
        %v1724 = vsel %vm1068, %v1714, %v1720
        %v1725 = vld [vmem:[%s6 + $0x1] sm:$0x1]
        %v1726 = vlaneseq
        %v1727 = vshrl.u32 %v1726, 7
        %v1728 = vsub.s32 0, %v1727
        %v1729 = vrot.slane %v1725, %v1728
        %v1730 = vmul.f32 %v1723, %v1729
        %v1731 = vmul.f32 %v1724, %v1729
        %1732 = vrot.lane.b32.xlu0 %v1175, 85
        %v1733 = vpop.permute.xlu0 %1732
        %1734 = vrot.lane.b32.xlu0 %v1176, 85
        %v1735 = vpop.permute.xlu0 %1734
        %1738 = vrot.lane.b32.xlu0 %v1175, 21
        %v1739 = vpop.permute.xlu0 %1738
        %1740 = vrot.lane.b32.xlu0 %v1176, 21
        %v1741 = vpop.permute.xlu0 %1740
        %vm1744 = vcmask 171008
        %v1745 = vsel %vm1744, %v1733, %v1739
        %v1746 = vsel %vm1744, %v1735, %v1741
        %v1747 = vld [vmem:[%s6 + $0x2] sm:$0x1]
        %v1748 = vlaneseq
        %v1749 = vshrl.u32 %v1748, 7
        %v1750 = vsub.s32 0, %v1749
        %v1751 = vrot.slane %v1747, %v1750
        %v1752 = vmul.f32 %v1745, %v1751
        %v1753 = vmul.f32 %v1746, %v1751
        %1754 = vrot.lane.b32.xlu0 %v1175, 67
        %v1755 = vpop.permute.xlu0 %1754
        %1756 = vrot.lane.b32.xlu0 %v1176, 67
        %v1757 = vpop.permute.xlu0 %1756
        %1760 = vrot.lane.b32.xlu0 %v1175, 3
        %v1761 = vpop.permute.xlu0 %1760
        %1762 = vrot.lane.b32.xlu0 %v1176, 3
        %v1763 = vpop.permute.xlu0 %1762
        %vm1766 = vcmask 23552
        %v1767 = vsel %vm1766, %v1755, %v1761
        %v1768 = vsel %vm1766, %v1757, %v1763
        %v1769 = vld [vmem:[%s6 + $0x3] sm:$0x1]
        %v1770 = vlaneseq
        %v1771 = vshrl.u32 %v1770, 7
        %v1772 = vsub.s32 0, %v1771
        %v1773 = vrot.slane %v1769, %v1772
        %v1774 = vmul.f32 %v1767, %v1773
        %v1775 = vmul.f32 %v1768, %v1773
        %1776 = vrot.lane.b32.xlu0 %v1175, 125
        %v1777 = vpop.permute.xlu0 %1776
        %1778 = vrot.lane.b32.xlu0 %v1176, 125
        %v1779 = vpop.permute.xlu0 %1778
        %1782 = vrot.lane.b32.xlu0 %v1175, 61
        %v1783 = vpop.permute.xlu0 %1782
        %1784 = vrot.lane.b32.xlu0 %v1176, 61
        %v1785 = vpop.permute.xlu0 %1784
        %vm1788 = vcmask 498688
        %v1789 = vsel %vm1788, %v1777, %v1783
        %v1790 = vsel %vm1788, %v1779, %v1785
        %v1791 = vld [vmem:[%s6 + $0x5] sm:$0x1]
        %v1792 = vlaneseq
        %v1793 = vshrl.u32 %v1792, 7
        %v1794 = vsub.s32 0, %v1793
        %v1795 = vrot.slane %v1791, %v1794
        %v1796 = vmul.f32 %v1789, %v1795
        %v1797 = vmul.f32 %v1790, %v1795
        %1798 = vrot.lane.b32.xlu0 %v1175, 107
        %v1799 = vpop.permute.xlu0 %1798
        %1800 = vrot.lane.b32.xlu0 %v1176, 107
        %v1801 = vpop.permute.xlu0 %1800
        %1804 = vrot.lane.b32.xlu0 %v1175, 43
        %v1805 = vpop.permute.xlu0 %1804
        %1806 = vrot.lane.b32.xlu0 %v1176, 43
        %v1807 = vpop.permute.xlu0 %1806
        %vm1810 = vcmask 351232
        %v1811 = vsel %vm1810, %v1799, %v1805
        %v1812 = vsel %vm1810, %v1801, %v1807
        %v1813 = vld [vmem:[%s6 + $0x6] sm:$0x1]
        %v1814 = vlaneseq
        %v1815 = vshrl.u32 %v1814, 7
        %v1816 = vsub.s32 0, %v1815
        %v1817 = vrot.slane %v1813, %v1816
        %v1818 = vmul.f32 %v1811, %v1817
        %v1819 = vmul.f32 %v1812, %v1817
        %1820 = vrot.lane.b32.xlu0 %v1175, 104
        %v1821 = vpop.permute.xlu0 %1820
        %1822 = vrot.lane.b32.xlu0 %v1176, 104
        %v1823 = vpop.permute.xlu0 %1822
        %1826 = vrot.lane.b32.xlu0 %v1175, 40
        %v1827 = vpop.permute.xlu0 %1826
        %1828 = vrot.lane.b32.xlu0 %v1176, 40
        %v1829 = vpop.permute.xlu0 %1828
        %v1832 = vsel %vm1072, %v1821, %v1827
        %v1833 = vsel %vm1072, %v1823, %v1829
        %v1834 = vld [vmem:[%s6 + $0x7] sm:$0x1]
        %v1835 = vlaneseq
        %v1836 = vshrl.u32 %v1835, 7
        %v1837 = vsub.s32 0, %v1836
        %v1838 = vrot.slane %v1834, %v1837
        %v1839 = vmul.f32 %v1832, %v1838
        %v1840 = vmul.f32 %v1833, %v1838
        %1841 = vrot.lane.b32.xlu0 %v1175, 101
        %v1842 = vpop.permute.xlu0 %1841
        %1843 = vrot.lane.b32.xlu0 %v1176, 101
        %v1844 = vpop.permute.xlu0 %1843
        %1847 = vrot.lane.b32.xlu0 %v1175, 37
        %v1848 = vpop.permute.xlu0 %1847
        %1849 = vrot.lane.b32.xlu0 %v1176, 37
        %v1850 = vpop.permute.xlu0 %1849
        %vm1853 = vcmask 302080
        %v1854 = vsel %vm1853, %v1842, %v1848
        %v1855 = vsel %vm1853, %v1844, %v1850
        %v1856 = vld [vmem:[%s6 + $0x8] sm:$0x1]
        %v1857 = vlaneseq
        %v1858 = vshrl.u32 %v1857, 7
        %v1859 = vsub.s32 0, %v1858
        %v1860 = vrot.slane %v1856, %v1859
        %v1861 = vmul.f32 %v1854, %v1860
        %v1862 = vmul.f32 %v1855, %v1860
        %1864 = vset.pattern.permute.xlu0 0
        %1865 = vperm.xlu0 %1864, %v1687
        %v1866 = vpop.permute.xlu0 %1865
        %1869 = vset.pattern.permute.xlu0 0
        %1870 = vperm.xlu0 %1869, %v1688
        %v1871 = vpop.permute.xlu0 %1870
        %v1874 = vsel %vm613, %v1683, 0
        %v1877 = vsel %vm613, %v1685, 0
        %1879 = vmatprep.subr.mxu0 0.0
        %1880 = vmatpush1.msra.mxu0 %v1709
        %1881 = vmatprep.subr.mxu0 0.0
        %1882 = vmatpush1.msra.mxu0 %v1710
        %1883 = vmatprep.subr.mxu0 0.0
        %1884 = vmatpush1.msra.mxu0 %v1730
        %1885 = vmatprep.subr.mxu0 0.0
        %1886 = vmatpush1.msra.mxu0 %v1731
        %1887 = vmatprep.subr.mxu0 0.0
        %1888 = vmatpush1.msra.mxu0 %v1752
        %1889 = vmatprep.subr.mxu0 0.0
        %1890 = vmatpush1.msra.mxu0 %v1753
        %1891 = vmatprep.subr.mxu0 0.0
        %1892 = vmatpush1.msra.mxu0 %v1774
        %1893 = vmatprep.subr.mxu0 0.0
        %1894 = vmatpush1.msra.mxu0 %v1775
        %1895 = vmatprep.subr.mxu0 0.0
        %1896 = vmatpush1.msra.mxu0 %v1175
        %1897 = vmatprep.subr.mxu0 0.0
        %1898 = vmatpush1.msra.mxu0 %v1176
        %1899 = vmatprep.subr.mxu0 0.0
        %1900 = vmatpush1.msra.mxu0 %v1796
        %1901 = vmatprep.subr.mxu0 0.0
        %1902 = vmatpush1.msra.mxu0 %v1797
        %1903 = vmatprep.subr.mxu0 0.0
        %1904 = vmatpush1.msra.mxu0 %v1818
        %1905 = vmatprep.subr.mxu0 0.0
        %1906 = vmatpush1.msra.mxu0 %v1819
        %1907 = vmatprep.subr.mxu0 0.0
        %1908 = vmatpush1.msra.mxu0 %v1839
        %1909 = vmatprep.subr.mxu0 0.0
        %1910 = vmatpush1.msra.mxu0 %v1840
        %1911 = vmatprep.subr.mxu0 0.0
        %1912 = vmatpush1.msra.mxu0 %v1861
        %1913 = vmatprep.subr.mxu0 0.0
        %1914 = vmatpush1.msra.mxu0 %v1862
        %1915 = vmatprep.subr.mxu0 0.0
        %1916 = vmatpush1.msra.mxu0 0.0
        %1917 = vmatprep.subr.mxu0 0.0
        %1918 = vmatpush1.msra.mxu0 0.0
        %1919 = vmatprep.subr.mxu0 0.0
        %1920 = vmatpush1.msra.mxu0 0.0
        %1921 = vmatprep.subr.mxu0 0.0
        %1922 = vmatpush1.msra.mxu0 0.0
        %1923 = vmatprep.subr.mxu0 0.0
        %1924 = vmatpush1.msra.mxu0 0.0
        %1925 = vmatprep.subr.mxu0 0.0
        %1926 = vmatpush1.msra.mxu0 0.0
        %1927 = vmatprep.subr.mxu0 0.0
        %1928 = vmatpush1.msra.mxu0 0.0
        %1929 = vmatprep.subr.mxu0 0.0
        %1930 = vmatpush1.msra.mxu0 0.0
        %1931 = vmatprep.subr.mxu0 0.0
        %1932 = vmatpush1.msra.mxu0 0.0
        %1933 = vmatprep.subr.mxu0 0.0
        %1934 = vmatpush1.msra.mxu0 0.0
        %1935 = vmatprep.subr.mxu0 0.0
        %1936 = vmatpush1.msra.mxu0 0.0
        %1937 = vmatprep.subr.mxu0 0.0
        %1938 = vmatpush1.msra.mxu0 0.0
        %1939 = vmatprep.subr.mxu0 0.0
        %1940 = vmatpush1.msra.mxu0 0.0
        %1941 = vmatprep.subr.mxu0 0.0
        %1942 = vmatpush1.msra.mxu0 0.0
        %1943 = vmatprep.mubr.f32.mxu0 %v1874
        %1944 = vmatmul.mubr.f32.gmra.mrb[0].mxu0 %v1682
        %v1945 = vpop.f32.mrb[0].mxu0
        %v1946 = vadd.f32 %v1866, %v1945
        %v1947 = vpop.f32.mrb[0].mxu0
        %1948 = vmatprep.mubr.f32.mxu0 %v1877
        %1949 = vmatmul.mubr.f32.gmra.mrb[0].mxu0 %v1684
        %v1950 = vpop.f32.mrb[0].mxu0
        %v1951 = vadd.f32 %v1871, %v1950
        %v1952 = vpop.f32.mrb[0].mxu0
        %1953 = vdwg.mxu0
        %v1954 = vmax.f32 %v1946, 0.0
        %v1955 = vmax.f32 %v1951, 0.0
        %s1956 = scalar_lea.vmem %s7, 96
        %v1957 = vld [vmem:[%s1956] sm:$0xff]
        %v1958 = vld [vmem:[%s1956 + $0x8] sm:$0xff]
        %v1959 = vld [vmem:[%s1956 + $0x10] sm:$0xff]
        %v1960 = vld [vmem:[%s1956 + $0x18] sm:$0xff]
        %s1961 = scalar_lea.vmem %s8, 48
        %v1962 = vld [vmem:[%s1961] sm:$0xff]
        %v1963 = vld [vmem:[%s1961 + $0x8] sm:$0xff]
        %1966 = vrot.lane.b32.xlu0 %v1954, 91
        %v1967 = vpop.permute.xlu0 %1966
        %1968 = vrot.lane.b32.xlu0 %v1955, 91
        %v1969 = vpop.permute.xlu0 %1968
        %1972 = vrot.lane.b32.xlu0 %v1954, 27
        %v1973 = vpop.permute.xlu0 %1972
        %1974 = vrot.lane.b32.xlu0 %v1955, 27
        %v1975 = vpop.permute.xlu0 %1974
        %v1978 = vsel %vm1701, %v1967, %v1973
        %v1979 = vsel %vm1701, %v1969, %v1975
        %v1980 = vmul.f32 %v1978, %v1708
        %v1981 = vmul.f32 %v1979, %v1708
        %1982 = vrot.lane.b32.xlu0 %v1954, 88
        %v1983 = vpop.permute.xlu0 %1982
        %1984 = vrot.lane.b32.xlu0 %v1955, 88
        %v1985 = vpop.permute.xlu0 %1984
        %1988 = vrot.lane.b32.xlu0 %v1954, 24
        %v1989 = vpop.permute.xlu0 %1988
        %1990 = vrot.lane.b32.xlu0 %v1955, 24
        %v1991 = vpop.permute.xlu0 %1990
        %v1994 = vsel %vm1068, %v1983, %v1989
        %v1995 = vsel %vm1068, %v1985, %v1991
        %v1996 = vmul.f32 %v1994, %v1729
        %v1997 = vmul.f32 %v1995, %v1729
        %1998 = vrot.lane.b32.xlu0 %v1954, 85
        %v1999 = vpop.permute.xlu0 %1998
        %2000 = vrot.lane.b32.xlu0 %v1955, 85
        %v2001 = vpop.permute.xlu0 %2000
        %2004 = vrot.lane.b32.xlu0 %v1954, 21
        %v2005 = vpop.permute.xlu0 %2004
        %2006 = vrot.lane.b32.xlu0 %v1955, 21
        %v2007 = vpop.permute.xlu0 %2006
        %v2010 = vsel %vm1744, %v1999, %v2005
        %v2011 = vsel %vm1744, %v2001, %v2007
        %v2012 = vmul.f32 %v2010, %v1751
        %v2013 = vmul.f32 %v2011, %v1751
        %2014 = vrot.lane.b32.xlu0 %v1954, 67
        %v2015 = vpop.permute.xlu0 %2014
        %2016 = vrot.lane.b32.xlu0 %v1955, 67
        %v2017 = vpop.permute.xlu0 %2016
        %2020 = vrot.lane.b32.xlu0 %v1954, 3
        %v2021 = vpop.permute.xlu0 %2020
        %2022 = vrot.lane.b32.xlu0 %v1955, 3
        %v2023 = vpop.permute.xlu0 %2022
        %v2026 = vsel %vm1766, %v2015, %v2021
        %v2027 = vsel %vm1766, %v2017, %v2023
        %v2028 = vmul.f32 %v2026, %v1773
        %v2029 = vmul.f32 %v2027, %v1773
        %2030 = vrot.lane.b32.xlu0 %v1954, 125
        %v2031 = vpop.permute.xlu0 %2030
        %2032 = vrot.lane.b32.xlu0 %v1955, 125
        %v2033 = vpop.permute.xlu0 %2032
        %2036 = vrot.lane.b32.xlu0 %v1954, 61
        %v2037 = vpop.permute.xlu0 %2036
        %2038 = vrot.lane.b32.xlu0 %v1955, 61
        %v2039 = vpop.permute.xlu0 %2038
        %v2042 = vsel %vm1788, %v2031, %v2037
        %v2043 = vsel %vm1788, %v2033, %v2039
        %v2044 = vmul.f32 %v2042, %v1795
        %v2045 = vmul.f32 %v2043, %v1795
        %2046 = vrot.lane.b32.xlu0 %v1954, 107
        %v2047 = vpop.permute.xlu0 %2046
        %2048 = vrot.lane.b32.xlu0 %v1955, 107
        %v2049 = vpop.permute.xlu0 %2048
        %2052 = vrot.lane.b32.xlu0 %v1954, 43
        %v2053 = vpop.permute.xlu0 %2052
        %2054 = vrot.lane.b32.xlu0 %v1955, 43
        %v2055 = vpop.permute.xlu0 %2054
        %v2058 = vsel %vm1810, %v2047, %v2053
        %v2059 = vsel %vm1810, %v2049, %v2055
        %v2060 = vmul.f32 %v2058, %v1817
        %v2061 = vmul.f32 %v2059, %v1817
        %2062 = vrot.lane.b32.xlu0 %v1954, 104
        %v2063 = vpop.permute.xlu0 %2062
        %2064 = vrot.lane.b32.xlu0 %v1955, 104
        %v2065 = vpop.permute.xlu0 %2064
        %2068 = vrot.lane.b32.xlu0 %v1954, 40
        %v2069 = vpop.permute.xlu0 %2068
        %2070 = vrot.lane.b32.xlu0 %v1955, 40
        %v2071 = vpop.permute.xlu0 %2070
        %v2074 = vsel %vm1072, %v2063, %v2069
        %v2075 = vsel %vm1072, %v2065, %v2071
        %v2076 = vmul.f32 %v2074, %v1838
        %v2077 = vmul.f32 %v2075, %v1838
        %2078 = vrot.lane.b32.xlu0 %v1954, 101
        %v2079 = vpop.permute.xlu0 %2078
        %2080 = vrot.lane.b32.xlu0 %v1955, 101
        %v2081 = vpop.permute.xlu0 %2080
        %2084 = vrot.lane.b32.xlu0 %v1954, 37
        %v2085 = vpop.permute.xlu0 %2084
        %2086 = vrot.lane.b32.xlu0 %v1955, 37
        %v2087 = vpop.permute.xlu0 %2086
        %v2090 = vsel %vm1853, %v2079, %v2085
        %v2091 = vsel %vm1853, %v2081, %v2087
        %v2092 = vmul.f32 %v2090, %v1860
        %v2093 = vmul.f32 %v2091, %v1860
        %2095 = vset.pattern.permute.xlu0 0
        %2096 = vperm.xlu0 %2095, %v1962
        %v2097 = vpop.permute.xlu0 %2096
        %2100 = vset.pattern.permute.xlu0 0
        %2101 = vperm.xlu0 %2100, %v1963
        %v2102 = vpop.permute.xlu0 %2101
        %v2105 = vsel %vm613, %v1958, 0
        %v2108 = vsel %vm613, %v1960, 0
        %2110 = vmatprep.subr.mxu0 0.0
        %2111 = vmatpush1.msra.mxu0 %v1980
        %2112 = vmatprep.subr.mxu0 0.0
        %2113 = vmatpush1.msra.mxu0 %v1981
        %2114 = vmatprep.subr.mxu0 0.0
        %2115 = vmatpush1.msra.mxu0 %v1996
        %2116 = vmatprep.subr.mxu0 0.0
        %2117 = vmatpush1.msra.mxu0 %v1997
        %2118 = vmatprep.subr.mxu0 0.0
        %2119 = vmatpush1.msra.mxu0 %v2012
        %2120 = vmatprep.subr.mxu0 0.0
        %2121 = vmatpush1.msra.mxu0 %v2013
        %2122 = vmatprep.subr.mxu0 0.0
        %2123 = vmatpush1.msra.mxu0 %v2028
        %2124 = vmatprep.subr.mxu0 0.0
        %2125 = vmatpush1.msra.mxu0 %v2029
        %2126 = vmatprep.subr.mxu0 0.0
        %2127 = vmatpush1.msra.mxu0 %v1954
        %2128 = vmatprep.subr.mxu0 0.0
        %2129 = vmatpush1.msra.mxu0 %v1955
        %2130 = vmatprep.subr.mxu0 0.0
        %2131 = vmatpush1.msra.mxu0 %v2044
        %2132 = vmatprep.subr.mxu0 0.0
        %2133 = vmatpush1.msra.mxu0 %v2045
        %2134 = vmatprep.subr.mxu0 0.0
        %2135 = vmatpush1.msra.mxu0 %v2060
        %2136 = vmatprep.subr.mxu0 0.0
        %2137 = vmatpush1.msra.mxu0 %v2061
        %2138 = vmatprep.subr.mxu0 0.0
        %2139 = vmatpush1.msra.mxu0 %v2076
        %2140 = vmatprep.subr.mxu0 0.0
        %2141 = vmatpush1.msra.mxu0 %v2077
        %2142 = vmatprep.subr.mxu0 0.0
        %2143 = vmatpush1.msra.mxu0 %v2092
        %2144 = vmatprep.subr.mxu0 0.0
        %2145 = vmatpush1.msra.mxu0 %v2093
        %2146 = vmatprep.subr.mxu0 0.0
        %2147 = vmatpush1.msra.mxu0 0.0
        %2148 = vmatprep.subr.mxu0 0.0
        %2149 = vmatpush1.msra.mxu0 0.0
        %2150 = vmatprep.subr.mxu0 0.0
        %2151 = vmatpush1.msra.mxu0 0.0
        %2152 = vmatprep.subr.mxu0 0.0
        %2153 = vmatpush1.msra.mxu0 0.0
        %2154 = vmatprep.subr.mxu0 0.0
        %2155 = vmatpush1.msra.mxu0 0.0
        %2156 = vmatprep.subr.mxu0 0.0
        %2157 = vmatpush1.msra.mxu0 0.0
        %2158 = vmatprep.subr.mxu0 0.0
        %2159 = vmatpush1.msra.mxu0 0.0
        %2160 = vmatprep.subr.mxu0 0.0
        %2161 = vmatpush1.msra.mxu0 0.0
        %2162 = vmatprep.subr.mxu0 0.0
        %2163 = vmatpush1.msra.mxu0 0.0
        %2164 = vmatprep.subr.mxu0 0.0
        %2165 = vmatpush1.msra.mxu0 0.0
        %2166 = vmatprep.subr.mxu0 0.0
        %2167 = vmatpush1.msra.mxu0 0.0
        %2168 = vmatprep.subr.mxu0 0.0
        %2169 = vmatpush1.msra.mxu0 0.0
        %2170 = vmatprep.subr.mxu0 0.0
        %2171 = vmatpush1.msra.mxu0 0.0
        %2172 = vmatprep.subr.mxu0 0.0
        %2173 = vmatpush1.msra.mxu0 0.0
        %2174 = vmatprep.mubr.f32.mxu0 %v2105
        %2175 = vmatmul.mubr.f32.gmra.mrb[0].mxu0 %v1957
        %v2176 = vpop.f32.mrb[0].mxu0
        %v2177 = vadd.f32 %v2097, %v2176
        %v2178 = vpop.f32.mrb[0].mxu0
        %2179 = vmatprep.mubr.f32.mxu0 %v2108
        %2180 = vmatmul.mubr.f32.gmra.mrb[0].mxu0 %v1959
        %v2181 = vpop.f32.mrb[0].mxu0
        %v2182 = vadd.f32 %v2102, %v2181
        %v2183 = vpop.f32.mrb[0].mxu0
        %2184 = vdwg.mxu0
        %v2185 = vld [vmem:[%s9] sm:$0xff]
        %v2186 = vld [vmem:[%s9 + $0x8] sm:$0xff]
        %v2187 = vld [vmem:[%s10] sm:$0xff]
        %v2188 = vld [vmem:[%s10 + $0x8] sm:$0xff]
        %2190 = vset.pattern.permute.xlu0 0
        %2191 = vperm.xlu0 %2190, %v2187
        %v2192 = vpop.permute.xlu0 %2191
        %2195 = vset.pattern.permute.xlu0 0
        %2196 = vperm.xlu0 %2195, %v2188
        %v2197 = vpop.permute.xlu0 %2196
        %vm2199 = vcmask 654336
        %v2201 = vsel %vm2199, %v2185, 0
        %v2204 = vsel %vm2199, %v2186, 0
        %2206 = vmatprep.subr.mxu0 0.0
        %2207 = vmatpush1.msra.mxu0 %v1173
        %2208 = vmatprep.subr.mxu0 0.0
        %2209 = vmatpush1.msra.mxu0 %v1174
        %2210 = vmatprep.subr.mxu0 0.0
        %2211 = vmatpush1.msra.mxu0 %v1442
        %2212 = vmatprep.subr.mxu0 0.0
        %2213 = vmatpush1.msra.mxu0 %v1447
        %2214 = vmatprep.subr.mxu0 0.0
        %2215 = vmatpush1.msra.mxu0 %v1673
        %2216 = vmatprep.subr.mxu0 0.0
        %2217 = vmatpush1.msra.mxu0 %v1678
        %2218 = vmatprep.subr.mxu0 0.0
        %2219 = vmatpush1.msra.mxu0 %v1946
        %2220 = vmatprep.subr.mxu0 0.0
        %2221 = vmatpush1.msra.mxu0 %v1951
        %2222 = vmatprep.subr.mxu0 0.0
        %2223 = vmatpush1.msra.mxu0 %v2177
        %2224 = vmatprep.subr.mxu0 0.0
        %2225 = vmatpush1.msra.mxu0 %v2182
        %2226 = vmatprep.subr.mxu0 0.0
        %2227 = vmatpush1.msra.mxu0 0.0
        %2228 = vmatprep.subr.mxu0 0.0
        %2229 = vmatpush1.msra.mxu0 0.0
        %2230 = vmatprep.subr.mxu0 0.0
        %2231 = vmatpush1.msra.mxu0 0.0
        %2232 = vmatprep.subr.mxu0 0.0
        %2233 = vmatpush1.msra.mxu0 0.0
        %2234 = vmatprep.subr.mxu0 0.0
        %2235 = vmatpush1.msra.mxu0 0.0
        %2236 = vmatprep.subr.mxu0 0.0
        %2237 = vmatpush1.msra.mxu0 0.0
        %2238 = vmatprep.subr.mxu0 0.0
        %2239 = vmatpush1.msra.mxu0 0.0
        %2240 = vmatprep.subr.mxu0 0.0
        %2241 = vmatpush1.msra.mxu0 0.0
        %2242 = vmatprep.subr.mxu0 0.0
        %2243 = vmatpush1.msra.mxu0 0.0
        %2244 = vmatprep.subr.mxu0 0.0
        %2245 = vmatpush1.msra.mxu0 0.0
        %2246 = vmatprep.subr.mxu0 0.0
        %2247 = vmatpush1.msra.mxu0 0.0
        %2248 = vmatprep.subr.mxu0 0.0
        %2249 = vmatpush1.msra.mxu0 0.0
        %2250 = vmatprep.subr.mxu0 0.0
        %2251 = vmatpush1.msra.mxu0 0.0
        %2252 = vmatprep.subr.mxu0 0.0
        %2253 = vmatpush1.msra.mxu0 0.0
        %2254 = vmatprep.subr.mxu0 0.0
        %2255 = vmatpush1.msra.mxu0 0.0
        %2256 = vmatprep.subr.mxu0 0.0
        %2257 = vmatpush1.msra.mxu0 0.0
        %2258 = vmatprep.subr.mxu0 0.0
        %2259 = vmatpush1.msra.mxu0 0.0
        %2260 = vmatprep.subr.mxu0 0.0
        %2261 = vmatpush1.msra.mxu0 0.0
        %2262 = vmatprep.subr.mxu0 0.0
        %2263 = vmatpush1.msra.mxu0 0.0
        %2264 = vmatprep.subr.mxu0 0.0
        %2265 = vmatpush1.msra.mxu0 0.0
        %2266 = vmatprep.subr.mxu0 0.0
        %2267 = vmatpush1.msra.mxu0 0.0
        %2268 = vmatprep.subr.mxu0 0.0
        %2269 = vmatpush1.msra.mxu0 0.0
        %2270 = vmatprep.mubr.f32.mxu0 0.0
        %2271 = vmatmul.mubr.f32.gmra.mrb[0].mxu0 %v2201
        %v2272 = vpop.f32.mrb[0].mxu0
        %v2273 = vadd.f32 %v2192, %v2272
        %v2274 = vpop.f32.mrb[0].mxu0
        %2275 = vmatprep.mubr.f32.mxu0 0.0
        %2276 = vmatmul.mubr.f32.gmra.mrb[0].mxu0 %v2204
        %v2277 = vpop.f32.mrb[0].mxu0
        %v2278 = vadd.f32 %v2197, %v2277
        %v2279 = vpop.f32.mrb[0].mxu0
        %2280 = vdwg.mxu0
        %v2281 = vmax.f32 %v2273, 0.0
        %v2282 = vmax.f32 %v2278, 0.0
        %v2283 = vld [vmem:[%s11] sm:$0xff]
        %v2284 = vld [vmem:[%s11 + $0x8] sm:$0xf]
        %v2285 = vld [vmem:[%s12] sm:$0xff]
        %v2286 = vld [vmem:[%s12 + $0x8] sm:$0xf]
        %2288 = vset.pattern.permute.xlu0 0
        %2289 = vperm.xlu0 %2288, %v2285
        %v2290 = vpop.permute.xlu0 %2289
        %2293 = vset.pattern.permute.xlu0 0
        %2294 = vperm.xlu0 %2293, %v2286
        %v2295 = vpop.permute.xlu0 %2294
        %v2298 = vsel %vm613, %v2283, 0
        %v2301 = vsel %vm613, %v2284, 0
        %2303 = vmatprep.subr.mxu0 0.0
        %2304 = vmatpush1.msra.mxu0 %v2281
        %2305 = vmatprep.subr.mxu0 0.0
        %2306 = vmatpush1.msra.mxu0 %v2282
        %2307 = vmatprep.subr.mxu0 0.0
        %2308 = vmatpush1.msra.mxu0 0.0
        %2309 = vmatprep.subr.mxu0 0.0
        %2310 = vmatpush1.msra.mxu0 0.0
        %2311 = vmatprep.subr.mxu0 0.0
        %2312 = vmatpush1.msra.mxu0 0.0
        %2313 = vmatprep.subr.mxu0 0.0
        %2314 = vmatpush1.msra.mxu0 0.0
        %2315 = vmatprep.subr.mxu0 0.0
        %2316 = vmatpush1.msra.mxu0 0.0
        %2317 = vmatprep.subr.mxu0 0.0
        %2318 = vmatpush1.msra.mxu0 0.0
        %2319 = vmatprep.subr.mxu0 0.0
        %2320 = vmatpush1.msra.mxu0 0.0
        %2321 = vmatprep.subr.mxu0 0.0
        %2322 = vmatpush1.msra.mxu0 0.0
        %2323 = vmatprep.subr.mxu0 0.0
        %2324 = vmatpush1.msra.mxu0 0.0
        %2325 = vmatprep.subr.mxu0 0.0
        %2326 = vmatpush1.msra.mxu0 0.0
        %2327 = vmatprep.subr.mxu0 0.0
        %2328 = vmatpush1.msra.mxu0 0.0
        %2329 = vmatprep.subr.mxu0 0.0
        %2330 = vmatpush1.msra.mxu0 0.0
        %2331 = vmatprep.subr.mxu0 0.0
        %2332 = vmatpush1.msra.mxu0 0.0
        %2333 = vmatprep.subr.mxu0 0.0
        %2334 = vmatpush1.msra.mxu0 0.0
        %2335 = vmatprep.subr.mxu0 0.0
        %2336 = vmatpush1.msra.mxu0 0.0
        %2337 = vmatprep.subr.mxu0 0.0
        %2338 = vmatpush1.msra.mxu0 0.0
        %2339 = vmatprep.subr.mxu0 0.0
        %2340 = vmatpush1.msra.mxu0 0.0
        %2341 = vmatprep.subr.mxu0 0.0
        %2342 = vmatpush1.msra.mxu0 0.0
        %2343 = vmatprep.subr.mxu0 0.0
        %2344 = vmatpush1.msra.mxu0 0.0
        %2345 = vmatprep.subr.mxu0 0.0
        %2346 = vmatpush1.msra.mxu0 0.0
        %2347 = vmatprep.subr.mxu0 0.0
        %2348 = vmatpush1.msra.mxu0 0.0
        %2349 = vmatprep.subr.mxu0 0.0
        %2350 = vmatpush1.msra.mxu0 0.0
        %2351 = vmatprep.subr.mxu0 0.0
        %2352 = vmatpush1.msra.mxu0 0.0
        %2353 = vmatprep.subr.mxu0 0.0
        %2354 = vmatpush1.msra.mxu0 0.0
        %2355 = vmatprep.subr.mxu0 0.0
        %2356 = vmatpush1.msra.mxu0 0.0
        %2357 = vmatprep.subr.mxu0 0.0
        %2358 = vmatpush1.msra.mxu0 0.0
        %2359 = vmatprep.subr.mxu0 0.0
        %2360 = vmatpush1.msra.mxu0 0.0
        %2361 = vmatprep.subr.mxu0 0.0
        %2362 = vmatpush1.msra.mxu0 0.0
        %2363 = vmatprep.subr.mxu0 0.0
        %2364 = vmatpush1.msra.mxu0 0.0
        %2365 = vmatprep.subr.mxu0 0.0
        %2366 = vmatpush1.msra.mxu0 0.0
        %2367 = vmatprep.mubr.f32.mxu0 0.0
        %2368 = vmatmul.mubr.f32.gmra.mrb[0].mxu0 %v2298
        %v2369 = vpop.f32.mrb[0].mxu0
        %v2370 = vadd.f32 %v2290, %v2369
        %v2371 = vpop.f32.mrb[0].mxu0
        %2372 = vmatprep.mubr.f32.mxu0 0.0
        %2373 = vmatmul.mubr.f32.gmra.mrb[0].mxu0 %v2301
        %v2374 = vpop.f32.mrb[0].mxu0
        %v2375 = vadd.f32 %v2295, %v2374
        %v2376 = vpop.f32.mrb[0].mxu0
        %2377 = vdwg.mxu0
        %v2379 = vsel %vm703, %v2370, 0
        %v2382 = vsel %vm703, %v2375, 0
        %2384 = vmatprep.subr.mxu0 0.0
        %2385 = vmatpush1.xpose.msra.mxu0 %v2382
        %2386 = vmatprep.subr.mxu0 0.0
        %2387 = vmatpush1.xpose.msra.mxu0 0.0
        %2388 = vmatprep.subr.mxu0 0.0
        %2389 = vmatpush1.xpose.msra.mxu0 0.0
        %2390 = vmatprep.subr.mxu0 0.0
        %2391 = vmatpush1.xpose.msra.mxu0 0.0
        %2392 = vmatprep.subr.mxu0 0.0
        %2393 = vmatpush1.xpose.msra.mxu0 0.0
        %2394 = vmatprep.subr.mxu0 0.0
        %2395 = vmatpush1.xpose.msra.mxu0 0.0
        %2396 = vmatprep.subr.mxu0 0.0
        %2397 = vmatpush1.xpose.msra.mxu0 0.0
        %2398 = vmatprep.subr.mxu0 0.0
        %2399 = vmatpush1.xpose.msra.mxu0 0.0
        %2400 = vmatprep.subr.mxu0 0.0
        %2401 = vmatpush1.xpose.msra.mxu0 0.0
        %2402 = vmatprep.subr.mxu0 0.0
        %2403 = vmatpush1.xpose.msra.mxu0 0.0
        %2404 = vmatprep.subr.mxu0 0.0
        %2405 = vmatpush1.xpose.msra.mxu0 0.0
        %2406 = vmatprep.subr.mxu0 0.0
        %2407 = vmatpush1.xpose.msra.mxu0 0.0
        %2408 = vmatprep.subr.mxu0 0.0
        %2409 = vmatpush1.xpose.msra.mxu0 0.0
        %2410 = vmatprep.subr.mxu0 0.0
        %2411 = vmatpush1.xpose.msra.mxu0 0.0
        %2412 = vmatprep.subr.mxu0 0.0
        %2413 = vmatpush1.xpose.msra.mxu0 0.0
        %2414 = vmatprep.subr.mxu0 0.0
        %2415 = vmatpush1.xpose.msra.mxu0 0.0
        %2416 = vmatprep.subr.mxu0 0.0
        %2417 = vmatpush1.xpose.msra.mxu0 0.0
        %2418 = vmatprep.subr.mxu0 0.0
        %2419 = vmatpush1.xpose.msra.mxu0 0.0
        %2420 = vmatprep.subr.mxu0 0.0
        %2421 = vmatpush1.xpose.msra.mxu0 0.0
        %2422 = vmatprep.subr.mxu0 0.0
        %2423 = vmatpush1.xpose.msra.mxu0 0.0
        %2424 = vmatprep.subr.mxu0 0.0
        %2425 = vmatpush1.xpose.msra.mxu0 0.0
        %2426 = vmatprep.subr.mxu0 0.0
        %2427 = vmatpush1.xpose.msra.mxu0 0.0
        %2428 = vmatprep.subr.mxu0 0.0
        %2429 = vmatpush1.xpose.msra.mxu0 0.0
        %2430 = vmatprep.subr.mxu0 0.0
        %2431 = vmatpush1.xpose.msra.mxu0 0.0
        %2432 = vmatprep.subr.mxu0 0.0
        %2433 = vmatpush1.xpose.msra.mxu0 0.0
        %2434 = vmatprep.subr.mxu0 0.0
        %2435 = vmatpush1.xpose.msra.mxu0 0.0
        %2436 = vmatprep.subr.mxu0 0.0
        %2437 = vmatpush1.xpose.msra.mxu0 0.0
        %2438 = vmatprep.subr.mxu0 0.0
        %2439 = vmatpush1.xpose.msra.mxu0 0.0
        %2440 = vmatprep.subr.mxu0 0.0
        %2441 = vmatpush1.xpose.msra.mxu0 0.0
        %2442 = vmatprep.subr.mxu0 0.0
        %2443 = vmatpush1.xpose.msra.mxu0 0.0
        %2444 = vmatprep.subr.mxu0 0.0
        %2445 = vmatpush1.xpose.msra.mxu0 0.0
        %2446 = vmatprep.subr.mxu0 0.0
        %2447 = vmatpush1.xpose.msra.mxu0 0.0
        %2448 = vmatprep.mubr.f32.mxu0 0.0
        %2449 = vmatmul.mubr.f32.gmra.mrb[0].mxu0 %v2379
        %v2450 = vpop.f32.mrb[0].mxu0
        %v2451 = vadd.f32 0.0, %v2450
        %v2452 = vpop.f32.mrb[0].mxu0
        %2453 = vdwg.mxu0
        %vm2454 = vcmask 31744
        %v2455 = vsel %vm2454, %v2451, -inf
        %2456 = vmax.xlane.f32.xlu0 %v2455
        %v2457 = vpop.xlane.xlu0 %2456
        %v2458 = vrot.slane %v2457, 4
        %v2459 = vmax.f32 %v2457, %v2458
        %v2460 = vrot.slane %v2459, 2
        %v2461 = vmax.f32 %v2459, %v2460
        %v2462 = vrot.slane %v2461, 1
        %v2463 = vmax.f32 %v2461, %v2462
        %s2464 = vtos %v2463
        %v2465 = vstv %s2464
        %v2466 = vsub.f32 %v2451, %v2465
        %v2467 = vmul.f32 %v2466, 1.442695
        %v2468 = vpow.pop %v2467
        %v2469 = vsel %vm2454, %v2468, 0.0
        %2470 = vadd.xlane.f32.xlu0 %v2469
        %v2471 = vpop.xlane.xlu0 %2470
        %v2472 = vrot.slane %v2471, 4
        %v2473 = vadd.f32 %v2471, %v2472
        %v2474 = vrot.slane %v2473, 2
        %v2475 = vadd.f32 %v2473, %v2474
        %v2476 = vrot.slane %v2475, 1
        %v2477 = vadd.f32 %v2475, %v2476
        %s2478 = vtos %v2477
        %v2479 = vstv %s2478
        %v2480 = vrcp.pop %v2479
        %v2481 = vmul.f32 %v2468, %v2480
        %s2482 = sld [smem:[#allocation4]]
        %s2483 = sadd.f32 %s2482, 1.0
        %v2484 = vstv %s2483
        %v2485 = vmul.f32 %v2481, %v2484
        %s2486 = sld [smem:[#allocation4 + $0x1]]
        %v2487 = vstv %s2486
        %v2488 = vadd.f32 %v2485, %v2487
        %v2489 = vmax.f32 %v2488, 0.0
        %v2490 = vld [vmem:[%s14] sm:$0xf]
        %v2491 = vld [vmem:[%s15] sm:$0xf]
        %2493 = vset.pattern.permute.xlu0 0
        %2494 = vperm.xlu0 %2493, %v2491
        %v2495 = vpop.permute.xlu0 %2494
        %v2498 = vsel %vm2454, %v2490, 0
        %v2501 = vsel %vm2454, %v2489, 0
        %2503 = vmatprep.subr.mxu0 0.0
        %2504 = vmatpush1.xpose.msra.mxu0 %v2501
        %2505 = vmatprep.subr.mxu0 0.0
        %2506 = vmatpush1.xpose.msra.mxu0 0.0
        %2507 = vmatprep.subr.mxu0 0.0
        %2508 = vmatpush1.xpose.msra.mxu0 0.0
        %2509 = vmatprep.subr.mxu0 0.0
        %2510 = vmatpush1.xpose.msra.mxu0 0.0
        %2511 = vmatprep.subr.mxu0 0.0
        %2512 = vmatpush1.xpose.msra.mxu0 0.0
        %2513 = vmatprep.subr.mxu0 0.0
        %2514 = vmatpush1.xpose.msra.mxu0 0.0
        %2515 = vmatprep.subr.mxu0 0.0
        %2516 = vmatpush1.xpose.msra.mxu0 0.0
        %2517 = vmatprep.subr.mxu0 0.0
        %2518 = vmatpush1.xpose.msra.mxu0 0.0
        %2519 = vmatprep.subr.mxu0 0.0
        %2520 = vmatpush1.xpose.msra.mxu0 0.0
        %2521 = vmatprep.subr.mxu0 0.0
        %2522 = vmatpush1.xpose.msra.mxu0 0.0
        %2523 = vmatprep.subr.mxu0 0.0
        %2524 = vmatpush1.xpose.msra.mxu0 0.0
        %2525 = vmatprep.subr.mxu0 0.0
        %2526 = vmatpush1.xpose.msra.mxu0 0.0
        %2527 = vmatprep.subr.mxu0 0.0
        %2528 = vmatpush1.xpose.msra.mxu0 0.0
        %2529 = vmatprep.subr.mxu0 0.0
        %2530 = vmatpush1.xpose.msra.mxu0 0.0
        %2531 = vmatprep.subr.mxu0 0.0
        %2532 = vmatpush1.xpose.msra.mxu0 0.0
        %2533 = vmatprep.subr.mxu0 0.0
        %2534 = vmatpush1.xpose.msra.mxu0 0.0
        %2535 = vmatprep.subr.mxu0 0.0
        %2536 = vmatpush1.xpose.msra.mxu0 0.0
        %2537 = vmatprep.subr.mxu0 0.0
        %2538 = vmatpush1.xpose.msra.mxu0 0.0
        %2539 = vmatprep.subr.mxu0 0.0
        %2540 = vmatpush1.xpose.msra.mxu0 0.0
        %2541 = vmatprep.subr.mxu0 0.0
        %2542 = vmatpush1.xpose.msra.mxu0 0.0
        %2543 = vmatprep.subr.mxu0 0.0
        %2544 = vmatpush1.xpose.msra.mxu0 0.0
        %2545 = vmatprep.subr.mxu0 0.0
        %2546 = vmatpush1.xpose.msra.mxu0 0.0
        %2547 = vmatprep.subr.mxu0 0.0
        %2548 = vmatpush1.xpose.msra.mxu0 0.0
        %2549 = vmatprep.subr.mxu0 0.0
        %2550 = vmatpush1.xpose.msra.mxu0 0.0
        %2551 = vmatprep.subr.mxu0 0.0
        %2552 = vmatpush1.xpose.msra.mxu0 0.0
        %2553 = vmatprep.subr.mxu0 0.0
        %2554 = vmatpush1.xpose.msra.mxu0 0.0
        %2555 = vmatprep.subr.mxu0 0.0
        %2556 = vmatpush1.xpose.msra.mxu0 0.0
        %2557 = vmatprep.subr.mxu0 0.0
        %2558 = vmatpush1.xpose.msra.mxu0 0.0
        %2559 = vmatprep.subr.mxu0 0.0
        %2560 = vmatpush1.xpose.msra.mxu0 0.0
        %2561 = vmatprep.subr.mxu0 0.0
        %2562 = vmatpush1.xpose.msra.mxu0 0.0
        %2563 = vmatprep.subr.mxu0 0.0
        %2564 = vmatpush1.xpose.msra.mxu0 0.0
        %2565 = vmatprep.subr.mxu0 0.0
        %2566 = vmatpush1.xpose.msra.mxu0 0.0
        %2567 = vmatprep.mubr.f32.mxu0 0.0
        %2568 = vmatmul.mubr.f32.gmra.mrb[0].mxu0 %v2498
        %v2569 = vpop.f32.mrb[0].mxu0
        %v2570 = vadd.f32 %v2495, %v2569
        %v2571 = vpop.f32.mrb[0].mxu0
        %2572 = vdwg.mxu0
        %2573 = vxpose.xlu0.b32.start [1/16] %v2370, 128
        %2574 = vxpose.xlu0.b32.cont [2/16] 0.0, 128
        %2575 = vxpose.xlu0.b32.cont [3/16] 0.0, 128
        %2576 = vxpose.xlu0.b32.cont [4/16] 0.0, 128
        %2577 = vxpose.xlu0.b32.cont [5/16] 0.0, 128
        %2578 = vxpose.xlu0.b32.cont [6/16] 0.0, 128
        %2579 = vxpose.xlu0.b32.cont [7/16] 0.0, 128
        %2580 = vxpose.xlu0.b32.cont [8/16] 0.0, 128
        %2581 = vxpose.xlu0.b32.cont [9/16] 0.0, 128
        %2582 = vxpose.xlu0.b32.cont [10/16] 0.0, 128
        %2583 = vxpose.xlu0.b32.cont [11/16] 0.0, 128
        %2584 = vxpose.xlu0.b32.cont [12/16] 0.0, 128
        %2585 = vxpose.xlu0.b32.cont [13/16] 0.0, 128
        %2586 = vxpose.xlu0.b32.cont [14/16] 0.0, 128
        %2587 = vxpose.xlu0.b32.cont [15/16] 0.0, 128
        %2588 = vxpose.xlu0.b32.end [16/16] 0.0, 128
        %v2589 = vpop.trf.xlu0
        %v2590 = vpop.trf.xlu0
        %v2591 = vpop.trf.xlu0
        %v2592 = vpop.trf.xlu0
        %v2593 = vpop.trf.xlu0
        %v2594 = vpop.trf.xlu0
        %v2595 = vpop.trf.xlu0
        %v2596 = vpop.trf.xlu0
        %v2597 = vpop.trf.xlu0
        %v2598 = vpop.trf.xlu0
        %v2599 = vpop.trf.xlu0
        %v2600 = vpop.trf.xlu0
        %v2601 = vpop.trf.xlu0
        %v2602 = vpop.trf.xlu0
        %v2603 = vpop.trf.xlu0
        %v2604 = vpop.trf.xlu0
        %v2606 = vsel %vm866, %v2589, 0
        %v2609 = vsel %vm866, %v2590, 0
        %v2612 = vsel %vm866, %v2591, 0
        %v2615 = vsel %vm866, %v2592, 0
        %v2618 = vsel %vm866, %v2593, 0
        %v2621 = vsel %vm866, %v2594, 0
        %v2624 = vsel %vm866, %v2595, 0
        %v2627 = vsel %vm866, %v2596, 0
        %v2630 = vsel %vm866, %v2570, 0
        %2632 = vmatprep.subr.mxu0 0.0
        %2633 = vmatpush1.xpose.msra.mxu0 %v2630
        %2634 = vmatprep.subr.mxu0 0.0
        %2635 = vmatpush1.xpose.msra.mxu0 0.0
        %2636 = vmatprep.subr.mxu0 0.0
        %2637 = vmatpush1.xpose.msra.mxu0 0.0
        %2638 = vmatprep.subr.mxu0 0.0
        %2639 = vmatpush1.xpose.msra.mxu0 0.0
        %2640 = vmatprep.subr.mxu0 0.0
        %2641 = vmatpush1.xpose.msra.mxu0 0.0
        %2642 = vmatprep.subr.mxu0 0.0
        %2643 = vmatpush1.xpose.msra.mxu0 0.0
        %2644 = vmatprep.subr.mxu0 0.0
        %2645 = vmatpush1.xpose.msra.mxu0 0.0
        %2646 = vmatprep.subr.mxu0 0.0
        %2647 = vmatpush1.xpose.msra.mxu0 0.0
        %2648 = vmatprep.subr.mxu0 0.0
        %2649 = vmatpush1.xpose.msra.mxu0 0.0
        %2650 = vmatprep.subr.mxu0 0.0
        %2651 = vmatpush1.xpose.msra.mxu0 0.0
        %2652 = vmatprep.subr.mxu0 0.0
        %2653 = vmatpush1.xpose.msra.mxu0 0.0
        %2654 = vmatprep.subr.mxu0 0.0
        %2655 = vmatpush1.xpose.msra.mxu0 0.0
        %2656 = vmatprep.subr.mxu0 0.0
        %2657 = vmatpush1.xpose.msra.mxu0 0.0
        %2658 = vmatprep.subr.mxu0 0.0
        %2659 = vmatpush1.xpose.msra.mxu0 0.0
        %2660 = vmatprep.subr.mxu0 0.0
        %2661 = vmatpush1.xpose.msra.mxu0 0.0
        %2662 = vmatprep.subr.mxu0 0.0
        %2663 = vmatpush1.xpose.msra.mxu0 0.0
        %2664 = vmatprep.subr.mxu0 0.0
        %2665 = vmatpush1.xpose.msra.mxu0 0.0
        %2666 = vmatprep.subr.mxu0 0.0
        %2667 = vmatpush1.xpose.msra.mxu0 0.0
        %2668 = vmatprep.subr.mxu0 0.0
        %2669 = vmatpush1.xpose.msra.mxu0 0.0
        %2670 = vmatprep.subr.mxu0 0.0
        %2671 = vmatpush1.xpose.msra.mxu0 0.0
        %2672 = vmatprep.subr.mxu0 0.0
        %2673 = vmatpush1.xpose.msra.mxu0 0.0
        %2674 = vmatprep.subr.mxu0 0.0
        %2675 = vmatpush1.xpose.msra.mxu0 0.0
        %2676 = vmatprep.subr.mxu0 0.0
        %2677 = vmatpush1.xpose.msra.mxu0 0.0
        %2678 = vmatprep.subr.mxu0 0.0
        %2679 = vmatpush1.xpose.msra.mxu0 0.0
        %2680 = vmatprep.subr.mxu0 0.0
        %2681 = vmatpush1.xpose.msra.mxu0 0.0
        %2682 = vmatprep.subr.mxu0 0.0
        %2683 = vmatpush1.xpose.msra.mxu0 0.0
        %2684 = vmatprep.subr.mxu0 0.0
        %2685 = vmatpush1.xpose.msra.mxu0 0.0
        %2686 = vmatprep.subr.mxu0 0.0
        %2687 = vmatpush1.xpose.msra.mxu0 0.0
        %2688 = vmatprep.subr.mxu0 0.0
        %2689 = vmatpush1.xpose.msra.mxu0 0.0
        %2690 = vmatprep.subr.mxu0 0.0
        %2691 = vmatpush1.xpose.msra.mxu0 0.0
        %2692 = vmatprep.subr.mxu0 0.0
        %2693 = vmatpush1.xpose.msra.mxu0 0.0
        %2694 = vmatprep.subr.mxu0 0.0
        %2695 = vmatpush1.xpose.msra.mxu0 0.0
        %2696 = vmatprep.mubr.f32.mxu0 0.0
        %2697 = vmatmul.mubr.f32.gmra.mrb[0].mxu0 %v2606
        %v2698 = vpop.f32.mrb[0].mxu0
        %v2699 = vadd.f32 0.0, %v2698
        %v2700 = vpop.f32.mrb[0].mxu0
        %2701 = vmatprep.mubr.f32.mxu0 0.0
        %2702 = vmatmul.mubr.f32.gmra.mrb[0].mxu0 %v2609
        %v2703 = vpop.f32.mrb[0].mxu0
        %v2704 = vadd.f32 0.0, %v2703
        %v2705 = vpop.f32.mrb[0].mxu0
        %2706 = vmatprep.mubr.f32.mxu0 0.0
        %2707 = vmatmul.mubr.f32.gmra.mrb[0].mxu0 %v2612
        %v2708 = vpop.f32.mrb[0].mxu0
        %v2709 = vadd.f32 0.0, %v2708
        %v2710 = vpop.f32.mrb[0].mxu0
        %2711 = vmatprep.mubr.f32.mxu0 0.0
        %2712 = vmatmul.mubr.f32.gmra.mrb[0].mxu0 %v2615
        %v2713 = vpop.f32.mrb[0].mxu0
        %v2714 = vadd.f32 0.0, %v2713
        %v2715 = vpop.f32.mrb[0].mxu0
        %2716 = vmatprep.mubr.f32.mxu0 0.0
        %2717 = vmatmul.mubr.f32.gmra.mrb[0].mxu0 %v2618
        %v2718 = vpop.f32.mrb[0].mxu0
        %v2719 = vadd.f32 0.0, %v2718
        %v2720 = vpop.f32.mrb[0].mxu0
        %2721 = vmatprep.mubr.f32.mxu0 0.0
        %2722 = vmatmul.mubr.f32.gmra.mrb[0].mxu0 %v2621
        %v2723 = vpop.f32.mrb[0].mxu0
        %v2724 = vadd.f32 0.0, %v2723
        %v2725 = vpop.f32.mrb[0].mxu0
        %2726 = vmatprep.mubr.f32.mxu0 0.0
        %2727 = vmatmul.mubr.f32.gmra.mrb[0].mxu0 %v2624
        %v2728 = vpop.f32.mrb[0].mxu0
        %v2729 = vadd.f32 0.0, %v2728
        %v2730 = vpop.f32.mrb[0].mxu0
        %2731 = vmatprep.mubr.f32.mxu0 0.0
        %2732 = vmatmul.mubr.f32.gmra.mrb[0].mxu0 %v2627
        %v2733 = vpop.f32.mrb[0].mxu0
        %v2734 = vadd.f32 0.0, %v2733
        %v2735 = vpop.f32.mrb[0].mxu0
        %2736 = vdwg.mxu0
        %2737 = vst.msk [vmem:[#allocation3] sm:$0xff] %vm2454, %v2699
        %2738 = vst.msk [vmem:[#allocation3 + $0x8] sm:$0xff] %vm2454, %v2704
        %2739 = vst.msk [vmem:[#allocation3 + $0x10] sm:$0xff] %vm2454, %v2709
        %2740 = vst.msk [vmem:[#allocation3 + $0x18] sm:$0xff] %vm2454, %v2714
        %2741 = vst.msk [vmem:[#allocation3 + $0x20] sm:$0xff] %vm2454, %v2719
        %2742 = vst.msk [vmem:[#allocation3 + $0x28] sm:$0xff] %vm2454, %v2724
        %2743 = vst.msk [vmem:[#allocation3 + $0x30] sm:$0xff] %vm2454, %v2729
        %2744 = vst.msk [vmem:[#allocation3 + $0x38] sm:$0xff] %vm2454, %v2734
        %v2745 = vld [vmem:[#allocation3] ss:$16 sm:$0x3]
        %v2746 = vld [vmem:[#allocation3] ss:$16 sm:$0xc]
        %v2747 = vor.u32 %v2745, %v2746
        %s2748 = scalar_lea.vmem [#allocation3], 1
        %v2749 = vld [vmem:[%s2748] ss:$16 sm:$0x3]
        %v2750 = vld [vmem:[%s2748] ss:$16 sm:$0xc]
        %v2751 = vor.u32 %v2749, %v2750
        %s2752 = scalar_lea.vmem [#allocation3], 2
        %v2753 = vld [vmem:[%s2752] ss:$16 sm:$0x3]
        %v2754 = vld [vmem:[%s2752] ss:$16 sm:$0xc]
        %v2755 = vor.u32 %v2753, %v2754
        %s2756 = scalar_lea.vmem [#allocation3], 3
        %v2757 = vld [vmem:[%s2756] ss:$16 sm:$0x3]
        %v2758 = vld [vmem:[%s2756] ss:$16 sm:$0xc]
        %v2759 = vor.u32 %v2757, %v2758
        %s2760 = scalar_lea.vmem [#allocation3], 4
        %v2761 = vld [vmem:[%s2760] ss:$16 sm:$0x3]
        %v2762 = vld [vmem:[%s2760] ss:$16 sm:$0xc]
        %v2763 = vor.u32 %v2761, %v2762
        %s2764 = scalar_lea.vmem [#allocation3], 5
        %v2765 = vld [vmem:[%s2764] ss:$16 sm:$0x3]
        %v2766 = vld [vmem:[%s2764] ss:$16 sm:$0xc]
        %v2767 = vor.u32 %v2765, %v2766
        %s2768 = scalar_lea.vmem [#allocation3], 6
        %v2769 = vld [vmem:[%s2768] ss:$16 sm:$0x3]
        %v2770 = vld [vmem:[%s2768] ss:$16 sm:$0xc]
        %v2771 = vor.u32 %v2769, %v2770
        %s2772 = scalar_lea.vmem [#allocation3], 7
        %v2773 = vld [vmem:[%s2772] ss:$16 sm:$0x3]
        %v2774 = vld [vmem:[%s2772] ss:$16 sm:$0xc]
        %v2775 = vor.u32 %v2773, %v2774
        %s2776 = scalar_lea.vmem [#allocation3], 8
        %v2777 = vld [vmem:[%s2776] ss:$16 sm:$0x3]
        %v2778 = vld [vmem:[%s2776] ss:$16 sm:$0xc]
        %v2779 = vor.u32 %v2777, %v2778
        %s2780 = scalar_lea.vmem [#allocation3], 9
        %v2781 = vld [vmem:[%s2780] ss:$16 sm:$0x3]
        %v2782 = vld [vmem:[%s2780] ss:$16 sm:$0xc]
        %v2783 = vor.u32 %v2781, %v2782
        %s2784 = scalar_lea.vmem [#allocation3], 10
        %v2785 = vld [vmem:[%s2784] ss:$16 sm:$0x3]
        %v2786 = vld [vmem:[%s2784] ss:$16 sm:$0xc]
        %v2787 = vor.u32 %v2785, %v2786
        %s2788 = scalar_lea.vmem [#allocation3], 11
        %v2789 = vld [vmem:[%s2788] ss:$16 sm:$0x3]
        %v2790 = vld [vmem:[%s2788] ss:$16 sm:$0xc]
        %v2791 = vor.u32 %v2789, %v2790
        %s2792 = scalar_lea.vmem [#allocation3], 12
        %v2793 = vld [vmem:[%s2792] ss:$16 sm:$0x3]
        %v2794 = vld [vmem:[%s2792] ss:$16 sm:$0xc]
        %v2795 = vor.u32 %v2793, %v2794
        %s2796 = scalar_lea.vmem [#allocation3], 13
        %v2797 = vld [vmem:[%s2796] ss:$16 sm:$0x3]
        %v2798 = vld [vmem:[%s2796] ss:$16 sm:$0xc]
        %v2799 = vor.u32 %v2797, %v2798
        %s2800 = scalar_lea.vmem [#allocation3], 14
        %v2801 = vld [vmem:[%s2800] ss:$16 sm:$0x3]
        %v2802 = vld [vmem:[%s2800] ss:$16 sm:$0xc]
        %v2803 = vor.u32 %v2801, %v2802
        %s2804 = scalar_lea.vmem [#allocation3], 15
        %v2805 = vld [vmem:[%s2804] ss:$16 sm:$0x3]
        %v2806 = vld [vmem:[%s2804] ss:$16 sm:$0xc]
        %v2807 = vor.u32 %v2805, %v2806
        %2809 = vrot.lane.b32.xlu0 %v2751, 4
        %v2810 = vpop.permute.xlu0 %2809
        %2813 = vrot.lane.b32.xlu0 %v2755, 8
        %v2814 = vpop.permute.xlu0 %2813
        %2817 = vrot.lane.b32.xlu0 %v2759, 12
        %v2818 = vpop.permute.xlu0 %2817
        %2821 = vrot.lane.b32.xlu0 %v2763, 16
        %v2822 = vpop.permute.xlu0 %2821
        %2825 = vrot.lane.b32.xlu0 %v2767, 20
        %v2826 = vpop.permute.xlu0 %2825
        %2829 = vrot.lane.b32.xlu0 %v2771, 24
        %v2830 = vpop.permute.xlu0 %2829
        %2833 = vrot.lane.b32.xlu0 %v2775, 28
        %v2834 = vpop.permute.xlu0 %2833
        %2837 = vrot.lane.b32.xlu0 %v2779, 32
        %v2838 = vpop.permute.xlu0 %2837
        %2841 = vrot.lane.b32.xlu0 %v2783, 36
        %v2842 = vpop.permute.xlu0 %2841
        %2845 = vrot.lane.b32.xlu0 %v2787, 40
        %v2846 = vpop.permute.xlu0 %2845
        %2849 = vrot.lane.b32.xlu0 %v2791, 44
        %v2850 = vpop.permute.xlu0 %2849
        %2853 = vrot.lane.b32.xlu0 %v2795, 48
        %v2854 = vpop.permute.xlu0 %2853
        %2857 = vrot.lane.b32.xlu0 %v2799, 52
        %v2858 = vpop.permute.xlu0 %2857
        %2861 = vrot.lane.b32.xlu0 %v2803, 56
        %v2862 = vpop.permute.xlu0 %2861
        %2865 = vrot.lane.b32.xlu0 %v2807, 60
        %v2866 = vpop.permute.xlu0 %2865
        %v2868 = vsel %vm2454, %v2747, %v2810
        %v2869 = vsel %vm866, %v2868, %v2814
        %vm2870 = vcmask 97280
        %v2871 = vsel %vm2870, %v2869, %v2818
        %v2872 = vsel %vm613, %v2871, %v2822
        %vm2873 = vcmask 162816
        %v2874 = vsel %vm2873, %v2872, %v2826
        %v2875 = vsel %vm1068, %v2874, %v2830
        %vm2876 = vcmask 228352
        %v2877 = vsel %vm2876, %v2875, %v2834
        %v2878 = vsel %vm1070, %v2877, %v2838
        %vm2879 = vcmask 293888
        %v2880 = vsel %vm2879, %v2878, %v2842
        %v2881 = vsel %vm1072, %v2880, %v2846
        %vm2882 = vcmask 359424
        %v2883 = vsel %vm2882, %v2881, %v2850
        %v2884 = vsel %vm1074, %v2883, %v2854
        %vm2885 = vcmask 424960
        %v2886 = vsel %vm2885, %v2884, %v2858
        %v2887 = vsel %vm1076, %v2886, %v2862
        %vm2888 = vcmask 490496
        %v2889 = vsel %vm2888, %v2887, %v2866
        %v2890 = vld [vmem:[%s16] sm:$0xff]
        %v2891 = vld [vmem:[%s16 + $0x8] sm:$0xff]
        %v2892 = vld [vmem:[%s17] sm:$0xff]
        %v2893 = vld [vmem:[%s17 + $0x8] sm:$0xff]
        %2895 = vset.pattern.permute.xlu0 0
        %2896 = vperm.xlu0 %2895, %v2892
        %v2897 = vpop.permute.xlu0 %2896
        %2900 = vset.pattern.permute.xlu0 0
        %2901 = vperm.xlu0 %2900, %v2893
        %v2902 = vpop.permute.xlu0 %2901
        %v2905 = vsel %vm2454, %v2890, 0
        %v2908 = vsel %vm2454, %v2891, 0
        %vm2910 = vcmask 1043456
        %v2912 = vsel %vm2910, %v2889, 0
        %2914 = vmatprep.subr.mxu0 0.0
        %2915 = vmatpush1.msra.mxu0 %v2912
        %2916 = vmatprep.subr.mxu0 0.0
        %2917 = vmatpush1.msra.mxu0 0.0
        %2918 = vmatprep.subr.mxu0 0.0
        %2919 = vmatpush1.msra.mxu0 0.0
        %2920 = vmatprep.subr.mxu0 0.0
        %2921 = vmatpush1.msra.mxu0 0.0
        %2922 = vmatprep.subr.mxu0 0.0
        %2923 = vmatpush1.msra.mxu0 0.0
        %2924 = vmatprep.subr.mxu0 0.0
        %2925 = vmatpush1.msra.mxu0 0.0
        %2926 = vmatprep.subr.mxu0 0.0
        %2927 = vmatpush1.msra.mxu0 0.0
        %2928 = vmatprep.subr.mxu0 0.0
        %2929 = vmatpush1.msra.mxu0 0.0
        %2930 = vmatprep.subr.mxu0 0.0
        %2931 = vmatpush1.msra.mxu0 0.0
        %2932 = vmatprep.subr.mxu0 0.0
        %2933 = vmatpush1.msra.mxu0 0.0
        %2934 = vmatprep.subr.mxu0 0.0
        %2935 = vmatpush1.msra.mxu0 0.0
        %2936 = vmatprep.subr.mxu0 0.0
        %2937 = vmatpush1.msra.mxu0 0.0
        %2938 = vmatprep.subr.mxu0 0.0
        %2939 = vmatpush1.msra.mxu0 0.0
        %2940 = vmatprep.subr.mxu0 0.0
        %2941 = vmatpush1.msra.mxu0 0.0
        %2942 = vmatprep.subr.mxu0 0.0
        %2943 = vmatpush1.msra.mxu0 0.0
        %2944 = vmatprep.subr.mxu0 0.0
        %2945 = vmatpush1.msra.mxu0 0.0
        %2946 = vmatprep.subr.mxu0 0.0
        %2947 = vmatpush1.msra.mxu0 0.0
        %2948 = vmatprep.subr.mxu0 0.0
        %2949 = vmatpush1.msra.mxu0 0.0
        %2950 = vmatprep.subr.mxu0 0.0
        %2951 = vmatpush1.msra.mxu0 0.0
        %2952 = vmatprep.subr.mxu0 0.0
        %2953 = vmatpush1.msra.mxu0 0.0
        %2954 = vmatprep.subr.mxu0 0.0
        %2955 = vmatpush1.msra.mxu0 0.0
        %2956 = vmatprep.subr.mxu0 0.0
        %2957 = vmatpush1.msra.mxu0 0.0
        %2958 = vmatprep.subr.mxu0 0.0
        %2959 = vmatpush1.msra.mxu0 0.0
        %2960 = vmatprep.subr.mxu0 0.0
        %2961 = vmatpush1.msra.mxu0 0.0
        %2962 = vmatprep.subr.mxu0 0.0
        %2963 = vmatpush1.msra.mxu0 0.0
        %2964 = vmatprep.subr.mxu0 0.0
        %2965 = vmatpush1.msra.mxu0 0.0
        %2966 = vmatprep.subr.mxu0 0.0
        %2967 = vmatpush1.msra.mxu0 0.0
        %2968 = vmatprep.subr.mxu0 0.0
        %2969 = vmatpush1.msra.mxu0 0.0
        %2970 = vmatprep.subr.mxu0 0.0
        %2971 = vmatpush1.msra.mxu0 0.0
        %2972 = vmatprep.subr.mxu0 0.0
        %2973 = vmatpush1.msra.mxu0 0.0
        %2974 = vmatprep.subr.mxu0 0.0
        %2975 = vmatpush1.msra.mxu0 0.0
        %2976 = vmatprep.subr.mxu0 0.0
        %2977 = vmatpush1.msra.mxu0 0.0
        %2978 = vmatprep.mubr.f32.mxu0 0.0
        %2979 = vmatmul.mubr.f32.gmra.mrb[0].mxu0 %v2905
        %v2980 = vpop.f32.mrb[0].mxu0
        %v2981 = vadd.f32 %v2897, %v2980
        %v2982 = vpop.f32.mrb[0].mxu0
        %2983 = vmatprep.mubr.f32.mxu0 0.0
        %2984 = vmatmul.mubr.f32.gmra.mrb[0].mxu0 %v2908
        %v2985 = vpop.f32.mrb[0].mxu0
        %v2986 = vadd.f32 %v2902, %v2985
        %v2987 = vpop.f32.mrb[0].mxu0
        %2988 = vdwg.mxu0
        %v2989 = vadd.f32 %v2981, %v2281
        %v2990 = vadd.f32 %v2986, %v2282
        %v2991 = vadd.f32 %v2989, %v590
        %v2992 = vadd.f32 %v2990, %v591
        %2993 = vst.msk [vmem:[%s589] sm:$0xff] %vm703, %v2991
        %2994 = vst.msk [vmem:[%s589 + $0x8] sm:$0xff] %vm703, %v2992
        %p2995 = scmp.lt.s32.totalorder %s30, 1
        %s2996 = scalar_select %p2995, %s30, 1
        %s2997 = smul.addr %s2996, 2
        %s2998 = smul.addr %s2997, 8
        %s2999 = scalar_lea.vmem %s18, %s2998
        // Predicated region
        $region97: #{basic_unit_pallas.1} parent=91 // pred_check
          %p3000 = pneg %p431
        $region98: #{basic_unit_pallas.1} parent=91 // pred_check_branch
          %3002 = sbr.rel (%p3000) target = $region100
        $region99: #{basic_unit_pallas.1} parent=91 // pred_region
          _
        $region100: #{basic_unit_pallas.1} parent=91 // pred_fallthru
          _
      $region92: #{basic_unit_pallas.1} parent=5 // pred_fallthru
        _
      %p3003 = scmp.le.s32.totalorder 2, %s25
      // Predicated region
      $region101: #{basic_unit_pallas.1} parent=5 // pred_check
        %p3004 = pneg %p3003
      $region102: #{basic_unit_pallas.1} parent=5 // pred_check_branch
        %3006 = sbr.rel (%p3004) target = $region104
      $region103: #{basic_unit_pallas.1} parent=5 // pred_region
        %s3007 = ssub.s32 %s25, 2
        // Predicated region
        $region105: #{basic_unit_pallas.1} parent=103 // pred_check
          %p3008 = pneg %p437
        $region106: #{basic_unit_pallas.1} parent=103 // pred_check_branch
          %3010 = sbr.rel (%p3008) target = $region108
        $region107: #{basic_unit_pallas.1} parent=103 // pred_region
          %p3011 = scmp.lt.s32.totalorder %s31, 1
          %s3012 = scalar_select %p3011, %s31, 1
          %s3013 = smul.addr %s3012, 2
          %s3014 = smul.addr %s3013, 8
          %s3015 = scalar_lea.vmem %s18, %s3014
        $region108: #{basic_unit_pallas.1} parent=103 // pred_fallthru
          _
      $region104: #{basic_unit_pallas.1} parent=5 // pred_fallthru
        _
    $region6: #{basic_unit_pallas.1} parent=1 // loop_footer
      %s29 = sadd.s32 1, %s25
    $region7: #{basic_unit_pallas.1} parent=1 // loop_footer_branch
      %24 = sbr.rel target = $region3
    $region8: #{basic_unit_pallas.1} parent=1 // loop_exit
      _
    %3016 = vsyncpa [#allocation5], 1
    %s3017 = scalar_lea.sflag [#allocation5], 1
    %3018 = vsyncpa %s3017, 1

</llo_original>
